<compile_context>
chip_gen: v6e
topology: v6e:2x2x1
jax: 0.10.0
libtpu: 0.0.40
codegen_flags: <defaults>
</compile_context>

<pallas_src>
import jax
import jax.numpy as jnp
from jax.experimental import pallas as pl
from jax.experimental.pallas import tpu as pltpu

EPS = 1e-5
LANES = 128
SUBLANE_BF16 = 16          # bf16 VMEM tiling is (16, 128) on (sublane, lane)
LEFT = SUBLANE_BF16        # left-halo width of the y scratch (keeps interior store aligned)
HT_DEFAULT = 8             # output rows per grid step


def fused_basic_block_kernel(xpad_ref, xres_ref, w1_ref, w2_ref, b1_ref, b2_ref,
                             o_ref, yscr, colscr):
    """One grid step = HT output rows of one image.

    xpad_ref : (H+4, Wxp, Cp) bf16  whole padded image (2-row / 1-col zero halo)
    xres_ref : (HT, W, Cp)    f32   residual rows for this tile
    w*_ref   : (9*Cp, Cp)     bf16  BN-scale-folded im2col weights, row = (dy*3+dx)*Cp+ci
    b*_ref   : (1, Cp)        f32   BN shifts
    o_ref    : (HT, W, Cp)    f32
    yscr     : (HT+2, Wyp, Cp) bf16 conv1 output + 1-row / 1-col halo for conv2
    colscr   : (HT+4, W, 3*Cp) bf16 dx-shifted im2col staging (dy = free row offset)
    """
    HT, W, Cp = o_ref.shape
    t = pl.program_id(1)
    n_t = pl.num_programs(1)
    row0 = pl.multiple_of(t * HT, HT)

    # ---- conv1 (BN1 scale pre-folded) + shift + ReLU over HT+2 rows of y --------
    # Stage the 3 dx taps for padded-image rows [t*HT, t*HT + HT + 4).
    for dx in range(3):
        colscr[:, :, dx * Cp:(dx + 1) * Cp] = (
            xpad_ref[pl.ds(row0, HT + 4), dx:dx + W, :])
    acc1 = jnp.dot(colscr[0:HT + 2, :, :].reshape((HT + 2) * W, 3 * Cp),
                   w1_ref[0:3 * Cp, :], preferred_element_type=jnp.float32)
    for dy in (1, 2):
        acc1 = acc1 + jnp.dot(
            colscr[dy:dy + HT + 2, :, :].reshape((HT + 2) * W, 3 * Cp),
            w1_ref[3 * dy * Cp:3 * (dy + 1) * Cp, :],
            preferred_element_type=jnp.float32)
    y = jnp.maximum(acc1 + b1_ref[...], 0.0)
    # Sublane-aligned interior store (left halo = 16 columns).
    yscr[:, LEFT:LEFT + W, :] = y.reshape(HT + 2, W, Cp).astype(yscr.dtype)

    # Border-only zeroing of the y halo (every step: scratch persists across steps
    # and the grid axes may be sharded across TensorCores).
    zcol = jnp.zeros((HT + 2, 1, Cp), yscr.dtype)
    yscr[:, LEFT - 1:LEFT, :] = zcol              # y column -1 (conv2 zero padding)
    yscr[:, LEFT + W:LEFT + W + 1, :] = zcol      # y column W
    zrow = jnp.zeros((1,) + yscr.shape[1:], yscr.dtype)

    @pl.when(t == 0)
    def _():
        yscr[0:1, :, :] = zrow                    # y row -1 (image top)

    @pl.when(t == n_t - 1)
    def _():
        yscr[HT + 1:HT + 2, :, :] = zrow          # y row H (image bottom)

    # ---- conv2 (BN2 scale pre-folded) + shift + residual + ReLU -----------------
    for dx in range(3):
        colscr[0:HT + 2, :, dx * Cp:(dx + 1) * Cp] = (
            yscr[:, LEFT - 1 + dx:LEFT - 1 + dx + W, :])
    acc2 = jnp.dot(colscr[0:HT, :, :].reshape(HT * W, 3 * Cp),
                   w2_ref[0:3 * Cp, :], preferred_element_type=jnp.float32)
    for dy in (1, 2):
        acc2 = acc2 + jnp.dot(
            colscr[dy:dy + HT, :, :].reshape(HT * W, 3 * Cp),
            w2_ref[3 * dy * Cp:3 * (dy + 1) * Cp, :],
            preferred_element_type=jnp.float32)
    res = xres_ref[...].reshape(HT * W, Cp)       # f32 residual
    z = jnp.maximum(acc2 + b2_ref[...] + res, 0.0)
    o_ref[...] = z.reshape(HT, W, Cp).astype(o_ref.dtype)


def _fold_bn(gamma, beta, mean, var):
    scale = gamma / jnp.sqrt(var + EPS)
    shift = beta - mean * scale
    return scale, shift


def _round_up(x, m):
    return ((x + m - 1) // m) * m


def basic_block_forward(x_nchw, params):
    """BasicBlock forward (stride=1, downsample=None). x_nchw: (N, C, H, W) f32."""
    x = jnp.transpose(x_nchw, (0, 2, 3, 1)).astype(jnp.float32)   # NHWC
    N, H, W, Cin = x.shape
    w1, w2 = params["w1"], params["w2"]      # HWIO: (3,3,Cin,Cout), (3,3,Cout,Cout)
    Cout = w1.shape[3]
    assert Cin == Cout, "stride=1 / no-downsample BasicBlock requires Cin == Cout"

    Cp = _round_up(max(Cin, Cout), LANES)              # lane-dense channel width
    HT = HT_DEFAULT if H % HT_DEFAULT == 0 else H      # output rows per tile
    n_t = H // HT
    Wxp = _round_up(W + 2, SUBLANE_BF16)               # sublane-aligned x width
    Wyp = _round_up(LEFT + W + 1, SUBLANE_BF16)        # y scratch width

    s1, b1 = _fold_bn(params["g1"], params["b1"], params["m1"], params["v1"])
    s2, b2 = _fold_bn(params["g2"], params["b2"], params["m2"], params["v2"])

    def prep_weight(w, scale):
        # Fold BN scale, pad channels to Cp, flatten HWIO -> (9*Cp, Cp) im2col rows
        # ordered (dy*3 + dx)*Cp + ci, cast to bf16.
        w = w * scale[None, None, None, :]
        w = jnp.pad(w, ((0, 0), (0, 0),
                        (0, Cp - w.shape[2]), (0, Cp - w.shape[3])))
        return w.reshape(9 * Cp, Cp).astype(jnp.bfloat16)

    w1p = prep_weight(w1, s1)
    w2p = prep_weight(w2, s2)
    b1p = jnp.pad(b1, (0, Cp - Cout)).reshape(1, Cp).astype(jnp.float32)
    b2p = jnp.pad(b2, (0, Cp - Cout)).reshape(1, Cp).astype(jnp.float32)

    # bf16 conv operand: 2-row top/bottom halo (fused 2-conv H tiling), 1-col left
    # halo, right pad to a 16-multiple sublane width, channel pad to the lane width.
    xpad = jnp.pad(x, ((0, 0), (2, 2), (1, Wxp - W - 1),
                       (0, Cp - Cin))).astype(jnp.bfloat16)
    # f32 residual: channel pad only (separate un-haloed per-tile block).
    xres = jnp.pad(x, ((0, 0), (0, 0), (0, 0), (0, Cp - Cin)))

    out = pl.pallas_call(
        fused_basic_block_kernel,
        out_shape=jax.ShapeDtypeStruct((N, H, W, Cp), jnp.float32),
        grid_spec=pltpu.PrefetchScalarGridSpec(
            num_scalar_prefetch=0,
            grid=(N, n_t),
            in_specs=[
                # Whole padded image; block index ignores t -> DMA'd once per image.
                pl.BlockSpec((None, H + 4, Wxp, Cp), lambda n, t: (n, 0, 0, 0)),
                pl.BlockSpec((None, HT, W, Cp), lambda n, t: (n, t, 0, 0)),
                pl.BlockSpec((9 * Cp, Cp), lambda n, t: (0, 0)),
                pl.BlockSpec((9 * Cp, Cp), lambda n, t: (0, 0)),
                pl.BlockSpec((1, Cp), lambda n, t: (0, 0)),
                pl.BlockSpec((1, Cp), lambda n, t: (0, 0)),
            ],
            out_specs=pl.BlockSpec((None, HT, W, Cp), lambda n, t: (n, t, 0, 0)),
            scratch_shapes=[
                pltpu.VMEM((HT + 2, Wyp, Cp), jnp.bfloat16),     # y + 1-row/1-col halo
                pltpu.VMEM((HT + 4, W, 3 * Cp), jnp.bfloat16),   # 3-tap im2col staging
            ],
        ),
        compiler_params=pltpu.CompilerParams(
            dimension_semantics=("parallel", "parallel"),
            vmem_limit_bytes=32 * 1024 * 1024,
        ),
    )(xpad, xres, w1p, w2p, b1p, b2p)

    out = out[..., :Cout]
    return jnp.transpose(out, (0, 3, 1, 2))   # back to NCHW (module interface)


def reference_forward(x_nchw, params):
    """Pure-JAX f32 reference (NHWC conv via lax) for correctness checking."""
    x = jnp.transpose(x_nchw, (0, 2, 3, 1)).astype(jnp.float32)

    def conv(inp, w):
        dn = jax.lax.conv_dimension_numbers(inp.shape, w.shape,
                                            ("NHWC", "HWIO", "NHWC"))
        return jax.lax.conv_general_dilated(inp, w, (1, 1), "SAME",
                                            dimension_numbers=dn)

    s1, b1 = _fold_bn(params["g1"], params["b1"], params["m1"], params["v1"])
    s2, b2 = _fold_bn(params["g2"], params["b2"], params["m2"], params["v2"])

    y = jnp.maximum(conv(x, params["w1"]) * s1 + b1, 0.0)
    z = conv(y, params["w2"]) * s2 + b2
    z = jnp.maximum(z + x, 0.0)
    return jnp.transpose(z, (0, 3, 1, 2))


def make_params(key, in_channels, out_channels):
    ks = jax.random.split(key, 8)
    return {
        "w1": jax.random.normal(ks[0], (3, 3, in_channels, out_channels), jnp.float32) * 0.1,
        "w2": jax.random.normal(ks[1], (3, 3, out_channels, out_channels), jnp.float32) * 0.1,
        "g1": 1.0 + 0.1 * jax.random.normal(ks[2], (out_channels,), jnp.float32),
        "b1": 0.1 * jax.random.normal(ks[3], (out_channels,), jnp.float32),
        "m1": 0.1 * jax.random.normal(ks[4], (out_channels,), jnp.float32),
        "v1": 1.0 + 0.1 * jnp.abs(jax.random.normal(ks[5], (out_channels,), jnp.float32)),
        "g2": 1.0 + 0.1 * jax.random.normal(ks[6], (out_channels,), jnp.float32),
        "b2": 0.1 * jax.random.normal(ks[7], (out_channels,), jnp.float32),
        "m2": 0.05 * jnp.ones((out_channels,), jnp.float32),
        "v2": 1.1 * jnp.ones((out_channels,), jnp.float32),
    }


if __name__ == "__main__":
    key = jax.random.PRNGKey(0)
    k_x, k_p = jax.random.split(key)

    N, C, H, W = 2, 4, 16, 16          # in_channels = out_channels = 4, stride = 1
    x = jax.random.normal(k_x, (N, C, H, W), jnp.float32)
    params = make_params(k_p, C, C)

    out = jax.block_until_ready(basic_block_forward(x, params))
    ref = jax.block_until_ready(reference_forward(x, params))

    assert out.shape == (N, C, H, W)
    # bf16 MXU matmuls (f32 accumulation) vs. a pure-f32 reference -> bf16-level tolerance.
    assert jnp.allclose(out, ref, rtol=2e-2, atol=2e-2), "mismatch vs reference"

    print("KERNEL_OK")
</pallas_src>

<mosaic_0001>
module attributes {stable_mosaic.version = 11 : i64} {
  func.func @fused_basic_block_kernel(%arg0: i32, %arg1: i32, %arg2: memref<1x20x32x128xbf16, #tpu.memory_space<vmem>>, %arg3: memref<1x8x16x128xf32, #tpu.memory_space<vmem>>, %arg4: memref<1152x128xbf16, #tpu.memory_space<vmem>>, %arg5: memref<1152x128xbf16, #tpu.memory_space<vmem>>, %arg6: memref<1x128xf32, #tpu.memory_space<vmem>>, %arg7: memref<1x128xf32, #tpu.memory_space<vmem>>, %arg8: memref<1x8x16x128xf32, #tpu.memory_space<vmem>>, %arg9: memref<10x48x128xbf16, #tpu.memory_space<vmem>>, %arg10: memref<12x16x384xbf16, #tpu.memory_space<vmem>>) attributes {dimension_semantics = [#tpu.dimension_semantics<parallel>, #tpu.dimension_semantics<parallel>], iteration_bounds = array<i64: 2, 2>, scalar_prefetch = 0 : i64, scratch_operands = 2 : i64, tpu.core_type = #tpu.core_type<tc>, window_params = [{transform_indices = @transform_0, window_bounds = array<i64: 1, 20, 32, 128>}, {transform_indices = @transform_1, window_bounds = array<i64: 1, 8, 16, 128>}, {pipeline_mode = #tpu.pipeline_mode<synchronous>, transform_indices = @transform_2, window_bounds = array<i64: 1152, 128>}, {pipeline_mode = #tpu.pipeline_mode<synchronous>, transform_indices = @transform_3, window_bounds = array<i64: 1152, 128>}, {pipeline_mode = #tpu.pipeline_mode<synchronous>, transform_indices = @transform_4, window_bounds = array<i64: 1, 128>}, {pipeline_mode = #tpu.pipeline_mode<synchronous>, transform_indices = @transform_5, window_bounds = array<i64: 1, 128>}, {transform_indices = @transform_6, window_bounds = array<i64: 1, 8, 16, 128>}]} {
    %c8_i32 = arith.constant 8 : i32
    %0 = arith.muli %arg1, %c8_i32 : i32
    %1 = tpu.assume_multiple %0, 8 : i32
    %c0 = arith.constant 0 : index
    %2 = arith.index_cast %1 : i32 to index
    %c0_0 = arith.constant 0 : index
    %c0_1 = arith.constant 0 : index
    %3 = vector.load %arg2[%c0, %2, %c0_0, %c0_1] : memref<1x20x32x128xbf16, #tpu.memory_space<vmem>>, vector<1x12x16x128xbf16>
    %4 = vector.shape_cast %3 : vector<1x12x16x128xbf16> to vector<12x16x128xbf16>
    %c0_2 = arith.constant 0 : index
    %c0_3 = arith.constant 0 : index
    %c0_4 = arith.constant 0 : index
    %5 = vector.load %arg10[%c0_2, %c0_3, %c0_4] : memref<12x16x384xbf16, #tpu.memory_space<vmem>>, vector<12x16x128xbf16>
    tpu.vector_store %arg10[%c0_2, %c0_3, %c0_4], %4 {strides = array<i32>} : memref<12x16x384xbf16, #tpu.memory_space<vmem>>, vector<12x16x128xbf16>,
    %c0_5 = arith.constant 0 : index
    %6 = arith.index_cast %1 : i32 to index
    %c1 = arith.constant 1 : index
    %c0_6 = arith.constant 0 : index
    %7 = vector.load %arg2[%c0_5, %6, %c1, %c0_6] : memref<1x20x32x128xbf16, #tpu.memory_space<vmem>>, vector<1x12x16x128xbf16>
    %8 = vector.shape_cast %7 : vector<1x12x16x128xbf16> to vector<12x16x128xbf16>
    %c0_7 = arith.constant 0 : index
    %c0_8 = arith.constant 0 : index
    %c128 = arith.constant 128 : index
    %9 = vector.load %arg10[%c0_7, %c0_8, %c128] : memref<12x16x384xbf16, #tpu.memory_space<vmem>>, vector<12x16x128xbf16>
    tpu.vector_store %arg10[%c0_7, %c0_8, %c128], %8 {strides = array<i32>} : memref<12x16x384xbf16, #tpu.memory_space<vmem>>, vector<12x16x128xbf16>,
    %c0_9 = arith.constant 0 : index
    %10 = arith.index_cast %1 : i32 to index
    %c2 = arith.constant 2 : index
    %c0_10 = arith.constant 0 : index
    %11 = vector.load %arg2[%c0_9, %10, %c2, %c0_10] : memref<1x20x32x128xbf16, #tpu.memory_space<vmem>>, vector<1x12x16x128xbf16>
    %12 = vector.shape_cast %11 : vector<1x12x16x128xbf16> to vector<12x16x128xbf16>
    %c0_11 = arith.constant 0 : index
    %c0_12 = arith.constant 0 : index
    %c256 = arith.constant 256 : index
    %13 = vector.load %arg10[%c0_11, %c0_12, %c256] : memref<12x16x384xbf16, #tpu.memory_space<vmem>>, vector<12x16x128xbf16>
    tpu.vector_store %arg10[%c0_11, %c0_12, %c256], %12 {strides = array<i32>} : memref<12x16x384xbf16, #tpu.memory_space<vmem>>, vector<12x16x128xbf16>,
    %c0_13 = arith.constant 0 : index
    %c0_14 = arith.constant 0 : index
    %c0_15 = arith.constant 0 : index
    %14 = vector.load %arg10[%c0_13, %c0_14, %c0_15] : memref<12x16x384xbf16, #tpu.memory_space<vmem>>, vector<10x16x384xbf16>
    %15 = vector.shape_cast %14 : vector<10x16x384xbf16> to vector<160x384xbf16>
    %c0_16 = arith.constant 0 : index
    %c0_17 = arith.constant 0 : index
    %16 = vector.load %arg4[%c0_16, %c0_17] : memref<1152x128xbf16, #tpu.memory_space<vmem>>, vector<384x128xbf16>
    %cst = arith.constant dense<0.000000e+00> : vector<160x128xf32>
    %17 = tpu.matmul %15, %16, %cst {dimension_numbers = #tpu.dot_dimension_numbers<[1], [0], [0], [1], [0, 0, 1, 1], [], []>} : vector<160x384xbf16>, vector<384x128xbf16>, vector<160x128xf32> -> vector<160x128xf32>
    %c1_18 = arith.constant 1 : index
    %c0_19 = arith.constant 0 : index
    %c0_20 = arith.constant 0 : index
    %18 = vector.load %arg10[%c1_18, %c0_19, %c0_20] : memref<12x16x384xbf16, #tpu.memory_space<vmem>>, vector<10x16x384xbf16>
    %19 = vector.shape_cast %18 : vector<10x16x384xbf16> to vector<160x384xbf16>
    %c384 = arith.constant 384 : index
    %c0_21 = arith.constant 0 : index
    %20 = vector.load %arg4[%c384, %c0_21] : memref<1152x128xbf16, #tpu.memory_space<vmem>>, vector<384x128xbf16>
    %cst_22 = arith.constant dense<0.000000e+00> : vector<160x128xf32>
    %21 = tpu.matmul %19, %20, %cst_22 {dimension_numbers = #tpu.dot_dimension_numbers<[1], [0], [0], [1], [0, 0, 1, 1], [], []>} : vector<160x384xbf16>, vector<384x128xbf16>, vector<160x128xf32> -> vector<160x128xf32>
    %22 = arith.addf %17, %21 : vector<160x128xf32>
    %c2_23 = arith.constant 2 : index
    %c0_24 = arith.constant 0 : index
    %c0_25 = arith.constant 0 : index
    %23 = vector.load %arg10[%c2_23, %c0_24, %c0_25] : memref<12x16x384xbf16, #tpu.memory_space<vmem>>, vector<10x16x384xbf16>
    %24 = vector.shape_cast %23 : vector<10x16x384xbf16> to vector<160x384xbf16>
    %c768 = arith.constant 768 : index
    %c0_26 = arith.constant 0 : index
    %25 = vector.load %arg4[%c768, %c0_26] : memref<1152x128xbf16, #tpu.memory_space<vmem>>, vector<384x128xbf16>
    %cst_27 = arith.constant dense<0.000000e+00> : vector<160x128xf32>
    %26 = tpu.matmul %24, %25, %cst_27 {dimension_numbers = #tpu.dot_dimension_numbers<[1], [0], [0], [1], [0, 0, 1, 1], [], []>} : vector<160x384xbf16>, vector<384x128xbf16>, vector<160x128xf32> -> vector<160x128xf32>
    %27 = arith.addf %22, %26 : vector<160x128xf32>
    %c0_28 = arith.constant 0 : index
    %c0_29 = arith.constant 0 : index
    %28 = vector.load %arg6[%c0_28, %c0_29] : memref<1x128xf32, #tpu.memory_space<vmem>>, vector<1x128xf32>
    %29 = vector.broadcast %28 : vector<1x128xf32> to vector<160x128xf32>
    %30 = arith.addf %27, %29 : vector<160x128xf32>
    %cst_30 = arith.constant 0.000000e+00 : f32
    %31 = vector.broadcast %cst_30 : f32 to vector<160x128xf32>
    %32 = arith.maximumf %30, %31 : vector<160x128xf32>
    %33 = vector.shape_cast %32 : vector<160x128xf32> to vector<10x16x128xf32>
    %34 = arith.truncf %33 : vector<10x16x128xf32> to vector<10x16x128xbf16>
    %c0_31 = arith.constant 0 : index
    %c16 = arith.constant 16 : index
    %c0_32 = arith.constant 0 : index
    %35 = vector.load %arg9[%c0_31, %c16, %c0_32] : memref<10x48x128xbf16, #tpu.memory_space<vmem>>, vector<10x16x128xbf16>
    tpu.vector_store %arg9[%c0_31, %c16, %c0_32], %34 {strides = array<i32>} : memref<10x48x128xbf16, #tpu.memory_space<vmem>>, vector<10x16x128xbf16>,
    %cst_33 = arith.constant 0.000000e+00 : bf16
    %36 = vector.broadcast %cst_33 : bf16 to vector<10x1x128xbf16>
    %c0_34 = arith.constant 0 : index
    %c15 = arith.constant 15 : index
    %c0_35 = arith.constant 0 : index
    %37 = vector.load %arg9[%c0_34, %c15, %c0_35] : memref<10x48x128xbf16, #tpu.memory_space<vmem>>, vector<10x1x128xbf16>
    tpu.vector_store %arg9[%c0_34, %c15, %c0_35], %36 {strides = array<i32>} : memref<10x48x128xbf16, #tpu.memory_space<vmem>>, vector<10x1x128xbf16>,
    %c0_36 = arith.constant 0 : index
    %c32 = arith.constant 32 : index
    %c0_37 = arith.constant 0 : index
    %38 = vector.load %arg9[%c0_36, %c32, %c0_37] : memref<10x48x128xbf16, #tpu.memory_space<vmem>>, vector<10x1x128xbf16>
    tpu.vector_store %arg9[%c0_36, %c32, %c0_37], %36 {strides = array<i32>} : memref<10x48x128xbf16, #tpu.memory_space<vmem>>, vector<10x1x128xbf16>,
    %cst_38 = arith.constant 0.000000e+00 : bf16
    %39 = vector.broadcast %cst_38 : bf16 to vector<1x48x128xbf16>
    %c0_i32 = arith.constant 0 : i32
    %40 = arith.cmpi eq, %arg1, %c0_i32 : i32
    %41 = arith.extui %40 : i1 to i32
    %c0_i32_39 = arith.constant 0 : i32
    %42 = arith.cmpi ne, %41, %c0_i32_39 : i32
    scf.if %42 {
      %c0_87 = arith.constant 0 : index
      %c0_88 = arith.constant 0 : index
      %c0_89 = arith.constant 0 : index
      %79 = vector.load %arg9[%c0_87, %c0_88, %c0_89] : memref<10x48x128xbf16, #tpu.memory_space<vmem>>, vector<1x48x128xbf16>
      tpu.vector_store %arg9[%c0_87, %c0_88, %c0_89], %39 {strides = array<i32>} : memref<10x48x128xbf16, #tpu.memory_space<vmem>>, vector<1x48x128xbf16>,
    } else {
    }
    %c1_i32 = arith.constant 1 : i32
    %43 = arith.cmpi eq, %arg1, %c1_i32 : i32
    %44 = arith.extui %43 : i1 to i32
    %c0_i32_40 = arith.constant 0 : i32
    %45 = arith.cmpi ne, %44, %c0_i32_40 : i32
    scf.if %45 {
      %c9 = arith.constant 9 : index
      %c0_87 = arith.constant 0 : index
      %c0_88 = arith.constant 0 : index
      %79 = vector.load %arg9[%c9, %c0_87, %c0_88] : memref<10x48x128xbf16, #tpu.memory_space<vmem>>, vector<1x48x128xbf16>
      tpu.vector_store %arg9[%c9, %c0_87, %c0_88], %39 {strides = array<i32>} : memref<10x48x128xbf16, #tpu.memory_space<vmem>>, vector<1x48x128xbf16>,
    } else {
    }
    %c0_41 = arith.constant 0 : index
    %c15_42 = arith.constant 15 : index
    %c0_43 = arith.constant 0 : index
    %46 = vector.load %arg9[%c0_41, %c15_42, %c0_43] : memref<10x48x128xbf16, #tpu.memory_space<vmem>>, vector<10x16x128xbf16>
    %c0_44 = arith.constant 0 : index
    %c0_45 = arith.constant 0 : index
    %c0_46 = arith.constant 0 : index
    %47 = vector.load %arg10[%c0_44, %c0_45, %c0_46] : memref<12x16x384xbf16, #tpu.memory_space<vmem>>, vector<10x16x128xbf16>
    tpu.vector_store %arg10[%c0_44, %c0_45, %c0_46], %46 {strides = array<i32>} : memref<12x16x384xbf16, #tpu.memory_space<vmem>>, vector<10x16x128xbf16>,
    %c0_47 = arith.constant 0 : index
    %c16_48 = arith.constant 16 : index
    %c0_49 = arith.constant 0 : index
    %48 = vector.load %arg9[%c0_47, %c16_48, %c0_49] : memref<10x48x128xbf16, #tpu.memory_space<vmem>>, vector<10x16x128xbf16>
    %c0_50 = arith.constant 0 : index
    %c0_51 = arith.constant 0 : index
    %c128_52 = arith.constant 128 : index
    %49 = vector.load %arg10[%c0_50, %c0_51, %c128_52] : memref<12x16x384xbf16, #tpu.memory_space<vmem>>, vector<10x16x128xbf16>
    tpu.vector_store %arg10[%c0_50, %c0_51, %c128_52], %48 {strides = array<i32>} : memref<12x16x384xbf16, #tpu.memory_space<vmem>>, vector<10x16x128xbf16>,
    %c0_53 = arith.constant 0 : index
    %c17 = arith.constant 17 : index
    %c0_54 = arith.constant 0 : index
    %50 = vector.load %arg9[%c0_53, %c17, %c0_54] : memref<10x48x128xbf16, #tpu.memory_space<vmem>>, vector<10x16x128xbf16>
    %c0_55 = arith.constant 0 : index
    %c0_56 = arith.constant 0 : index
    %c256_57 = arith.constant 256 : index
    %51 = vector.load %arg10[%c0_55, %c0_56, %c256_57] : memref<12x16x384xbf16, #tpu.memory_space<vmem>>, vector<10x16x128xbf16>
    tpu.vector_store %arg10[%c0_55, %c0_56, %c256_57], %50 {strides = array<i32>} : memref<12x16x384xbf16, #tpu.memory_space<vmem>>, vector<10x16x128xbf16>,
    %c0_58 = arith.constant 0 : index
    %c0_59 = arith.constant 0 : index
    %c0_60 = arith.constant 0 : index
    %52 = vector.load %arg10[%c0_58, %c0_59, %c0_60] : memref<12x16x384xbf16, #tpu.memory_space<vmem>>, vector<8x16x384xbf16>
    %53 = vector.shape_cast %52 : vector<8x16x384xbf16> to vector<128x384xbf16>
    %c0_61 = arith.constant 0 : index
    %c0_62 = arith.constant 0 : index
    %54 = vector.load %arg5[%c0_61, %c0_62] : memref<1152x128xbf16, #tpu.memory_space<vmem>>, vector<384x128xbf16>
    %cst_63 = arith.constant dense<0.000000e+00> : vector<128x128xf32>
    %55 = tpu.matmul %53, %54, %cst_63 {dimension_numbers = #tpu.dot_dimension_numbers<[1], [0], [0], [1], [0, 0, 1, 1], [], []>} : vector<128x384xbf16>, vector<384x128xbf16>, vector<128x128xf32> -> vector<128x128xf32>
    %c1_64 = arith.constant 1 : index
    %c0_65 = arith.constant 0 : index
    %c0_66 = arith.constant 0 : index
    %56 = vector.load %arg10[%c1_64, %c0_65, %c0_66] : memref<12x16x384xbf16, #tpu.memory_space<vmem>>, vector<8x16x384xbf16>
    %57 = vector.shape_cast %56 : vector<8x16x384xbf16> to vector<128x384xbf16>
    %c384_67 = arith.constant 384 : index
    %c0_68 = arith.constant 0 : index
    %58 = vector.load %arg5[%c384_67, %c0_68] : memref<1152x128xbf16, #tpu.memory_space<vmem>>, vector<384x128xbf16>
    %cst_69 = arith.constant dense<0.000000e+00> : vector<128x128xf32>
    %59 = tpu.matmul %57, %58, %cst_69 {dimension_numbers = #tpu.dot_dimension_numbers<[1], [0], [0], [1], [0, 0, 1, 1], [], []>} : vector<128x384xbf16>, vector<384x128xbf16>, vector<128x128xf32> -> vector<128x128xf32>
    %60 = arith.addf %55, %59 : vector<128x128xf32>
    %c2_70 = arith.constant 2 : index
    %c0_71 = arith.constant 0 : index
    %c0_72 = arith.constant 0 : index
    %61 = vector.load %arg10[%c2_70, %c0_71, %c0_72] : memref<12x16x384xbf16, #tpu.memory_space<vmem>>, vector<8x16x384xbf16>
    %62 = vector.shape_cast %61 : vector<8x16x384xbf16> to vector<128x384xbf16>
    %c768_73 = arith.constant 768 : index
    %c0_74 = arith.constant 0 : index
    %63 = vector.load %arg5[%c768_73, %c0_74] : memref<1152x128xbf16, #tpu.memory_space<vmem>>, vector<384x128xbf16>
    %cst_75 = arith.constant dense<0.000000e+00> : vector<128x128xf32>
    %64 = tpu.matmul %62, %63, %cst_75 {dimension_numbers = #tpu.dot_dimension_numbers<[1], [0], [0], [1], [0, 0, 1, 1], [], []>} : vector<128x384xbf16>, vector<384x128xbf16>, vector<128x128xf32> -> vector<128x128xf32>
    %65 = arith.addf %60, %64 : vector<128x128xf32>
    %c0_76 = arith.constant 0 : index
    %c0_77 = arith.constant 0 : index
    %c0_78 = arith.constant 0 : index
    %c0_79 = arith.constant 0 : index
    %66 = vector.load %arg3[%c0_76, %c0_77, %c0_78, %c0_79] : memref<1x8x16x128xf32, #tpu.memory_space<vmem>>, vector<1x8x16x128xf32>
    %67 = vector.shape_cast %66 : vector<1x8x16x128xf32> to vector<8x16x128xf32>
    %68 = vector.shape_cast %67 : vector<8x16x128xf32> to vector<128x128xf32>
    %c0_80 = arith.constant 0 : index
    %c0_81 = arith.constant 0 : index
    %69 = vector.load %arg7[%c0_80, %c0_81] : memref<1x128xf32, #tpu.memory_space<vmem>>, vector<1x128xf32>
    %70 = vector.broadcast %69 : vector<1x128xf32> to vector<128x128xf32>
    %71 = arith.addf %65, %70 : vector<128x128xf32>
    %72 = arith.addf %71, %68 : vector<128x128xf32>
    %cst_82 = arith.constant 0.000000e+00 : f32
    %73 = vector.broadcast %cst_82 : f32 to vector<128x128xf32>
    %74 = arith.maximumf %72, %73 : vector<128x128xf32>
    %75 = vector.shape_cast %74 : vector<128x128xf32> to vector<8x16x128xf32>
    %c0_83 = arith.constant 0 : index
    %c0_84 = arith.constant 0 : index
    %c0_85 = arith.constant 0 : index
    %c0_86 = arith.constant 0 : index
    %76 = vector.load %arg8[%c0_83, %c0_84, %c0_85, %c0_86] : memref<1x8x16x128xf32, #tpu.memory_space<vmem>>, vector<1x8x16x128xf32>
    %77 = vector.shape_cast %76 : vector<1x8x16x128xf32> to vector<8x16x128xf32>
    %78 = vector.shape_cast %75 : vector<8x16x128xf32> to vector<1x8x16x128xf32>
    tpu.vector_store %arg8[%c0_83, %c0_84, %c0_85, %c0_86], %78 {strides = array<i32>} : memref<1x8x16x128xf32, #tpu.memory_space<vmem>>, vector<1x8x16x128xf32>,
    return
  }
  func.func @transform_0(%arg0: i32, %arg1: i32) -> (i32, i32, i32, i32) {
    %c0_i32 = arith.constant 0 : i32
    %c0_i32_0 = arith.constant 0 : i32
    %c0_i32_1 = arith.constant 0 : i32
    %c0_i32_2 = arith.constant 0 : i32
    return %arg0, %c0_i32, %c0_i32_0, %c0_i32_1 : i32, i32, i32, i32
  }
  func.func @transform_1(%arg0: i32, %arg1: i32) -> (i32, i32, i32, i32) {
    %c0_i32 = arith.constant 0 : i32
    %c0_i32_0 = arith.constant 0 : i32
    %c0_i32_1 = arith.constant 0 : i32
    return %arg0, %arg1, %c0_i32, %c0_i32_0 : i32, i32, i32, i32
  }
  func.func @transform_2(%arg0: i32, %arg1: i32) -> (i32, i32) {
    %c0_i32 = arith.constant 0 : i32
    %c0_i32_0 = arith.constant 0 : i32
    %c0_i32_1 = arith.constant 0 : i32
    return %c0_i32, %c0_i32_0 : i32, i32
  }
  func.func @transform_3(%arg0: i32, %arg1: i32) -> (i32, i32) {
    %c0_i32 = arith.constant 0 : i32
    %c0_i32_0 = arith.constant 0 : i32
    %c0_i32_1 = arith.constant 0 : i32
    return %c0_i32, %c0_i32_0 : i32, i32
  }
  func.func @transform_4(%arg0: i32, %arg1: i32) -> (i32, i32) {
    %c0_i32 = arith.constant 0 : i32
    %c0_i32_0 = arith.constant 0 : i32
    %c0_i32_1 = arith.constant 0 : i32
    return %c0_i32, %c0_i32_0 : i32, i32
  }
  func.func @transform_5(%arg0: i32, %arg1: i32) -> (i32, i32) {
    %c0_i32 = arith.constant 0 : i32
    %c0_i32_0 = arith.constant 0 : i32
    %c0_i32_1 = arith.constant 0 : i32
    return %c0_i32, %c0_i32_0 : i32, i32
  }
  func.func @transform_6(%arg0: i32, %arg1: i32) -> (i32, i32, i32, i32) {
    %c0_i32 = arith.constant 0 : i32
    %c0_i32_0 = arith.constant 0 : i32
    %c0_i32_1 = arith.constant 0 : i32
    return %arg0, %arg1, %c0_i32, %c0_i32_0 : i32, i32, i32, i32
  }
}

</mosaic_0001>

<llo_original>
// kernel: tpu_custom_call.1
$region0: #{tpu_custom_call.1}
  #allocation0 [shape = 'u32[]', space=smem, size = 0x4, offset = 0x4, fixed_abs, tag = 'smem constant byte address 0x4 - core index']
  #allocation1 [shape = 'u32[144,128]{1,0:T(1,128)}', space=vmem, size = 0x12000, scoped, tag = 'internal scratch']
  #allocation2 [shape = 'bf16[10,48,128]{2,1,0:T(8,128)(2,1)}', space=vmem, size = 0x1e000, scoped, tag = 'scratch operand']
  #allocation3 [shape = 'bf16[12,16,384]{2,1,0:T(8,128)(2,1)}', space=vmem, size = 0x24000, scoped, tag = 'scratch operand']
  %s0 = inlined_call_operand.hbm [shape: bf16[2,20,32,128], index: 0, kind: input, shape index: {}]
  %s1 = inlined_call_operand.hbm [shape: f32[2,16,16,128], index: 1, kind: input, shape index: {}]
  %s2 = inlined_call_operand.hbm [shape: bf16[1152,128], index: 2, kind: input, shape index: {}]
  %s3 = inlined_call_operand.hbm [shape: bf16[1152,128], index: 3, kind: input, shape index: {}]
  %s4 = inlined_call_operand.vmem [shape: f32[1,128], index: 4, kind: input, shape index: {}]
  %s5 = inlined_call_operand.vmem [shape: f32[1,128], index: 5, kind: input, shape index: {}]
  %s6 = inlined_call_operand.hbm [shape: f32[2,16,16,128], index: 6, kind: output, shape index: {}]
  %s7 = sld [smem:[#allocation0]]
  $region81: #{tpu_custom_call.1} parent=0
    _
  %s9 = ssub.s32 1, %s7
  %s10 = scalar_select 0, %s9, %s7
  $region1: #{tpu_custom_call.1} parent=0
    #allocation4 [shape = 'u8[327680]{0}', space=vmem, size = 0x50000, scoped, tag = 'input window, operand 0']
    #allocation5 [shape = 's32[2]{0}', space=sflag, size = 0x8, scoped, tag = 'scoped memory for tpu_custom_call.1']
    #allocation6 [shape = 's32[2]{0}', space=sflag, size = 0x8, scoped, tag = 'scoped memory for tpu_custom_call.1']
    #allocation7 [shape = 'u8[131072]{0}', space=vmem, size = 0x20000, scoped, tag = 'input window, operand 1']
    #allocation8 [shape = 's32[2]{0}', space=sflag, size = 0x8, scoped, tag = 'scoped memory for tpu_custom_call.1']
    #allocation9 [shape = 'u8[294912]{0}', space=vmem, size = 0x48000, scoped, tag = 'input window, operand 2, single buffered']
    #allocation10 [shape = 'u8[294912]{0}', space=vmem, size = 0x48000, scoped, tag = 'input window, operand 3, single buffered']
    #allocation11 [shape = 's32[1]{0}', space=sflag, size = 0x4, scoped, tag = 'scoped memory for tpu_custom_call.1']
    #allocation12 [shape = 'u8[131072]{0}', space=vmem, size = 0x20000, scoped, tag = 'output window, operand 0']
    %11 = vsyncpa [#allocation5], 0
    %s12 = scalar_lea.sflag [#allocation5], 1
    %13 = vsyncpa %s12, 0
    %14 = vsyncpa [#allocation8], 0
    %s15 = scalar_lea.sflag [#allocation8], 1
    %16 = vsyncpa %s15, 0
    %17 = vsyncpa [#allocation11], 0
    %18 = vsyncpa [#allocation6], 0
    %s19 = scalar_lea.sflag [#allocation6], 1
    %20 = vsyncpa %s19, 0
    loop: start=0, step=1, limit=6
    $region2: #{tpu_custom_call.1} parent=1 // loop_pre_header
      _
    $region3: #{tpu_custom_call.1} parent=1 // loop_header
      %s22 = sphi 0, %s26
      %p23 = scmp.ge.s32.totalorder %s22, 6
      %s29 = sphi 0, %s41
      %s30 = sphi 0, %s37
      %s31 = sphi 0, %s29
      %s32 = sphi 0, %s30
      %s33 = sphi 0, %s31
      %s34 = sphi 0, %s32
      %s44 = sphi 0, %s46
      %s47 = sphi 0, %s44
      %s48 = sphi 0, %s47
      %s64 = sphi 0, %s48
      %s72 = sphi 0, %s74
      %s75 = sphi 0, %s72
      %s76 = sphi 0, %s75
      %s92 = sphi 0, %s76
      %s96 = sphi 0, %s96
      %s98 = sphi 0, %s96
      %s99 = sphi 0, %s98
      %s113 = sphi 0, %s99
      %s117 = sphi 0, %s117
      %s119 = sphi 0, %s117
      %s120 = sphi 0, %s119
      %s134 = sphi 0, %s120
      %s138 = sphi 0, %s138
      %s140 = sphi 0, %s138
      %s141 = sphi 0, %s140
      %s155 = sphi 0, %s141
      %s159 = sphi 0, %s159
      %s161 = sphi 0, %s159
      %s162 = sphi 0, %s161
      %s176 = sphi 0, %s162
      %s184 = sphi 0, %s186
      %s187 = sphi 0, %s184
      %s188 = sphi 0, %s187
      %s204 = sphi 0, %s188
    $region4: #{tpu_custom_call.1} parent=1 // loop_header_branch
      %25 = sbr.rel (%p23) target = $region8
    $region5: #{tpu_custom_call.1} parent=1 // loop_body
      %s27 = ssub.s32 %s22, 1
      %s28 = ssub.s32 %s22, 2
      %s35 = sadd.s32 1, %s30
      %p36 = scmp.ge.s32.totalorder %s35, 2
      %s37 = scalar_select %p36, 0, %s35
      %s38 = sadd.s32 1, %s29
      %s39 = scalar_select %p36, %s38, %s29
      %p40 = scmp.ge.s32.totalorder %s39, 2
      %s41 = scalar_select %p40, 0, %s39
      %s42 = ssub.s32 %s29, %s41
      %p43 = scmp.eq.s32.totalorder %s42, 0
      %s45 = sadd.s32 %s44, 1
      %s46 = scalar_select %p43, %s44, %s45
      %p49 = pneg %p43
      %p50 = scmp.eq.s32.totalorder %s22, 3
      %p51 = por %p49, %p50
      %p52 = scmp.ne.s32.totalorder %s44, %s47
      %p53 = scmp.eq.s32.totalorder %s22, 0
      %p54 = por %p52, %p53
      %p55 = scmp.ne.s32.totalorder %s44, %s47
      %p56 = scmp.eq.s32.totalorder %s27, 3
      %p57 = por %p55, %p56
      %p58 = scmp.ne.s32.totalorder %s47, %s48
      %p59 = scmp.eq.s32.totalorder %s27, 0
      %p60 = por %p58, %p59
      %p61 = scmp.ne.s32.totalorder %s47, %s48
      %p62 = scmp.eq.s32.totalorder %s28, 3
      %p63 = por %p61, %p62
      %p65 = scmp.ne.s32.totalorder %s48, %s64
      %p66 = scmp.eq.s32.totalorder %s28, 0
      %p67 = por %p65, %p66
      %s68 = ssub.s32 %s29, %s41
      %s69 = ssub.s32 %s30, %s37
      %s70 = sor.u32 %s68, %s69
      %p71 = scmp.eq.s32.totalorder %s70, 0
      %s73 = sadd.s32 %s72, 1
      %s74 = scalar_select %p71, %s72, %s73
      %p77 = pneg %p71
      %p78 = scmp.eq.s32.totalorder %s22, 3
      %p79 = por %p77, %p78
      %p80 = scmp.ne.s32.totalorder %s72, %s75
      %p81 = scmp.eq.s32.totalorder %s22, 0
      %p82 = por %p80, %p81
      %p83 = scmp.ne.s32.totalorder %s72, %s75
      %p84 = scmp.eq.s32.totalorder %s27, 3
      %p85 = por %p83, %p84
      %p86 = scmp.ne.s32.totalorder %s75, %s76
      %p87 = scmp.eq.s32.totalorder %s27, 0
      %p88 = por %p86, %p87
      %p89 = scmp.ne.s32.totalorder %s75, %s76
      %p90 = scmp.eq.s32.totalorder %s28, 3
      %p91 = por %p89, %p90
      %p93 = scmp.ne.s32.totalorder %s76, %s92
      %p94 = scmp.eq.s32.totalorder %s28, 0
      %p95 = por %p93, %p94
      %s97 = sadd.s32 %s96, 1
      %p100 = scmp.eq.s32.totalorder %s22, 3
      %p101 = scmp.ne.s32.totalorder %s96, %s98
      %p102 = scmp.eq.s32.totalorder %s22, 0
      %p103 = por %p101, %p102
      %p104 = scmp.ne.s32.totalorder %s96, %s98
      %p105 = scmp.eq.s32.totalorder %s27, 3
      %p106 = por %p104, %p105
      %p107 = scmp.ne.s32.totalorder %s98, %s99
      %p108 = scmp.eq.s32.totalorder %s27, 0
      %p109 = por %p107, %p108
      %p110 = scmp.ne.s32.totalorder %s98, %s99
      %p111 = scmp.eq.s32.totalorder %s28, 3
      %p112 = por %p110, %p111
      %p114 = scmp.ne.s32.totalorder %s99, %s113
      %p115 = scmp.eq.s32.totalorder %s28, 0
      %p116 = por %p114, %p115
      %s118 = sadd.s32 %s117, 1
      %p121 = scmp.eq.s32.totalorder %s22, 3
      %p122 = scmp.ne.s32.totalorder %s117, %s119
      %p123 = scmp.eq.s32.totalorder %s22, 0
      %p124 = por %p122, %p123
      %p125 = scmp.ne.s32.totalorder %s117, %s119
      %p126 = scmp.eq.s32.totalorder %s27, 3
      %p127 = por %p125, %p126
      %p128 = scmp.ne.s32.totalorder %s119, %s120
      %p129 = scmp.eq.s32.totalorder %s27, 0
      %p130 = por %p128, %p129
      %p131 = scmp.ne.s32.totalorder %s119, %s120
      %p132 = scmp.eq.s32.totalorder %s28, 3
      %p133 = por %p131, %p132
      %p135 = scmp.ne.s32.totalorder %s120, %s134
      %p136 = scmp.eq.s32.totalorder %s28, 0
      %p137 = por %p135, %p136
      %s139 = sadd.s32 %s138, 1
      %p142 = scmp.eq.s32.totalorder %s22, 3
      %p143 = scmp.ne.s32.totalorder %s138, %s140
      %p144 = scmp.eq.s32.totalorder %s22, 0
      %p145 = por %p143, %p144
      %p146 = scmp.ne.s32.totalorder %s138, %s140
      %p147 = scmp.eq.s32.totalorder %s27, 3
      %p148 = por %p146, %p147
      %p149 = scmp.ne.s32.totalorder %s140, %s141
      %p150 = scmp.eq.s32.totalorder %s27, 0
      %p151 = por %p149, %p150
      %p152 = scmp.ne.s32.totalorder %s140, %s141
      %p153 = scmp.eq.s32.totalorder %s28, 3
      %p154 = por %p152, %p153
      %p156 = scmp.ne.s32.totalorder %s141, %s155
      %p157 = scmp.eq.s32.totalorder %s28, 0
      %p158 = por %p156, %p157
      %s160 = sadd.s32 %s159, 1
      %p163 = scmp.eq.s32.totalorder %s22, 3
      %p164 = scmp.ne.s32.totalorder %s159, %s161
      %p165 = scmp.eq.s32.totalorder %s22, 0
      %p166 = por %p164, %p165
      %p167 = scmp.ne.s32.totalorder %s159, %s161
      %p168 = scmp.eq.s32.totalorder %s27, 3
      %p169 = por %p167, %p168
      %p170 = scmp.ne.s32.totalorder %s161, %s162
      %p171 = scmp.eq.s32.totalorder %s27, 0
      %p172 = por %p170, %p171
      %p173 = scmp.ne.s32.totalorder %s161, %s162
      %p174 = scmp.eq.s32.totalorder %s28, 3
      %p175 = por %p173, %p174
      %p177 = scmp.ne.s32.totalorder %s162, %s176
      %p178 = scmp.eq.s32.totalorder %s28, 0
      %p179 = por %p177, %p178
      %s180 = ssub.s32 %s29, %s41
      %s181 = ssub.s32 %s30, %s37
      %s182 = sor.u32 %s180, %s181
      %p183 = scmp.eq.s32.totalorder %s182, 0
      %s185 = sadd.s32 %s184, 1
      %s186 = scalar_select %p183, %s184, %s185
      %p189 = pneg %p183
      %p190 = scmp.eq.s32.totalorder %s22, 3
      %p191 = por %p189, %p190
      %p192 = scmp.ne.s32.totalorder %s184, %s187
      %p193 = scmp.eq.s32.totalorder %s22, 0
      %p194 = por %p192, %p193
      %p195 = scmp.ne.s32.totalorder %s184, %s187
      %p196 = scmp.eq.s32.totalorder %s27, 3
      %p197 = por %p195, %p196
      %p198 = scmp.ne.s32.totalorder %s187, %s188
      %p199 = scmp.eq.s32.totalorder %s27, 0
      %p200 = por %p198, %p199
      %p201 = scmp.ne.s32.totalorder %s187, %s188
      %p202 = scmp.eq.s32.totalorder %s28, 3
      %p203 = por %p201, %p202
      %p205 = scmp.ne.s32.totalorder %s188, %s204
      %p206 = scmp.eq.s32.totalorder %s28, 0
      %p207 = por %p205, %p206
      %p208 = scmp.le.s32.totalorder 1, %s22
      %p209 = scmp.lt.s32.totalorder %s22, 5
      %p210 = pnand %p208, %p209
      %p211 = pneg %p210
      // Predicated region
      $region9: #{tpu_custom_call.1} parent=5 // pred_check
        _
      $region10: #{tpu_custom_call.1} parent=5 // pred_check_branch
        %213 = sbr.rel (%p210) target = $region12
      $region11: #{tpu_custom_call.1} parent=5 // pred_region
        %s214 = ssub.s32 %s22, 1
        // Predicated region
        $region13: #{tpu_custom_call.1} parent=11 // pred_check
          %p215 = pneg %p109
        $region14: #{tpu_custom_call.1} parent=11 // pred_check_branch
          %217 = sbr.rel (%p215) target = $region16
        $region15: #{tpu_custom_call.1} parent=11 // pred_region
          %s219 = ssub.s32 9216, 9216
          %220 = vsyncadd [#allocation8], %s219
          %s221 = sshll.u32 [#allocation9], 4
          %s222 = int_to_ptr.vmem [resolvable:$true] %s221
          %227 = dma.hbm_to_vmem [thread:$0]  %s2, 9216, %s222, [#allocation8], 64, 64, 4
        $region16: #{tpu_custom_call.1} parent=11 // pred_fallthru
          _
        // Predicated region
        $region17: #{tpu_custom_call.1} parent=11 // pred_check
          %p228 = pneg %p130
        $region18: #{tpu_custom_call.1} parent=11 // pred_check_branch
          %230 = sbr.rel (%p228) target = $region20
        $region19: #{tpu_custom_call.1} parent=11 // pred_region
          %s232 = ssub.s32 9216, 9216
          %233 = vsyncadd [#allocation11], %s232
          %s234 = sshll.u32 [#allocation10], 4
          %s235 = int_to_ptr.vmem [resolvable:$true] %s234
          %240 = dma.hbm_to_vmem [thread:$0]  %s3, 9216, %s235, [#allocation11], 64, 64, 4
        $region20: #{tpu_custom_call.1} parent=11 // pred_fallthru
          _
        // Predicated region
        $region21: #{tpu_custom_call.1} parent=11 // pred_check
          %p241 = pneg %p151
        $region22: #{tpu_custom_call.1} parent=11 // pred_check_branch
          %243 = sbr.rel (%p241) target = $region24
        $region23: #{tpu_custom_call.1} parent=11 // pred_region
          _
        $region24: #{tpu_custom_call.1} parent=11 // pred_fallthru
          _
        // Predicated region
        $region25: #{tpu_custom_call.1} parent=11 // pred_check
          %p244 = pneg %p172
        $region26: #{tpu_custom_call.1} parent=11 // pred_check_branch
          %246 = sbr.rel (%p244) target = $region28
        $region27: #{tpu_custom_call.1} parent=11 // pred_region
          _
        $region28: #{tpu_custom_call.1} parent=11 // pred_fallthru
          _
      $region12: #{tpu_custom_call.1} parent=5 // pred_fallthru
        _
      %p247 = scmp.lt.s32.totalorder %s22, 4
      // Predicated region
      $region29: #{tpu_custom_call.1} parent=5 // pred_check
        %p248 = pneg %p247
      $region30: #{tpu_custom_call.1} parent=5 // pred_check_branch
        %250 = sbr.rel (%p248) target = $region32
      $region31: #{tpu_custom_call.1} parent=5 // pred_region
        // Predicated region
        $region33: #{tpu_custom_call.1} parent=31 // pred_check
          %p251 = pneg %p54
        $region34: #{tpu_custom_call.1} parent=31 // pred_check_branch
          %253 = sbr.rel (%p251) target = $region36
        $region35: #{tpu_custom_call.1} parent=31 // pred_region
          %s254 = sand.u32 %s44, 1
          %s255 = scalar_lea.sflag [#allocation5], %s254
          %s256 = sand.u32 %s44, 1
          %s257 = smul.addr %s256, 320
          %s258 = scalar_lea.vmem [#allocation4], %s257
          %s260 = ssub.s32 5120, 5120
          %261 = vsyncadd %s255, %s260
          %s262 = smul.addr %s29, 80
          %s263 = smul.addr %s262, 64
          %s264 = scalar_lea.hbm %s0, %s263
          %s265 = sshll.u32 %s258, 4
          %s266 = int_to_ptr.vmem [resolvable:$true] %s265
          %271 = dma.hbm_to_vmem [thread:$0]  %s264, 5120, %s266, %s255, 64, 64, 4
        $region36: #{tpu_custom_call.1} parent=31 // pred_fallthru
          _
        // Predicated region
        $region37: #{tpu_custom_call.1} parent=31 // pred_check
          %p272 = pneg %p82
        $region38: #{tpu_custom_call.1} parent=31 // pred_check_branch
          %274 = sbr.rel (%p272) target = $region40
        $region39: #{tpu_custom_call.1} parent=31 // pred_region
          %s275 = sand.u32 %s22, 1
          %s276 = scalar_lea.sflag [#allocation8], %s275
          %s277 = sand.u32 %s72, 1
          %s278 = smul.addr %s277, 128
          %s279 = scalar_lea.vmem [#allocation7], %s278
          %s280 = smul.u32 8, %s30
          %s282 = ssub.s32 2048, 2048
          %283 = vsyncadd %s276, %s282
          %s284 = smul.addr %s280, 2
          %s285 = smul.addr %s29, 32
          %s286 = sadd.s32 %s284, %s285
          %s287 = smul.addr %s286, 128
          %s288 = scalar_lea.hbm %s1, %s287
          %s289 = sshll.u32 %s279, 4
          %s290 = int_to_ptr.vmem [resolvable:$true] %s289
          %295 = dma.hbm_to_vmem [thread:$0]  %s288, 2048, %s290, %s276, 128, 128, 8
        $region40: #{tpu_custom_call.1} parent=31 // pred_fallthru
          _
      $region32: #{tpu_custom_call.1} parent=5 // pred_fallthru
        _
      %p296 = scmp.le.s32.totalorder 1, %s22
      %p297 = scmp.lt.s32.totalorder %s22, 5
      %p298 = pnand %p296, %p297
      %p299 = pneg %p298
      // Predicated region
      $region41: #{tpu_custom_call.1} parent=5 // pred_check
        _
      $region42: #{tpu_custom_call.1} parent=5 // pred_check_branch
        %301 = sbr.rel (%p298) target = $region44
      $region43: #{tpu_custom_call.1} parent=5 // pred_region
        %s302 = ssub.s32 %s22, 1
        %s303 = sand.u32 %s47, 1
        %s304 = scalar_lea.sflag [#allocation5], %s303
        %s305 = sand.u32 %s47, 1
        %s306 = smul.addr %s305, 320
        %s307 = scalar_lea.vmem [#allocation4], %s306
        // Predicated region
        $region45: #{tpu_custom_call.1} parent=43 // pred_check
          %p308 = pneg %p60
        $region46: #{tpu_custom_call.1} parent=43 // pred_check_branch
          %310 = sbr.rel (%p308) target = $region48
        $region47: #{tpu_custom_call.1} parent=43 // pred_region
          %311 = dma.done %s304, 5120
        $region48: #{tpu_custom_call.1} parent=43 // pred_fallthru
          _
        %s312 = sand.u32 %s27, 1
        %s313 = scalar_lea.sflag [#allocation8], %s312
        %s314 = sand.u32 %s75, 1
        %s315 = smul.addr %s314, 128
        %s316 = scalar_lea.vmem [#allocation7], %s315
        // Predicated region
        $region49: #{tpu_custom_call.1} parent=43 // pred_check
          %p317 = pneg %p88
        $region50: #{tpu_custom_call.1} parent=43 // pred_check_branch
          %319 = sbr.rel (%p317) target = $region52
        $region51: #{tpu_custom_call.1} parent=43 // pred_region
          %320 = dma.done %s313, 2048
        $region52: #{tpu_custom_call.1} parent=43 // pred_fallthru
          _
        // Predicated region
        $region53: #{tpu_custom_call.1} parent=43 // pred_check
          %p321 = pneg %p109
        $region54: #{tpu_custom_call.1} parent=43 // pred_check_branch
          %323 = sbr.rel (%p321) target = $region56
        $region55: #{tpu_custom_call.1} parent=43 // pred_region
          %324 = dma.done [#allocation8], 9216
        $region56: #{tpu_custom_call.1} parent=43 // pred_fallthru
          _
        // Predicated region
        $region57: #{tpu_custom_call.1} parent=43 // pred_check
          %p325 = pneg %p130
        $region58: #{tpu_custom_call.1} parent=43 // pred_check_branch
          %327 = sbr.rel (%p325) target = $region60
        $region59: #{tpu_custom_call.1} parent=43 // pred_region
          %328 = dma.done [#allocation11], 9216
        $region60: #{tpu_custom_call.1} parent=43 // pred_fallthru
          _
        %s329 = sand.u32 %s47, 1
        %s330 = scalar_lea.sflag [#allocation5], %s329
        %s331 = sand.u32 %s47, 1
        %s332 = smul.addr %s331, 320
        %s333 = scalar_lea.vmem [#allocation4], %s332
        %p334 = pneg %p60
        %p335 = pneg %p57
        %s336 = sand.u32 %s27, 1
        %s337 = scalar_lea.sflag [#allocation8], %s336
        %s338 = sand.u32 %s75, 1
        %s339 = smul.addr %s338, 128
        %s340 = scalar_lea.vmem [#allocation7], %s339
        %p341 = pneg %p88
        %p342 = pneg %p85
        %p343 = pneg %p109
        %p344 = pneg %p106
        %p345 = pneg %p130
        %p346 = pneg %p127
        %p347 = pneg %p151
        %p348 = pneg %p148
        %p349 = pneg %p172
        %p350 = pneg %p169
        %p351 = pneg %p200
        %p352 = pneg %p197
        %s353 = sand.u32 %s187, 1
        %s354 = scalar_lea.sflag [#allocation6], %s353
        %s355 = sand.u32 %s187, 1
        %s356 = smul.addr %s355, 128
        %s357 = scalar_lea.vmem [#allocation12], %s356
        %s358 = smul.u32 8, %s32
        %s359 = smul.u32 8, %s32
        %s361 = smul.u32 %s32, 8
        %s362 = smul.u32 %s361, 4
        %s363 = smul.addr %s362, 4
        %s364 = scalar_lea.vmem %s307, %s363 [#allocation4]
        %v365 = vld [vmem:[%s364] sm:$0xf]
        %v366 = vld [vmem:[%s364 + $0x4] sm:$0xf]
        %v367 = vld [vmem:[%s364 + $0x10] sm:$0xf]
        %v368 = vld [vmem:[%s364 + $0x14] sm:$0xf]
        %v369 = vld [vmem:[%s364 + $0x20] sm:$0xf]
        %v370 = vld [vmem:[%s364 + $0x24] sm:$0xf]
        %v371 = vld [vmem:[%s364 + $0x30] sm:$0xf]
        %v372 = vld [vmem:[%s364 + $0x34] sm:$0xf]
        %v373 = vld [vmem:[%s364 + $0x40] sm:$0xf]
        %v374 = vld [vmem:[%s364 + $0x44] sm:$0xf]
        %v375 = vld [vmem:[%s364 + $0x50] sm:$0xf]
        %v376 = vld [vmem:[%s364 + $0x54] sm:$0xf]
        %v377 = vld [vmem:[%s364 + $0x60] sm:$0xf]
        %v378 = vld [vmem:[%s364 + $0x64] sm:$0xf]
        %v379 = vld [vmem:[%s364 + $0x70] sm:$0xf]
        %v380 = vld [vmem:[%s364 + $0x74] sm:$0xf]
        %v381 = vld [vmem:[%s364 + $0x80] sm:$0xf]
        %v382 = vld [vmem:[%s364 + $0x84] sm:$0xf]
        %v383 = vld [vmem:[%s364 + $0x90] sm:$0xf]
        %v384 = vld [vmem:[%s364 + $0x94] sm:$0xf]
        %v385 = vld [vmem:[%s364 + $0xa0] sm:$0xf]
        %v386 = vld [vmem:[%s364 + $0xa4] sm:$0xf]
        %v387 = vld [vmem:[%s364 + $0xb0] sm:$0xf]
        %v388 = vld [vmem:[%s364 + $0xb4] sm:$0xf]
        %389 = vst [vmem:[#allocation3] sm:$0xf] %v365
        %390 = vst [vmem:[#allocation3 + $0xc] sm:$0xf] %v366
        %391 = vst [vmem:[#allocation3 + $0x18] sm:$0xf] %v367
        %392 = vst [vmem:[#allocation3 + $0x24] sm:$0xf] %v368
        %393 = vst [vmem:[#allocation3 + $0x30] sm:$0xf] %v369
        %394 = vst [vmem:[#allocation3 + $0x3c] sm:$0xf] %v370
        %395 = vst [vmem:[#allocation3 + $0x48] sm:$0xf] %v371
        %396 = vst [vmem:[#allocation3 + $0x54] sm:$0xf] %v372
        %397 = vst [vmem:[#allocation3 + $0x60] sm:$0xf] %v373
        %398 = vst [vmem:[#allocation3 + $0x6c] sm:$0xf] %v374
        %399 = vst [vmem:[#allocation3 + $0x78] sm:$0xf] %v375
        %400 = vst [vmem:[#allocation3 + $0x84] sm:$0xf] %v376
        %401 = vst [vmem:[#allocation3 + $0x90] sm:$0xf] %v377
        %402 = vst [vmem:[#allocation3 + $0x9c] sm:$0xf] %v378
        %403 = vst [vmem:[#allocation3 + $0xa8] sm:$0xf] %v379
        %404 = vst [vmem:[#allocation3 + $0xb4] sm:$0xf] %v380
        %405 = vst [vmem:[#allocation3 + $0xc0] sm:$0xf] %v381
        %406 = vst [vmem:[#allocation3 + $0xcc] sm:$0xf] %v382
        %407 = vst [vmem:[#allocation3 + $0xd8] sm:$0xf] %v383
        %408 = vst [vmem:[#allocation3 + $0xe4] sm:$0xf] %v384
        %409 = vst [vmem:[#allocation3 + $0xf0] sm:$0xf] %v385
        %410 = vst [vmem:[#allocation3 + $0xfc] sm:$0xf] %v386
        %411 = vst [vmem:[#allocation3 + $0x108] sm:$0xf] %v387
        %412 = vst [vmem:[#allocation3 + $0x114] sm:$0xf] %v388
        %v413 = vld [vmem:[%s364] sm:$0xf]
        %v414 = vld [vmem:[%s364 + $0x4] sm:$0xf]
        %v415 = vld [vmem:[%s364 + $0x8] sm:$0x1]
        %v416 = vld [vmem:[%s364 + $0x10] sm:$0xf]
        %v417 = vld [vmem:[%s364 + $0x14] sm:$0xf]
        %v418 = vld [vmem:[%s364 + $0x18] sm:$0x1]
        %v419 = vld [vmem:[%s364 + $0x20] sm:$0xf]
        %v420 = vld [vmem:[%s364 + $0x24] sm:$0xf]
        %v421 = vld [vmem:[%s364 + $0x28] sm:$0x1]
        %v422 = vld [vmem:[%s364 + $0x30] sm:$0xf]
        %v423 = vld [vmem:[%s364 + $0x34] sm:$0xf]
        %v424 = vld [vmem:[%s364 + $0x38] sm:$0x1]
        %v425 = vld [vmem:[%s364 + $0x40] sm:$0xf]
        %v426 = vld [vmem:[%s364 + $0x44] sm:$0xf]
        %v427 = vld [vmem:[%s364 + $0x48] sm:$0x1]
        %v428 = vld [vmem:[%s364 + $0x50] sm:$0xf]
        %v429 = vld [vmem:[%s364 + $0x54] sm:$0xf]
        %v430 = vld [vmem:[%s364 + $0x58] sm:$0x1]
        %v431 = vld [vmem:[%s364 + $0x60] sm:$0xf]
        %v432 = vld [vmem:[%s364 + $0x64] sm:$0xf]
        %v433 = vld [vmem:[%s364 + $0x68] sm:$0x1]
        %v434 = vld [vmem:[%s364 + $0x70] sm:$0xf]
        %v435 = vld [vmem:[%s364 + $0x74] sm:$0xf]
        %v436 = vld [vmem:[%s364 + $0x78] sm:$0x1]
        %v437 = vld [vmem:[%s364 + $0x80] sm:$0xf]
        %v438 = vld [vmem:[%s364 + $0x84] sm:$0xf]
        %v439 = vld [vmem:[%s364 + $0x88] sm:$0x1]
        %v440 = vld [vmem:[%s364 + $0x90] sm:$0xf]
        %v441 = vld [vmem:[%s364 + $0x94] sm:$0xf]
        %v442 = vld [vmem:[%s364 + $0x98] sm:$0x1]
        %v443 = vld [vmem:[%s364 + $0xa0] sm:$0xf]
        %v444 = vld [vmem:[%s364 + $0xa4] sm:$0xf]
        %v445 = vld [vmem:[%s364 + $0xa8] sm:$0x1]
        %v446 = vld [vmem:[%s364 + $0xb0] sm:$0xf]
        %v447 = vld [vmem:[%s364 + $0xb4] sm:$0xf]
        %v448 = vld [vmem:[%s364 + $0xb8] sm:$0x1]
        %vm449 = vsmask.f32 3328
        %vm450 = vsmask.f32 7440
        %vm451 = vmor %vm449, %vm450
        %v453 = vshrl.u32 %v413, 16
        %v455 = vrot.slane %v453, 4
        %v456 = vshll.u32 %v413, 16
        %v458 = vrot.slane %v456, 5
        %v459 = vor.u32 %v455, %v458
        %v460 = vrot.slane %v459, 4
        %v462 = vshll.u32 %v414, 16
        %v464 = vrot.slane %v462, 5
        %v465 = vsel %vm451, %v460, %v464
        %v466 = vshrl.u32 %v414, 16
        %v468 = vrot.slane %v466, 4
        %v469 = vor.u32 %v468, %v464
        %v470 = vrot.slane %v469, 4
        %v472 = vshll.u32 %v415, 16
        %v474 = vrot.slane %v472, 5
        %v475 = vsel %vm451, %v470, %v474
        %v477 = vshrl.u32 %v416, 16
        %v479 = vrot.slane %v477, 4
        %v480 = vshll.u32 %v416, 16
        %v482 = vrot.slane %v480, 5
        %v483 = vor.u32 %v479, %v482
        %v484 = vrot.slane %v483, 4
        %v486 = vshll.u32 %v417, 16
        %v488 = vrot.slane %v486, 5
        %v489 = vsel %vm451, %v484, %v488
        %v490 = vshrl.u32 %v417, 16
        %v492 = vrot.slane %v490, 4
        %v493 = vor.u32 %v492, %v488
        %v494 = vrot.slane %v493, 4
        %v496 = vshll.u32 %v418, 16
        %v498 = vrot.slane %v496, 5
        %v499 = vsel %vm451, %v494, %v498
        %v501 = vshrl.u32 %v419, 16
        %v503 = vrot.slane %v501, 4
        %v504 = vshll.u32 %v419, 16
        %v506 = vrot.slane %v504, 5
        %v507 = vor.u32 %v503, %v506
        %v508 = vrot.slane %v507, 4
        %v510 = vshll.u32 %v420, 16
        %v512 = vrot.slane %v510, 5
        %v513 = vsel %vm451, %v508, %v512
        %v514 = vshrl.u32 %v420, 16
        %v516 = vrot.slane %v514, 4
        %v517 = vor.u32 %v516, %v512
        %v518 = vrot.slane %v517, 4
        %v520 = vshll.u32 %v421, 16
        %v522 = vrot.slane %v520, 5
        %v523 = vsel %vm451, %v518, %v522
        %v525 = vshrl.u32 %v422, 16
        %v527 = vrot.slane %v525, 4
        %v528 = vshll.u32 %v422, 16
        %v530 = vrot.slane %v528, 5
        %v531 = vor.u32 %v527, %v530
        %v532 = vrot.slane %v531, 4
        %v534 = vshll.u32 %v423, 16
        %v536 = vrot.slane %v534, 5
        %v537 = vsel %vm451, %v532, %v536
        %v538 = vshrl.u32 %v423, 16
        %v540 = vrot.slane %v538, 4
        %v541 = vor.u32 %v540, %v536
        %v542 = vrot.slane %v541, 4
        %v544 = vshll.u32 %v424, 16
        %v546 = vrot.slane %v544, 5
        %v547 = vsel %vm451, %v542, %v546
        %v549 = vshrl.u32 %v425, 16
        %v551 = vrot.slane %v549, 4
        %v552 = vshll.u32 %v425, 16
        %v554 = vrot.slane %v552, 5
        %v555 = vor.u32 %v551, %v554
        %v556 = vrot.slane %v555, 4
        %v558 = vshll.u32 %v426, 16
        %v560 = vrot.slane %v558, 5
        %v561 = vsel %vm451, %v556, %v560
        %v562 = vshrl.u32 %v426, 16
        %v564 = vrot.slane %v562, 4
        %v565 = vor.u32 %v564, %v560
        %v566 = vrot.slane %v565, 4
        %v568 = vshll.u32 %v427, 16
        %v570 = vrot.slane %v568, 5
        %v571 = vsel %vm451, %v566, %v570
        %v573 = vshrl.u32 %v428, 16
        %v575 = vrot.slane %v573, 4
        %v576 = vshll.u32 %v428, 16
        %v578 = vrot.slane %v576, 5
        %v579 = vor.u32 %v575, %v578
        %v580 = vrot.slane %v579, 4
        %v582 = vshll.u32 %v429, 16
        %v584 = vrot.slane %v582, 5
        %v585 = vsel %vm451, %v580, %v584
        %v586 = vshrl.u32 %v429, 16
        %v588 = vrot.slane %v586, 4
        %v589 = vor.u32 %v588, %v584
        %v590 = vrot.slane %v589, 4
        %v592 = vshll.u32 %v430, 16
        %v594 = vrot.slane %v592, 5
        %v595 = vsel %vm451, %v590, %v594
        %v597 = vshrl.u32 %v431, 16
        %v599 = vrot.slane %v597, 4
        %v600 = vshll.u32 %v431, 16
        %v602 = vrot.slane %v600, 5
        %v603 = vor.u32 %v599, %v602
        %v604 = vrot.slane %v603, 4
        %v606 = vshll.u32 %v432, 16
        %v608 = vrot.slane %v606, 5
        %v609 = vsel %vm451, %v604, %v608
        %v610 = vshrl.u32 %v432, 16
        %v612 = vrot.slane %v610, 4
        %v613 = vor.u32 %v612, %v608
        %v614 = vrot.slane %v613, 4
        %v616 = vshll.u32 %v433, 16
        %v618 = vrot.slane %v616, 5
        %v619 = vsel %vm451, %v614, %v618
        %v621 = vshrl.u32 %v434, 16
        %v623 = vrot.slane %v621, 4
        %v624 = vshll.u32 %v434, 16
        %v626 = vrot.slane %v624, 5
        %v627 = vor.u32 %v623, %v626
        %v628 = vrot.slane %v627, 4
        %v630 = vshll.u32 %v435, 16
        %v632 = vrot.slane %v630, 5
        %v633 = vsel %vm451, %v628, %v632
        %v634 = vshrl.u32 %v435, 16
        %v636 = vrot.slane %v634, 4
        %v637 = vor.u32 %v636, %v632
        %v638 = vrot.slane %v637, 4
        %v640 = vshll.u32 %v436, 16
        %v642 = vrot.slane %v640, 5
        %v643 = vsel %vm451, %v638, %v642
        %v645 = vshrl.u32 %v437, 16
        %v647 = vrot.slane %v645, 4
        %v648 = vshll.u32 %v437, 16
        %v650 = vrot.slane %v648, 5
        %v651 = vor.u32 %v647, %v650
        %v652 = vrot.slane %v651, 4
        %v654 = vshll.u32 %v438, 16
        %v656 = vrot.slane %v654, 5
        %v657 = vsel %vm451, %v652, %v656
        %v658 = vshrl.u32 %v438, 16
        %v660 = vrot.slane %v658, 4
        %v661 = vor.u32 %v660, %v656
        %v662 = vrot.slane %v661, 4
        %v664 = vshll.u32 %v439, 16
        %v666 = vrot.slane %v664, 5
        %v667 = vsel %vm451, %v662, %v666
        %v669 = vshrl.u32 %v440, 16
        %v671 = vrot.slane %v669, 4
        %v672 = vshll.u32 %v440, 16
        %v674 = vrot.slane %v672, 5
        %v675 = vor.u32 %v671, %v674
        %v676 = vrot.slane %v675, 4
        %v678 = vshll.u32 %v441, 16
        %v680 = vrot.slane %v678, 5
        %v681 = vsel %vm451, %v676, %v680
        %v682 = vshrl.u32 %v441, 16
        %v684 = vrot.slane %v682, 4
        %v685 = vor.u32 %v684, %v680
        %v686 = vrot.slane %v685, 4
        %v688 = vshll.u32 %v442, 16
        %v690 = vrot.slane %v688, 5
        %v691 = vsel %vm451, %v686, %v690
        %v693 = vshrl.u32 %v443, 16
        %v695 = vrot.slane %v693, 4
        %v696 = vshll.u32 %v443, 16
        %v698 = vrot.slane %v696, 5
        %v699 = vor.u32 %v695, %v698
        %v700 = vrot.slane %v699, 4
        %v702 = vshll.u32 %v444, 16
        %v704 = vrot.slane %v702, 5
        %v705 = vsel %vm451, %v700, %v704
        %v706 = vshrl.u32 %v444, 16
        %v708 = vrot.slane %v706, 4
        %v709 = vor.u32 %v708, %v704
        %v710 = vrot.slane %v709, 4
        %v712 = vshll.u32 %v445, 16
        %v714 = vrot.slane %v712, 5
        %v715 = vsel %vm451, %v710, %v714
        %v717 = vshrl.u32 %v446, 16
        %v719 = vrot.slane %v717, 4
        %v720 = vshll.u32 %v446, 16
        %v722 = vrot.slane %v720, 5
        %v723 = vor.u32 %v719, %v722
        %v724 = vrot.slane %v723, 4
        %v726 = vshll.u32 %v447, 16
        %v728 = vrot.slane %v726, 5
        %v729 = vsel %vm451, %v724, %v728
        %v730 = vshrl.u32 %v447, 16
        %v732 = vrot.slane %v730, 4
        %v733 = vor.u32 %v732, %v728
        %v734 = vrot.slane %v733, 4
        %v736 = vshll.u32 %v448, 16
        %v738 = vrot.slane %v736, 5
        %v739 = vsel %vm451, %v734, %v738
        %764 = vst [vmem:[#allocation3 + $0x4] sm:$0xf] %v465
        %765 = vst [vmem:[#allocation3 + $0x10] sm:$0xf] %v475
        %766 = vst [vmem:[#allocation3 + $0x1c] sm:$0xf] %v489
        %767 = vst [vmem:[#allocation3 + $0x28] sm:$0xf] %v499
        %768 = vst [vmem:[#allocation3 + $0x34] sm:$0xf] %v513
        %769 = vst [vmem:[#allocation3 + $0x40] sm:$0xf] %v523
        %770 = vst [vmem:[#allocation3 + $0x4c] sm:$0xf] %v537
        %771 = vst [vmem:[#allocation3 + $0x58] sm:$0xf] %v547
        %772 = vst [vmem:[#allocation3 + $0x64] sm:$0xf] %v561
        %773 = vst [vmem:[#allocation3 + $0x70] sm:$0xf] %v571
        %774 = vst [vmem:[#allocation3 + $0x7c] sm:$0xf] %v585
        %775 = vst [vmem:[#allocation3 + $0x88] sm:$0xf] %v595
        %776 = vst [vmem:[#allocation3 + $0x94] sm:$0xf] %v609
        %777 = vst [vmem:[#allocation3 + $0xa0] sm:$0xf] %v619
        %778 = vst [vmem:[#allocation3 + $0xac] sm:$0xf] %v633
        %779 = vst [vmem:[#allocation3 + $0xb8] sm:$0xf] %v643
        %780 = vst [vmem:[#allocation3 + $0xc4] sm:$0xf] %v657
        %781 = vst [vmem:[#allocation3 + $0xd0] sm:$0xf] %v667
        %782 = vst [vmem:[#allocation3 + $0xdc] sm:$0xf] %v681
        %783 = vst [vmem:[#allocation3 + $0xe8] sm:$0xf] %v691
        %784 = vst [vmem:[#allocation3 + $0xf4] sm:$0xf] %v705
        %785 = vst [vmem:[#allocation3 + $0x100] sm:$0xf] %v715
        %786 = vst [vmem:[#allocation3 + $0x10c] sm:$0xf] %v729
        %787 = vst [vmem:[#allocation3 + $0x118] sm:$0xf] %v739
        %v788 = vld [vmem:[%s364] sm:$0xe]
        %v789 = vld [vmem:[%s364 + $0x4] sm:$0xf]
        %v790 = vld [vmem:[%s364 + $0x8] sm:$0x1]
        %v791 = vld [vmem:[%s364 + $0x10] sm:$0xe]
        %v792 = vld [vmem:[%s364 + $0x14] sm:$0xf]
        %v793 = vld [vmem:[%s364 + $0x18] sm:$0x1]
        %v794 = vld [vmem:[%s364 + $0x20] sm:$0xe]
        %v795 = vld [vmem:[%s364 + $0x24] sm:$0xf]
        %v796 = vld [vmem:[%s364 + $0x28] sm:$0x1]
        %v797 = vld [vmem:[%s364 + $0x30] sm:$0xe]
        %v798 = vld [vmem:[%s364 + $0x34] sm:$0xf]
        %v799 = vld [vmem:[%s364 + $0x38] sm:$0x1]
        %v800 = vld [vmem:[%s364 + $0x40] sm:$0xe]
        %v801 = vld [vmem:[%s364 + $0x44] sm:$0xf]
        %v802 = vld [vmem:[%s364 + $0x48] sm:$0x1]
        %v803 = vld [vmem:[%s364 + $0x50] sm:$0xe]
        %v804 = vld [vmem:[%s364 + $0x54] sm:$0xf]
        %v805 = vld [vmem:[%s364 + $0x58] sm:$0x1]
        %v806 = vld [vmem:[%s364 + $0x60] sm:$0xe]
        %v807 = vld [vmem:[%s364 + $0x64] sm:$0xf]
        %v808 = vld [vmem:[%s364 + $0x68] sm:$0x1]
        %v809 = vld [vmem:[%s364 + $0x70] sm:$0xe]
        %v810 = vld [vmem:[%s364 + $0x74] sm:$0xf]
        %v811 = vld [vmem:[%s364 + $0x78] sm:$0x1]
        %v812 = vld [vmem:[%s364 + $0x80] sm:$0xe]
        %v813 = vld [vmem:[%s364 + $0x84] sm:$0xf]
        %v814 = vld [vmem:[%s364 + $0x88] sm:$0x1]
        %v815 = vld [vmem:[%s364 + $0x90] sm:$0xe]
        %v816 = vld [vmem:[%s364 + $0x94] sm:$0xf]
        %v817 = vld [vmem:[%s364 + $0x98] sm:$0x1]
        %v818 = vld [vmem:[%s364 + $0xa0] sm:$0xe]
        %v819 = vld [vmem:[%s364 + $0xa4] sm:$0xf]
        %v820 = vld [vmem:[%s364 + $0xa8] sm:$0x1]
        %v821 = vld [vmem:[%s364 + $0xb0] sm:$0xe]
        %v822 = vld [vmem:[%s364 + $0xb4] sm:$0xf]
        %v823 = vld [vmem:[%s364 + $0xb8] sm:$0x1]
        %vm860 = vcmask 1042432
        %vm861 = vcmask 1046532
        %vm862 = vmor %vm860, %vm861
        %v863 = vrot.slane %v788, 5
        %v864 = vrot.slane %v863, 4
        %v865 = vrot.slane %v789, 5
        %v866 = vsel %vm862, %v864, %v865
        %v867 = vrot.slane %v865, 4
        %v868 = vrot.slane %v790, 5
        %v869 = vsel %vm862, %v867, %v868
        %v870 = vrot.slane %v791, 5
        %v871 = vrot.slane %v870, 4
        %v872 = vrot.slane %v792, 5
        %v873 = vsel %vm862, %v871, %v872
        %v874 = vrot.slane %v872, 4
        %v875 = vrot.slane %v793, 5
        %v876 = vsel %vm862, %v874, %v875
        %v877 = vrot.slane %v794, 5
        %v878 = vrot.slane %v877, 4
        %v879 = vrot.slane %v795, 5
        %v880 = vsel %vm862, %v878, %v879
        %v881 = vrot.slane %v879, 4
        %v882 = vrot.slane %v796, 5
        %v883 = vsel %vm862, %v881, %v882
        %v884 = vrot.slane %v797, 5
        %v885 = vrot.slane %v884, 4
        %v886 = vrot.slane %v798, 5
        %v887 = vsel %vm862, %v885, %v886
        %v888 = vrot.slane %v886, 4
        %v889 = vrot.slane %v799, 5
        %v890 = vsel %vm862, %v888, %v889
        %v891 = vrot.slane %v800, 5
        %v892 = vrot.slane %v891, 4
        %v893 = vrot.slane %v801, 5
        %v894 = vsel %vm862, %v892, %v893
        %v895 = vrot.slane %v893, 4
        %v896 = vrot.slane %v802, 5
        %v897 = vsel %vm862, %v895, %v896
        %v898 = vrot.slane %v803, 5
        %v899 = vrot.slane %v898, 4
        %v900 = vrot.slane %v804, 5
        %v901 = vsel %vm862, %v899, %v900
        %v902 = vrot.slane %v900, 4
        %v903 = vrot.slane %v805, 5
        %v904 = vsel %vm862, %v902, %v903
        %v905 = vrot.slane %v806, 5
        %v906 = vrot.slane %v905, 4
        %v907 = vrot.slane %v807, 5
        %v908 = vsel %vm862, %v906, %v907
        %v909 = vrot.slane %v907, 4
        %v910 = vrot.slane %v808, 5
        %v911 = vsel %vm862, %v909, %v910
        %v912 = vrot.slane %v809, 5
        %v913 = vrot.slane %v912, 4
        %v914 = vrot.slane %v810, 5
        %v915 = vsel %vm862, %v913, %v914
        %v916 = vrot.slane %v914, 4
        %v917 = vrot.slane %v811, 5
        %v918 = vsel %vm862, %v916, %v917
        %v919 = vrot.slane %v812, 5
        %v920 = vrot.slane %v919, 4
        %v921 = vrot.slane %v813, 5
        %v922 = vsel %vm862, %v920, %v921
        %v923 = vrot.slane %v921, 4
        %v924 = vrot.slane %v814, 5
        %v925 = vsel %vm862, %v923, %v924
        %v926 = vrot.slane %v815, 5
        %v927 = vrot.slane %v926, 4
        %v928 = vrot.slane %v816, 5
        %v929 = vsel %vm862, %v927, %v928
        %v930 = vrot.slane %v928, 4
        %v931 = vrot.slane %v817, 5
        %v932 = vsel %vm862, %v930, %v931
        %v933 = vrot.slane %v818, 5
        %v934 = vrot.slane %v933, 4
        %v935 = vrot.slane %v819, 5
        %v936 = vsel %vm862, %v934, %v935
        %v937 = vrot.slane %v935, 4
        %v938 = vrot.slane %v820, 5
        %v939 = vsel %vm862, %v937, %v938
        %v940 = vrot.slane %v821, 5
        %v941 = vrot.slane %v940, 4
        %v942 = vrot.slane %v822, 5
        %v943 = vsel %vm862, %v941, %v942
        %v944 = vrot.slane %v942, 4
        %v945 = vrot.slane %v823, 5
        %v946 = vsel %vm862, %v944, %v945
        %971 = vst [vmem:[#allocation3 + $0x8] sm:$0xf] %v866
        %972 = vst [vmem:[#allocation3 + $0x14] sm:$0xf] %v869
        %973 = vst [vmem:[#allocation3 + $0x20] sm:$0xf] %v873
        %974 = vst [vmem:[#allocation3 + $0x2c] sm:$0xf] %v876
        %975 = vst [vmem:[#allocation3 + $0x38] sm:$0xf] %v880
        %976 = vst [vmem:[#allocation3 + $0x44] sm:$0xf] %v883
        %977 = vst [vmem:[#allocation3 + $0x50] sm:$0xf] %v887
        %978 = vst [vmem:[#allocation3 + $0x5c] sm:$0xf] %v890
        %979 = vst [vmem:[#allocation3 + $0x68] sm:$0xf] %v894
        %980 = vst [vmem:[#allocation3 + $0x74] sm:$0xf] %v897
        %981 = vst [vmem:[#allocation3 + $0x80] sm:$0xf] %v901
        %982 = vst [vmem:[#allocation3 + $0x8c] sm:$0xf] %v904
        %983 = vst [vmem:[#allocation3 + $0x98] sm:$0xf] %v908
        %984 = vst [vmem:[#allocation3 + $0xa4] sm:$0xf] %v911
        %985 = vst [vmem:[#allocation3 + $0xb0] sm:$0xf] %v915
        %986 = vst [vmem:[#allocation3 + $0xbc] sm:$0xf] %v918
        %987 = vst [vmem:[#allocation3 + $0xc8] sm:$0xf] %v922
        %988 = vst [vmem:[#allocation3 + $0xd4] sm:$0xf] %v925
        %989 = vst [vmem:[#allocation3 + $0xe0] sm:$0xf] %v929
        %990 = vst [vmem:[#allocation3 + $0xec] sm:$0xf] %v932
        %991 = vst [vmem:[#allocation3 + $0xf8] sm:$0xf] %v936
        %992 = vst [vmem:[#allocation3 + $0x104] sm:$0xf] %v939
        %993 = vst [vmem:[#allocation3 + $0x110] sm:$0xf] %v943
        %994 = vst [vmem:[#allocation3 + $0x11c] sm:$0xf] %v946
        %v995 = vld [vmem:[#allocation3] sm:$0xff]
        %v996 = vld [vmem:[#allocation3 + $0x8] sm:$0xf]
        %v997 = vld [vmem:[#allocation3 + $0xc] sm:$0xff]
        %v998 = vld [vmem:[#allocation3 + $0x14] sm:$0xf]
        %v999 = vld [vmem:[#allocation3 + $0x18] sm:$0xff]
        %v1000 = vld [vmem:[#allocation3 + $0x20] sm:$0xf]
        %v1001 = vld [vmem:[#allocation3 + $0x24] sm:$0xff]
        %v1002 = vld [vmem:[#allocation3 + $0x2c] sm:$0xf]
        %v1003 = vld [vmem:[#allocation3 + $0x30] sm:$0xff]
        %v1004 = vld [vmem:[#allocation3 + $0x38] sm:$0xf]
        %v1005 = vld [vmem:[#allocation3 + $0x3c] sm:$0xff]
        %v1006 = vld [vmem:[#allocation3 + $0x44] sm:$0xf]
        %v1007 = vld [vmem:[#allocation3 + $0x48] sm:$0xff]
        %v1008 = vld [vmem:[#allocation3 + $0x50] sm:$0xf]
        %v1009 = vld [vmem:[#allocation3 + $0x54] sm:$0xff]
        %v1010 = vld [vmem:[#allocation3 + $0x5c] sm:$0xf]
        %v1011 = vld [vmem:[#allocation3 + $0x60] sm:$0xff]
        %v1012 = vld [vmem:[#allocation3 + $0x68] sm:$0xf]
        %v1013 = vld [vmem:[#allocation3 + $0x6c] sm:$0xff]
        %v1014 = vld [vmem:[#allocation3 + $0x74] sm:$0xf]
        %v1015 = vld [vmem:[#allocation3 + $0x78] sm:$0xff]
        %v1016 = vld [vmem:[#allocation3 + $0x80] sm:$0xf]
        %v1017 = vld [vmem:[#allocation3 + $0x84] sm:$0xff]
        %v1018 = vld [vmem:[#allocation3 + $0x8c] sm:$0xf]
        %v1019 = vld [vmem:[#allocation3 + $0x90] sm:$0xff]
        %v1020 = vld [vmem:[#allocation3 + $0x98] sm:$0xf]
        %v1021 = vld [vmem:[#allocation3 + $0x9c] sm:$0xff]
        %v1022 = vld [vmem:[#allocation3 + $0xa4] sm:$0xf]
        %v1023 = vld [vmem:[#allocation3 + $0xa8] sm:$0xff]
        %v1024 = vld [vmem:[#allocation3 + $0xb0] sm:$0xf]
        %v1025 = vld [vmem:[#allocation3 + $0xb4] sm:$0xff]
        %v1026 = vld [vmem:[#allocation3 + $0xbc] sm:$0xf]
        %v1027 = vld [vmem:[#allocation3 + $0xc0] sm:$0xff]
        %v1028 = vld [vmem:[#allocation3 + $0xc8] sm:$0xf]
        %v1029 = vld [vmem:[#allocation3 + $0xcc] sm:$0xff]
        %v1030 = vld [vmem:[#allocation3 + $0xd4] sm:$0xf]
        %v1031 = vld [vmem:[#allocation3 + $0xd8] sm:$0xff]
        %v1032 = vld [vmem:[#allocation3 + $0xe0] sm:$0xf]
        %v1033 = vld [vmem:[#allocation3 + $0xe4] sm:$0xff]
        %v1034 = vld [vmem:[#allocation3 + $0xec] sm:$0xf]
        %v1035 = vld [vmem:[#allocation9] sm:$0xf]
        %v1036 = vld [vmem:[#allocation9 + $0x4] sm:$0xf]
        %v1037 = vld [vmem:[#allocation9 + $0x8] sm:$0xf]
        %v1038 = vld [vmem:[#allocation9 + $0xc] sm:$0xf]
        %v1039 = vld [vmem:[#allocation9 + $0x10] sm:$0xf]
        %v1040 = vld [vmem:[#allocation9 + $0x14] sm:$0xf]
        %v1041 = vld [vmem:[#allocation9 + $0x18] sm:$0xf]
        %v1042 = vld [vmem:[#allocation9 + $0x1c] sm:$0xf]
        %v1043 = vld [vmem:[#allocation9 + $0x20] sm:$0xf]
        %v1044 = vld [vmem:[#allocation9 + $0x24] sm:$0xf]
        %v1045 = vld [vmem:[#allocation9 + $0x28] sm:$0xf]
        %v1046 = vld [vmem:[#allocation9 + $0x2c] sm:$0xf]
        %v1047 = vld [vmem:[#allocation9 + $0x30] sm:$0xf]
        %v1048 = vld [vmem:[#allocation9 + $0x34] sm:$0xf]
        %v1049 = vld [vmem:[#allocation9 + $0x38] sm:$0xf]
        %v1050 = vld [vmem:[#allocation9 + $0x3c] sm:$0xf]
        %v1051 = vld [vmem:[#allocation9 + $0x40] sm:$0xf]
        %v1052 = vld [vmem:[#allocation9 + $0x44] sm:$0xf]
        %v1053 = vld [vmem:[#allocation9 + $0x48] sm:$0xf]
        %v1054 = vld [vmem:[#allocation9 + $0x4c] sm:$0xf]
        %v1055 = vld [vmem:[#allocation9 + $0x50] sm:$0xf]
        %v1056 = vld [vmem:[#allocation9 + $0x54] sm:$0xf]
        %v1057 = vld [vmem:[#allocation9 + $0x58] sm:$0xf]
        %v1058 = vld [vmem:[#allocation9 + $0x5c] sm:$0xf]
        %v1059 = vld [vmem:[#allocation9 + $0x60] sm:$0xf]
        %v1060 = vld [vmem:[#allocation9 + $0x64] sm:$0xf]
        %v1061 = vld [vmem:[#allocation9 + $0x68] sm:$0xf]
        %v1062 = vld [vmem:[#allocation9 + $0x6c] sm:$0xf]
        %v1063 = vld [vmem:[#allocation9 + $0x70] sm:$0xf]
        %v1064 = vld [vmem:[#allocation9 + $0x74] sm:$0xf]
        %v1065 = vld [vmem:[#allocation9 + $0x78] sm:$0xf]
        %v1066 = vld [vmem:[#allocation9 + $0x7c] sm:$0xf]
        %v1067 = vld [vmem:[#allocation9 + $0x80] sm:$0xf]
        %v1068 = vld [vmem:[#allocation9 + $0x84] sm:$0xf]
        %v1069 = vld [vmem:[#allocation9 + $0x88] sm:$0xf]
        %v1070 = vld [vmem:[#allocation9 + $0x8c] sm:$0xf]
        %v1071 = vld [vmem:[#allocation9 + $0x90] sm:$0xf]
        %v1072 = vld [vmem:[#allocation9 + $0x94] sm:$0xf]
        %v1073 = vld [vmem:[#allocation9 + $0x98] sm:$0xf]
        %v1074 = vld [vmem:[#allocation9 + $0x9c] sm:$0xf]
        %v1075 = vld [vmem:[#allocation9 + $0xa0] sm:$0xf]
        %v1076 = vld [vmem:[#allocation9 + $0xa4] sm:$0xf]
        %v1077 = vld [vmem:[#allocation9 + $0xa8] sm:$0xf]
        %v1078 = vld [vmem:[#allocation9 + $0xac] sm:$0xf]
        %v1079 = vld [vmem:[#allocation9 + $0xb0] sm:$0xf]
        %v1080 = vld [vmem:[#allocation9 + $0xb4] sm:$0xf]
        %v1081 = vld [vmem:[#allocation9 + $0xb8] sm:$0xf]
        %v1082 = vld [vmem:[#allocation9 + $0xbc] sm:$0xf]
        %s1083 = scalar_lea.vmem [#allocation3], 24
        %v1084 = vld [vmem:[%s1083] sm:$0xff]
        %v1085 = vld [vmem:[%s1083 + $0x8] sm:$0xf]
        %v1086 = vld [vmem:[%s1083 + $0xc] sm:$0xff]
        %v1087 = vld [vmem:[%s1083 + $0x14] sm:$0xf]
        %v1088 = vld [vmem:[%s1083 + $0x18] sm:$0xff]
        %v1089 = vld [vmem:[%s1083 + $0x20] sm:$0xf]
        %v1090 = vld [vmem:[%s1083 + $0x24] sm:$0xff]
        %v1091 = vld [vmem:[%s1083 + $0x2c] sm:$0xf]
        %v1092 = vld [vmem:[%s1083 + $0x30] sm:$0xff]
        %v1093 = vld [vmem:[%s1083 + $0x38] sm:$0xf]
        %v1094 = vld [vmem:[%s1083 + $0x3c] sm:$0xff]
        %v1095 = vld [vmem:[%s1083 + $0x44] sm:$0xf]
        %v1096 = vld [vmem:[%s1083 + $0x48] sm:$0xff]
        %v1097 = vld [vmem:[%s1083 + $0x50] sm:$0xf]
        %v1098 = vld [vmem:[%s1083 + $0x54] sm:$0xff]
        %v1099 = vld [vmem:[%s1083 + $0x5c] sm:$0xf]
        %v1100 = vld [vmem:[%s1083 + $0x60] sm:$0xff]
        %v1101 = vld [vmem:[%s1083 + $0x68] sm:$0xf]
        %v1102 = vld [vmem:[%s1083 + $0x6c] sm:$0xff]
        %v1103 = vld [vmem:[%s1083 + $0x74] sm:$0xf]
        %v1104 = vld [vmem:[%s1083 + $0x78] sm:$0xff]
        %v1105 = vld [vmem:[%s1083 + $0x80] sm:$0xf]
        %v1106 = vld [vmem:[%s1083 + $0x84] sm:$0xff]
        %v1107 = vld [vmem:[%s1083 + $0x8c] sm:$0xf]
        %v1108 = vld [vmem:[%s1083 + $0x90] sm:$0xff]
        %v1109 = vld [vmem:[%s1083 + $0x98] sm:$0xf]
        %v1110 = vld [vmem:[%s1083 + $0x9c] sm:$0xff]
        %v1111 = vld [vmem:[%s1083 + $0xa4] sm:$0xf]
        %v1112 = vld [vmem:[%s1083 + $0xa8] sm:$0xff]
        %v1113 = vld [vmem:[%s1083 + $0xb0] sm:$0xf]
        %v1114 = vld [vmem:[%s1083 + $0xb4] sm:$0xff]
        %v1115 = vld [vmem:[%s1083 + $0xbc] sm:$0xf]
        %v1116 = vld [vmem:[%s1083 + $0xc0] sm:$0xff]
        %v1117 = vld [vmem:[%s1083 + $0xc8] sm:$0xf]
        %v1118 = vld [vmem:[%s1083 + $0xcc] sm:$0xff]
        %v1119 = vld [vmem:[%s1083 + $0xd4] sm:$0xf]
        %v1120 = vld [vmem:[%s1083 + $0xd8] sm:$0xff]
        %v1121 = vld [vmem:[%s1083 + $0xe0] sm:$0xf]
        %v1122 = vld [vmem:[%s1083 + $0xe4] sm:$0xff]
        %v1123 = vld [vmem:[%s1083 + $0xec] sm:$0xf]
        %v1124 = vld [vmem:[#allocation9 + $0xc0] sm:$0xf]
        %v1125 = vld [vmem:[#allocation9 + $0xc4] sm:$0xf]
        %v1126 = vld [vmem:[#allocation9 + $0xc8] sm:$0xf]
        %v1127 = vld [vmem:[#allocation9 + $0xcc] sm:$0xf]
        %v1128 = vld [vmem:[#allocation9 + $0xd0] sm:$0xf]
        %v1129 = vld [vmem:[#allocation9 + $0xd4] sm:$0xf]
        %v1130 = vld [vmem:[#allocation9 + $0xd8] sm:$0xf]
        %v1131 = vld [vmem:[#allocation9 + $0xdc] sm:$0xf]
        %v1132 = vld [vmem:[#allocation9 + $0xe0] sm:$0xf]
        %v1133 = vld [vmem:[#allocation9 + $0xe4] sm:$0xf]
        %v1134 = vld [vmem:[#allocation9 + $0xe8] sm:$0xf]
        %v1135 = vld [vmem:[#allocation9 + $0xec] sm:$0xf]
        %v1136 = vld [vmem:[#allocation9 + $0xf0] sm:$0xf]
        %v1137 = vld [vmem:[#allocation9 + $0xf4] sm:$0xf]
        %v1138 = vld [vmem:[#allocation9 + $0xf8] sm:$0xf]
        %v1139 = vld [vmem:[#allocation9 + $0xfc] sm:$0xf]
        %v1140 = vld [vmem:[#allocation9 + $0x100] sm:$0xf]
        %v1141 = vld [vmem:[#allocation9 + $0x104] sm:$0xf]
        %v1142 = vld [vmem:[#allocation9 + $0x108] sm:$0xf]
        %v1143 = vld [vmem:[#allocation9 + $0x10c] sm:$0xf]
        %v1144 = vld [vmem:[#allocation9 + $0x110] sm:$0xf]
        %v1145 = vld [vmem:[#allocation9 + $0x114] sm:$0xf]
        %v1146 = vld [vmem:[#allocation9 + $0x118] sm:$0xf]
        %v1147 = vld [vmem:[#allocation9 + $0x11c] sm:$0xf]
        %v1148 = vld [vmem:[#allocation9 + $0x120] sm:$0xf]
        %v1149 = vld [vmem:[#allocation9 + $0x124] sm:$0xf]
        %v1150 = vld [vmem:[#allocation9 + $0x128] sm:$0xf]
        %v1151 = vld [vmem:[#allocation9 + $0x12c] sm:$0xf]
        %v1152 = vld [vmem:[#allocation9 + $0x130] sm:$0xf]
        %v1153 = vld [vmem:[#allocation9 + $0x134] sm:$0xf]
        %v1154 = vld [vmem:[#allocation9 + $0x138] sm:$0xf]
        %v1155 = vld [vmem:[#allocation9 + $0x13c] sm:$0xf]
        %v1156 = vld [vmem:[#allocation9 + $0x140] sm:$0xf]
        %v1157 = vld [vmem:[#allocation9 + $0x144] sm:$0xf]
        %v1158 = vld [vmem:[#allocation9 + $0x148] sm:$0xf]
        %v1159 = vld [vmem:[#allocation9 + $0x14c] sm:$0xf]
        %v1160 = vld [vmem:[#allocation9 + $0x150] sm:$0xf]
        %v1161 = vld [vmem:[#allocation9 + $0x154] sm:$0xf]
        %v1162 = vld [vmem:[#allocation9 + $0x158] sm:$0xf]
        %v1163 = vld [vmem:[#allocation9 + $0x15c] sm:$0xf]
        %v1164 = vld [vmem:[#allocation9 + $0x160] sm:$0xf]
        %v1165 = vld [vmem:[#allocation9 + $0x164] sm:$0xf]
        %v1166 = vld [vmem:[#allocation9 + $0x168] sm:$0xf]
        %v1167 = vld [vmem:[#allocation9 + $0x16c] sm:$0xf]
        %v1168 = vld [vmem:[#allocation9 + $0x170] sm:$0xf]
        %v1169 = vld [vmem:[#allocation9 + $0x174] sm:$0xf]
        %v1170 = vld [vmem:[#allocation9 + $0x178] sm:$0xf]
        %v1171 = vld [vmem:[#allocation9 + $0x17c] sm:$0xf]
        %v1212 = vunpack.c.l.b16 %v1084
        %v1213 = vunpack.c.h.b16 %v1084
        %v1214 = vunpack.c.l.b16 %v1085
        %v1215 = vunpack.c.l.b16 %v1086
        %v1216 = vunpack.c.h.b16 %v1086
        %v1217 = vunpack.c.l.b16 %v1087
        %v1218 = vunpack.c.l.b16 %v1088
        %v1219 = vunpack.c.h.b16 %v1088
        %v1220 = vunpack.c.l.b16 %v1089
        %v1221 = vunpack.c.l.b16 %v1090
        %v1222 = vunpack.c.h.b16 %v1090
        %v1223 = vunpack.c.l.b16 %v1091
        %v1224 = vunpack.c.l.b16 %v1092
        %v1225 = vunpack.c.h.b16 %v1092
        %v1226 = vunpack.c.l.b16 %v1093
        %v1227 = vunpack.c.l.b16 %v1094
        %v1228 = vunpack.c.h.b16 %v1094
        %v1229 = vunpack.c.l.b16 %v1095
        %v1230 = vunpack.c.l.b16 %v1096
        %v1231 = vunpack.c.h.b16 %v1096
        %v1232 = vunpack.c.l.b16 %v1097
        %v1233 = vunpack.c.l.b16 %v1098
        %v1234 = vunpack.c.h.b16 %v1098
        %v1235 = vunpack.c.l.b16 %v1099
        %v1236 = vunpack.c.l.b16 %v1100
        %v1237 = vunpack.c.h.b16 %v1100
        %v1238 = vunpack.c.l.b16 %v1101
        %v1239 = vunpack.c.l.b16 %v1102
        %v1240 = vunpack.c.h.b16 %v1102
        %v1241 = vunpack.c.l.b16 %v1103
        %v1242 = vunpack.c.l.b16 %v1104
        %v1243 = vunpack.c.h.b16 %v1104
        %v1244 = vunpack.c.l.b16 %v1105
        %v1245 = vunpack.c.l.b16 %v1106
        %v1246 = vunpack.c.h.b16 %v1106
        %v1247 = vunpack.c.l.b16 %v1107
        %v1248 = vunpack.c.l.b16 %v1108
        %v1249 = vunpack.c.h.b16 %v1108
        %v1250 = vunpack.c.l.b16 %v1109
        %v1251 = vunpack.c.l.b16 %v1110
        %v1252 = vunpack.c.h.b16 %v1110
        %v1253 = vunpack.c.l.b16 %v1111
        %v1254 = vunpack.c.l.b16 %v1112
        %v1255 = vunpack.c.h.b16 %v1112
        %v1256 = vunpack.c.l.b16 %v1113
        %v1257 = vunpack.c.l.b16 %v1114
        %v1258 = vunpack.c.h.b16 %v1114
        %v1259 = vunpack.c.l.b16 %v1115
        %v1260 = vunpack.c.l.b16 %v1116
        %v1261 = vunpack.c.h.b16 %v1116
        %v1262 = vunpack.c.l.b16 %v1117
        %v1263 = vunpack.c.l.b16 %v1118
        %v1264 = vunpack.c.h.b16 %v1118
        %v1265 = vunpack.c.l.b16 %v1119
        %v1266 = vunpack.c.l.b16 %v1120
        %v1267 = vunpack.c.h.b16 %v1120
        %v1268 = vunpack.c.l.b16 %v1121
        %v1269 = vunpack.c.l.b16 %v1122
        %v1270 = vunpack.c.h.b16 %v1122
        %v1271 = vunpack.c.l.b16 %v1123
        %v1272 = vpack.c.b16 %v1215, %v1212
        %v1273 = vpack.c.b16 %v1216, %v1213
        %v1274 = vpack.c.b16 %v1217, %v1214
        %v1275 = vpack.c.b16 %v1221, %v1218
        %v1276 = vpack.c.b16 %v1222, %v1219
        %v1277 = vpack.c.b16 %v1223, %v1220
        %v1278 = vpack.c.b16 %v1227, %v1224
        %v1279 = vpack.c.b16 %v1228, %v1225
        %v1280 = vpack.c.b16 %v1229, %v1226
        %v1281 = vpack.c.b16 %v1233, %v1230
        %v1282 = vpack.c.b16 %v1234, %v1231
        %v1283 = vpack.c.b16 %v1235, %v1232
        %v1284 = vpack.c.b16 %v1239, %v1236
        %v1285 = vpack.c.b16 %v1240, %v1237
        %v1286 = vpack.c.b16 %v1241, %v1238
        %v1287 = vpack.c.b16 %v1245, %v1242
        %v1288 = vpack.c.b16 %v1246, %v1243
        %v1289 = vpack.c.b16 %v1247, %v1244
        %v1290 = vpack.c.b16 %v1251, %v1248
        %v1291 = vpack.c.b16 %v1252, %v1249
        %v1292 = vpack.c.b16 %v1253, %v1250
        %v1293 = vpack.c.b16 %v1257, %v1254
        %v1294 = vpack.c.b16 %v1258, %v1255
        %v1295 = vpack.c.b16 %v1259, %v1256
        %v1296 = vpack.c.b16 %v1263, %v1260
        %v1297 = vpack.c.b16 %v1264, %v1261
        %v1298 = vpack.c.b16 %v1265, %v1262
        %v1299 = vpack.c.b16 %v1269, %v1266
        %v1300 = vpack.c.b16 %v1270, %v1267
        %v1301 = vpack.c.b16 %v1271, %v1268
        %v1380 = vunpack.c.l.b16 %v1124
        %v1381 = vunpack.c.l.b16 %v1125
        %v1382 = vunpack.c.l.b16 %v1126
        %v1383 = vunpack.c.l.b16 %v1127
        %v1384 = vunpack.c.l.b16 %v1128
        %v1385 = vunpack.c.l.b16 %v1129
        %v1386 = vunpack.c.l.b16 %v1130
        %v1387 = vunpack.c.l.b16 %v1131
        %v1388 = vunpack.c.l.b16 %v1132
        %v1389 = vunpack.c.l.b16 %v1133
        %v1390 = vunpack.c.l.b16 %v1134
        %v1391 = vunpack.c.l.b16 %v1135
        %v1392 = vunpack.c.l.b16 %v1136
        %v1393 = vunpack.c.l.b16 %v1137
        %v1394 = vunpack.c.l.b16 %v1138
        %v1395 = vunpack.c.l.b16 %v1139
        %v1396 = vunpack.c.l.b16 %v1140
        %v1397 = vunpack.c.l.b16 %v1141
        %v1398 = vunpack.c.l.b16 %v1142
        %v1399 = vunpack.c.l.b16 %v1143
        %v1400 = vunpack.c.l.b16 %v1144
        %v1401 = vunpack.c.l.b16 %v1145
        %v1402 = vunpack.c.l.b16 %v1146
        %v1403 = vunpack.c.l.b16 %v1147
        %v1404 = vunpack.c.l.b16 %v1148
        %v1405 = vunpack.c.l.b16 %v1149
        %v1406 = vunpack.c.l.b16 %v1150
        %v1407 = vunpack.c.l.b16 %v1151
        %v1408 = vunpack.c.l.b16 %v1152
        %v1409 = vunpack.c.l.b16 %v1153
        %v1410 = vunpack.c.l.b16 %v1154
        %v1411 = vunpack.c.l.b16 %v1155
        %v1412 = vunpack.c.l.b16 %v1156
        %v1413 = vunpack.c.l.b16 %v1157
        %v1414 = vunpack.c.l.b16 %v1158
        %v1415 = vunpack.c.l.b16 %v1159
        %v1416 = vunpack.c.l.b16 %v1160
        %v1417 = vunpack.c.l.b16 %v1161
        %v1418 = vunpack.c.l.b16 %v1162
        %v1419 = vunpack.c.l.b16 %v1163
        %v1420 = vunpack.c.l.b16 %v1164
        %v1421 = vunpack.c.l.b16 %v1165
        %v1422 = vunpack.c.l.b16 %v1166
        %v1423 = vunpack.c.l.b16 %v1167
        %v1424 = vunpack.c.l.b16 %v1168
        %v1425 = vunpack.c.l.b16 %v1169
        %v1426 = vunpack.c.l.b16 %v1170
        %v1427 = vunpack.c.l.b16 %v1171
        %v1428 = vpack.c.b16 %v1381, %v1380
        %v1429 = vpack.c.b16 %v1383, %v1382
        %v1430 = vpack.c.b16 %v1385, %v1384
        %v1431 = vpack.c.b16 %v1387, %v1386
        %v1432 = vpack.c.b16 %v1389, %v1388
        %v1433 = vpack.c.b16 %v1391, %v1390
        %v1434 = vpack.c.b16 %v1393, %v1392
        %v1435 = vpack.c.b16 %v1395, %v1394
        %v1436 = vpack.c.b16 %v1397, %v1396
        %v1437 = vpack.c.b16 %v1399, %v1398
        %v1438 = vpack.c.b16 %v1401, %v1400
        %v1439 = vpack.c.b16 %v1403, %v1402
        %v1440 = vpack.c.b16 %v1405, %v1404
        %v1441 = vpack.c.b16 %v1407, %v1406
        %v1442 = vpack.c.b16 %v1409, %v1408
        %v1443 = vpack.c.b16 %v1411, %v1410
        %v1444 = vpack.c.b16 %v1413, %v1412
        %v1445 = vpack.c.b16 %v1415, %v1414
        %v1446 = vpack.c.b16 %v1417, %v1416
        %v1447 = vpack.c.b16 %v1419, %v1418
        %v1448 = vpack.c.b16 %v1421, %v1420
        %v1449 = vpack.c.b16 %v1423, %v1422
        %v1450 = vpack.c.b16 %v1425, %v1424
        %v1451 = vpack.c.b16 %v1427, %v1426
        %1476 = vmatprep.subr.bf16.mxu0 0
        %1477 = vmatpush1.bf16.msra.mxu0 %v1435
        %1478 = vmatprep.subr.bf16.mxu0 0
        %1479 = vmatpush1.bf16.msra.mxu0 %v1434
        %1480 = vmatprep.subr.bf16.mxu0 0
        %1481 = vmatpush1.bf16.msra.mxu0 %v1433
        %1482 = vmatprep.subr.bf16.mxu0 0
        %1483 = vmatpush1.bf16.msra.mxu0 %v1432
        %1484 = vmatprep.subr.bf16.mxu0 0
        %1485 = vmatpush1.bf16.msra.mxu0 %v1431
        %1486 = vmatprep.subr.bf16.mxu0 0
        %1487 = vmatpush1.bf16.msra.mxu0 %v1430
        %1488 = vmatprep.subr.bf16.mxu0 0
        %1489 = vmatpush1.bf16.msra.mxu0 %v1429
        %1490 = vmatprep.subr.bf16.mxu0 0
        %1491 = vmatpush1.bf16.msra.mxu0 %v1428
        %1492 = vmatprep.subr.bf16.mxu0 0
        %1493 = vmatpush2.bf16.msra.mxu0 %v1443
        %1494 = vmatprep.subr.bf16.mxu0 0
        %1495 = vmatpush2.bf16.msra.mxu0 %v1442
        %1496 = vmatprep.subr.bf16.mxu0 0
        %1497 = vmatpush2.bf16.msra.mxu0 %v1441
        %1498 = vmatprep.subr.bf16.mxu0 0
        %1499 = vmatpush2.bf16.msra.mxu0 %v1440
        %1500 = vmatprep.subr.bf16.mxu0 0
        %1501 = vmatpush2.bf16.msra.mxu0 %v1439
        %1502 = vmatprep.subr.bf16.mxu0 0
        %1503 = vmatpush2.bf16.msra.mxu0 %v1438
        %1504 = vmatprep.subr.bf16.mxu0 0
        %1505 = vmatpush2.bf16.msra.mxu0 %v1437
        %1506 = vmatprep.subr.bf16.mxu0 0
        %1507 = vmatpush2.bf16.msra.mxu0 %v1436
        %1508 = vmatprep.mubr.bf16.mxu0 %v1273
        %1509 = vmatmul.mubr.bf16.gmra.mxu0 %v1272
        %v1510 = vpop.f32.mrf.mxu0
        %v1511 = vadd.f32 0.0, %v1510
        %v1512 = vpop.f32.mrf.mxu0
        %v1513 = vpop.f32.mrf.mxu0
        %v1514 = vadd.f32 0.0, %v1513
        %v1515 = vpop.f32.mrf.mxu0
        %1516 = vmatprep.mubr.bf16.mxu0 %v1276
        %1517 = vmatmul.mubr.bf16.gmra.mxu0 %v1275
        %v1518 = vpop.f32.mrf.mxu0
        %v1519 = vadd.f32 0.0, %v1518
        %v1520 = vpop.f32.mrf.mxu0
        %v1521 = vpop.f32.mrf.mxu0
        %v1522 = vadd.f32 0.0, %v1521
        %v1523 = vpop.f32.mrf.mxu0
        %1524 = vmatprep.mubr.bf16.mxu0 %v1279
        %1525 = vmatmul.mubr.bf16.gmra.mxu0 %v1278
        %v1526 = vpop.f32.mrf.mxu0
        %v1527 = vadd.f32 0.0, %v1526
        %v1528 = vpop.f32.mrf.mxu0
        %v1529 = vpop.f32.mrf.mxu0
        %v1530 = vadd.f32 0.0, %v1529
        %v1531 = vpop.f32.mrf.mxu0
        %1532 = vmatprep.mubr.bf16.mxu0 %v1282
        %1533 = vmatmul.mubr.bf16.gmra.mxu0 %v1281
        %v1534 = vpop.f32.mrf.mxu0
        %v1535 = vadd.f32 0.0, %v1534
        %v1536 = vpop.f32.mrf.mxu0
        %v1537 = vpop.f32.mrf.mxu0
        %v1538 = vadd.f32 0.0, %v1537
        %v1539 = vpop.f32.mrf.mxu0
        %1540 = vmatprep.mubr.bf16.mxu0 %v1285
        %1541 = vmatmul.mubr.bf16.gmra.mxu0 %v1284
        %v1542 = vpop.f32.mrf.mxu0
        %v1543 = vadd.f32 0.0, %v1542
        %v1544 = vpop.f32.mrf.mxu0
        %v1545 = vpop.f32.mrf.mxu0
        %v1546 = vadd.f32 0.0, %v1545
        %v1547 = vpop.f32.mrf.mxu0
        %1548 = vmatprep.mubr.bf16.mxu0 %v1288
        %1549 = vmatmul.mubr.bf16.gmra.mxu0 %v1287
        %v1550 = vpop.f32.mrf.mxu0
        %v1551 = vadd.f32 0.0, %v1550
        %v1552 = vpop.f32.mrf.mxu0
        %v1553 = vpop.f32.mrf.mxu0
        %v1554 = vadd.f32 0.0, %v1553
        %v1555 = vpop.f32.mrf.mxu0
        %1556 = vmatprep.mubr.bf16.mxu0 %v1291
        %1557 = vmatmul.mubr.bf16.gmra.mxu0 %v1290
        %v1558 = vpop.f32.mrf.mxu0
        %v1559 = vadd.f32 0.0, %v1558
        %v1560 = vpop.f32.mrf.mxu0
        %v1561 = vpop.f32.mrf.mxu0
        %v1562 = vadd.f32 0.0, %v1561
        %v1563 = vpop.f32.mrf.mxu0
        %1564 = vmatprep.mubr.bf16.mxu0 %v1294
        %1565 = vmatmul.mubr.bf16.gmra.mxu0 %v1293
        %v1566 = vpop.f32.mrf.mxu0
        %v1567 = vadd.f32 0.0, %v1566
        %v1568 = vpop.f32.mrf.mxu0
        %v1569 = vpop.f32.mrf.mxu0
        %v1570 = vadd.f32 0.0, %v1569
        %v1571 = vpop.f32.mrf.mxu0
        %1572 = vmatprep.mubr.bf16.mxu0 %v1297
        %1573 = vmatmul.mubr.bf16.gmra.mxu0 %v1296
        %v1574 = vpop.f32.mrf.mxu0
        %v1575 = vadd.f32 0.0, %v1574
        %v1576 = vpop.f32.mrf.mxu0
        %v1577 = vpop.f32.mrf.mxu0
        %v1578 = vadd.f32 0.0, %v1577
        %v1579 = vpop.f32.mrf.mxu0
        %1580 = vmatprep.mubr.bf16.mxu0 %v1300
        %1581 = vmatmul.mubr.bf16.gmra.mxu0 %v1299
        %v1582 = vpop.f32.mrf.mxu0
        %v1583 = vadd.f32 0.0, %v1582
        %v1584 = vpop.f32.mrf.mxu0
        %v1585 = vpop.f32.mrf.mxu0
        %v1586 = vadd.f32 0.0, %v1585
        %v1587 = vpop.f32.mrf.mxu0
        %1588 = vdwg.mxu0
        %1589 = vmatprep.subr.bf16.mxu0 0
        %1590 = vmatpush1.bf16.msra.mxu0 %v1451
        %1591 = vmatprep.subr.bf16.mxu0 0
        %1592 = vmatpush1.bf16.msra.mxu0 %v1450
        %1593 = vmatprep.subr.bf16.mxu0 0
        %1594 = vmatpush1.bf16.msra.mxu0 %v1449
        %1595 = vmatprep.subr.bf16.mxu0 0
        %1596 = vmatpush1.bf16.msra.mxu0 %v1448
        %1597 = vmatprep.subr.bf16.mxu0 0
        %1598 = vmatpush1.bf16.msra.mxu0 %v1447
        %1599 = vmatprep.subr.bf16.mxu0 0
        %1600 = vmatpush1.bf16.msra.mxu0 %v1446
        %1601 = vmatprep.subr.bf16.mxu0 0
        %1602 = vmatpush1.bf16.msra.mxu0 %v1445
        %1603 = vmatprep.subr.bf16.mxu0 0
        %1604 = vmatpush1.bf16.msra.mxu0 %v1444
        %1605 = vmatprep.subr.bf16.mxu0 0
        %1606 = vmatpush2.bf16.msra.mxu0 0
        %1607 = vmatprep.subr.bf16.mxu0 0
        %1608 = vmatpush2.bf16.msra.mxu0 0
        %1609 = vmatprep.subr.bf16.mxu0 0
        %1610 = vmatpush2.bf16.msra.mxu0 0
        %1611 = vmatprep.subr.bf16.mxu0 0
        %1612 = vmatpush2.bf16.msra.mxu0 0
        %1613 = vmatprep.subr.bf16.mxu0 0
        %1614 = vmatpush2.bf16.msra.mxu0 0
        %1615 = vmatprep.subr.bf16.mxu0 0
        %1616 = vmatpush2.bf16.msra.mxu0 0
        %1617 = vmatprep.subr.bf16.mxu0 0
        %1618 = vmatpush2.bf16.msra.mxu0 0
        %1619 = vmatprep.subr.bf16.mxu0 0
        %1620 = vmatpush2.bf16.msra.mxu0 0
        %1621 = vmatprep.mubr.bf16.mxu0 0
        %1622 = vmatmul.mubr.bf16.gmra.mxu0 %v1274
        %v1623 = vpop.f32.mrf.mxu0
        %v1624 = vadd.f32 %v1511, %v1623
        %v1625 = vpop.f32.mrf.mxu0
        %v1626 = vpop.f32.mrf.mxu0
        %v1627 = vadd.f32 %v1514, %v1626
        %v1628 = vpop.f32.mrf.mxu0
        %1629 = vmatprep.mubr.bf16.mxu0 0
        %1630 = vmatmul.mubr.bf16.gmra.mxu0 %v1277
        %v1631 = vpop.f32.mrf.mxu0
        %v1632 = vadd.f32 %v1519, %v1631
        %v1633 = vpop.f32.mrf.mxu0
        %v1634 = vpop.f32.mrf.mxu0
        %v1635 = vadd.f32 %v1522, %v1634
        %v1636 = vpop.f32.mrf.mxu0
        %1637 = vmatprep.mubr.bf16.mxu0 0
        %1638 = vmatmul.mubr.bf16.gmra.mxu0 %v1280
        %v1639 = vpop.f32.mrf.mxu0
        %v1640 = vadd.f32 %v1527, %v1639
        %v1641 = vpop.f32.mrf.mxu0
        %v1642 = vpop.f32.mrf.mxu0
        %v1643 = vadd.f32 %v1530, %v1642
        %v1644 = vpop.f32.mrf.mxu0
        %1645 = vmatprep.mubr.bf16.mxu0 0
        %1646 = vmatmul.mubr.bf16.gmra.mxu0 %v1283
        %v1647 = vpop.f32.mrf.mxu0
        %v1648 = vadd.f32 %v1535, %v1647
        %v1649 = vpop.f32.mrf.mxu0
        %v1650 = vpop.f32.mrf.mxu0
        %v1651 = vadd.f32 %v1538, %v1650
        %v1652 = vpop.f32.mrf.mxu0
        %1653 = vmatprep.mubr.bf16.mxu0 0
        %1654 = vmatmul.mubr.bf16.gmra.mxu0 %v1286
        %v1655 = vpop.f32.mrf.mxu0
        %v1656 = vadd.f32 %v1543, %v1655
        %v1657 = vpop.f32.mrf.mxu0
        %v1658 = vpop.f32.mrf.mxu0
        %v1659 = vadd.f32 %v1546, %v1658
        %v1660 = vpop.f32.mrf.mxu0
        %1661 = vmatprep.mubr.bf16.mxu0 0
        %1662 = vmatmul.mubr.bf16.gmra.mxu0 %v1289
        %v1663 = vpop.f32.mrf.mxu0
        %v1664 = vadd.f32 %v1551, %v1663
        %v1665 = vpop.f32.mrf.mxu0
        %v1666 = vpop.f32.mrf.mxu0
        %v1667 = vadd.f32 %v1554, %v1666
        %v1668 = vpop.f32.mrf.mxu0
        %1669 = vmatprep.mubr.bf16.mxu0 0
        %1670 = vmatmul.mubr.bf16.gmra.mxu0 %v1292
        %v1671 = vpop.f32.mrf.mxu0
        %v1672 = vadd.f32 %v1559, %v1671
        %v1673 = vpop.f32.mrf.mxu0
        %v1674 = vpop.f32.mrf.mxu0
        %v1675 = vadd.f32 %v1562, %v1674
        %v1676 = vpop.f32.mrf.mxu0
        %1677 = vmatprep.mubr.bf16.mxu0 0
        %1678 = vmatmul.mubr.bf16.gmra.mxu0 %v1295
        %v1679 = vpop.f32.mrf.mxu0
        %v1680 = vadd.f32 %v1567, %v1679
        %v1681 = vpop.f32.mrf.mxu0
        %v1682 = vpop.f32.mrf.mxu0
        %v1683 = vadd.f32 %v1570, %v1682
        %v1684 = vpop.f32.mrf.mxu0
        %1685 = vmatprep.mubr.bf16.mxu0 0
        %1686 = vmatmul.mubr.bf16.gmra.mxu0 %v1298
        %v1687 = vpop.f32.mrf.mxu0
        %v1688 = vadd.f32 %v1575, %v1687
        %v1689 = vpop.f32.mrf.mxu0
        %v1690 = vpop.f32.mrf.mxu0
        %v1691 = vadd.f32 %v1578, %v1690
        %v1692 = vpop.f32.mrf.mxu0
        %1693 = vmatprep.mubr.bf16.mxu0 0
        %1694 = vmatmul.mubr.bf16.gmra.mxu0 %v1301
        %v1695 = vpop.f32.mrf.mxu0
        %v1696 = vadd.f32 %v1583, %v1695
        %v1697 = vpop.f32.mrf.mxu0
        %v1698 = vpop.f32.mrf.mxu0
        %v1699 = vadd.f32 %v1586, %v1698
        %v1700 = vpop.f32.mrf.mxu0
        %1701 = vdwg.mxu0
        %v1742 = vunpack.c.l.b16 %v995
        %v1743 = vunpack.c.h.b16 %v995
        %v1744 = vunpack.c.l.b16 %v996
        %v1745 = vunpack.c.l.b16 %v997
        %v1746 = vunpack.c.h.b16 %v997
        %v1747 = vunpack.c.l.b16 %v998
        %v1748 = vunpack.c.l.b16 %v999
        %v1749 = vunpack.c.h.b16 %v999
        %v1750 = vunpack.c.l.b16 %v1000
        %v1751 = vunpack.c.l.b16 %v1001
        %v1752 = vunpack.c.h.b16 %v1001
        %v1753 = vunpack.c.l.b16 %v1002
        %v1754 = vunpack.c.l.b16 %v1003
        %v1755 = vunpack.c.h.b16 %v1003
        %v1756 = vunpack.c.l.b16 %v1004
        %v1757 = vunpack.c.l.b16 %v1005
        %v1758 = vunpack.c.h.b16 %v1005
        %v1759 = vunpack.c.l.b16 %v1006
        %v1760 = vunpack.c.l.b16 %v1007
        %v1761 = vunpack.c.h.b16 %v1007
        %v1762 = vunpack.c.l.b16 %v1008
        %v1763 = vunpack.c.l.b16 %v1009
        %v1764 = vunpack.c.h.b16 %v1009
        %v1765 = vunpack.c.l.b16 %v1010
        %v1766 = vunpack.c.l.b16 %v1011
        %v1767 = vunpack.c.h.b16 %v1011
        %v1768 = vunpack.c.l.b16 %v1012
        %v1769 = vunpack.c.l.b16 %v1013
        %v1770 = vunpack.c.h.b16 %v1013
        %v1771 = vunpack.c.l.b16 %v1014
        %v1772 = vunpack.c.l.b16 %v1015
        %v1773 = vunpack.c.h.b16 %v1015
        %v1774 = vunpack.c.l.b16 %v1016
        %v1775 = vunpack.c.l.b16 %v1017
        %v1776 = vunpack.c.h.b16 %v1017
        %v1777 = vunpack.c.l.b16 %v1018
        %v1778 = vunpack.c.l.b16 %v1019
        %v1779 = vunpack.c.h.b16 %v1019
        %v1780 = vunpack.c.l.b16 %v1020
        %v1781 = vunpack.c.l.b16 %v1021
        %v1782 = vunpack.c.h.b16 %v1021
        %v1783 = vunpack.c.l.b16 %v1022
        %v1784 = vunpack.c.l.b16 %v1023
        %v1785 = vunpack.c.h.b16 %v1023
        %v1786 = vunpack.c.l.b16 %v1024
        %v1787 = vunpack.c.l.b16 %v1025
        %v1788 = vunpack.c.h.b16 %v1025
        %v1789 = vunpack.c.l.b16 %v1026
        %v1790 = vunpack.c.l.b16 %v1027
        %v1791 = vunpack.c.h.b16 %v1027
        %v1792 = vunpack.c.l.b16 %v1028
        %v1793 = vunpack.c.l.b16 %v1029
        %v1794 = vunpack.c.h.b16 %v1029
        %v1795 = vunpack.c.l.b16 %v1030
        %v1796 = vunpack.c.l.b16 %v1031
        %v1797 = vunpack.c.h.b16 %v1031
        %v1798 = vunpack.c.l.b16 %v1032
        %v1799 = vunpack.c.l.b16 %v1033
        %v1800 = vunpack.c.h.b16 %v1033
        %v1801 = vunpack.c.l.b16 %v1034
        %v1802 = vpack.c.b16 %v1745, %v1742
        %v1803 = vpack.c.b16 %v1746, %v1743
        %v1804 = vpack.c.b16 %v1747, %v1744
        %v1805 = vpack.c.b16 %v1751, %v1748
        %v1806 = vpack.c.b16 %v1752, %v1749
        %v1807 = vpack.c.b16 %v1753, %v1750
        %v1808 = vpack.c.b16 %v1757, %v1754
        %v1809 = vpack.c.b16 %v1758, %v1755
        %v1810 = vpack.c.b16 %v1759, %v1756
        %v1811 = vpack.c.b16 %v1763, %v1760
        %v1812 = vpack.c.b16 %v1764, %v1761
        %v1813 = vpack.c.b16 %v1765, %v1762
        %v1814 = vpack.c.b16 %v1769, %v1766
        %v1815 = vpack.c.b16 %v1770, %v1767
        %v1816 = vpack.c.b16 %v1771, %v1768
        %v1817 = vpack.c.b16 %v1775, %v1772
        %v1818 = vpack.c.b16 %v1776, %v1773
        %v1819 = vpack.c.b16 %v1777, %v1774
        %v1820 = vpack.c.b16 %v1781, %v1778
        %v1821 = vpack.c.b16 %v1782, %v1779
        %v1822 = vpack.c.b16 %v1783, %v1780
        %v1823 = vpack.c.b16 %v1787, %v1784
        %v1824 = vpack.c.b16 %v1788, %v1785
        %v1825 = vpack.c.b16 %v1789, %v1786
        %v1826 = vpack.c.b16 %v1793, %v1790
        %v1827 = vpack.c.b16 %v1794, %v1791
        %v1828 = vpack.c.b16 %v1795, %v1792
        %v1829 = vpack.c.b16 %v1799, %v1796
        %v1830 = vpack.c.b16 %v1800, %v1797
        %v1831 = vpack.c.b16 %v1801, %v1798
        %v1910 = vunpack.c.l.b16 %v1035
        %v1911 = vunpack.c.l.b16 %v1036
        %v1912 = vunpack.c.l.b16 %v1037
        %v1913 = vunpack.c.l.b16 %v1038
        %v1914 = vunpack.c.l.b16 %v1039
        %v1915 = vunpack.c.l.b16 %v1040
        %v1916 = vunpack.c.l.b16 %v1041
        %v1917 = vunpack.c.l.b16 %v1042
        %v1918 = vunpack.c.l.b16 %v1043
        %v1919 = vunpack.c.l.b16 %v1044
        %v1920 = vunpack.c.l.b16 %v1045
        %v1921 = vunpack.c.l.b16 %v1046
        %v1922 = vunpack.c.l.b16 %v1047
        %v1923 = vunpack.c.l.b16 %v1048
        %v1924 = vunpack.c.l.b16 %v1049
        %v1925 = vunpack.c.l.b16 %v1050
        %v1926 = vunpack.c.l.b16 %v1051
        %v1927 = vunpack.c.l.b16 %v1052
        %v1928 = vunpack.c.l.b16 %v1053
        %v1929 = vunpack.c.l.b16 %v1054
        %v1930 = vunpack.c.l.b16 %v1055
        %v1931 = vunpack.c.l.b16 %v1056
        %v1932 = vunpack.c.l.b16 %v1057
        %v1933 = vunpack.c.l.b16 %v1058
        %v1934 = vunpack.c.l.b16 %v1059
        %v1935 = vunpack.c.l.b16 %v1060
        %v1936 = vunpack.c.l.b16 %v1061
        %v1937 = vunpack.c.l.b16 %v1062
        %v1938 = vunpack.c.l.b16 %v1063
        %v1939 = vunpack.c.l.b16 %v1064
        %v1940 = vunpack.c.l.b16 %v1065
        %v1941 = vunpack.c.l.b16 %v1066
        %v1942 = vunpack.c.l.b16 %v1067
        %v1943 = vunpack.c.l.b16 %v1068
        %v1944 = vunpack.c.l.b16 %v1069
        %v1945 = vunpack.c.l.b16 %v1070
        %v1946 = vunpack.c.l.b16 %v1071
        %v1947 = vunpack.c.l.b16 %v1072
        %v1948 = vunpack.c.l.b16 %v1073
        %v1949 = vunpack.c.l.b16 %v1074
        %v1950 = vunpack.c.l.b16 %v1075
        %v1951 = vunpack.c.l.b16 %v1076
        %v1952 = vunpack.c.l.b16 %v1077
        %v1953 = vunpack.c.l.b16 %v1078
        %v1954 = vunpack.c.l.b16 %v1079
        %v1955 = vunpack.c.l.b16 %v1080
        %v1956 = vunpack.c.l.b16 %v1081
        %v1957 = vunpack.c.l.b16 %v1082
        %v1958 = vpack.c.b16 %v1911, %v1910
        %v1959 = vpack.c.b16 %v1913, %v1912
        %v1960 = vpack.c.b16 %v1915, %v1914
        %v1961 = vpack.c.b16 %v1917, %v1916
        %v1962 = vpack.c.b16 %v1919, %v1918
        %v1963 = vpack.c.b16 %v1921, %v1920
        %v1964 = vpack.c.b16 %v1923, %v1922
        %v1965 = vpack.c.b16 %v1925, %v1924
        %v1966 = vpack.c.b16 %v1927, %v1926
        %v1967 = vpack.c.b16 %v1929, %v1928
        %v1968 = vpack.c.b16 %v1931, %v1930
        %v1969 = vpack.c.b16 %v1933, %v1932
        %v1970 = vpack.c.b16 %v1935, %v1934
        %v1971 = vpack.c.b16 %v1937, %v1936
        %v1972 = vpack.c.b16 %v1939, %v1938
        %v1973 = vpack.c.b16 %v1941, %v1940
        %v1974 = vpack.c.b16 %v1943, %v1942
        %v1975 = vpack.c.b16 %v1945, %v1944
        %v1976 = vpack.c.b16 %v1947, %v1946
        %v1977 = vpack.c.b16 %v1949, %v1948
        %v1978 = vpack.c.b16 %v1951, %v1950
        %v1979 = vpack.c.b16 %v1953, %v1952
        %v1980 = vpack.c.b16 %v1955, %v1954
        %v1981 = vpack.c.b16 %v1957, %v1956
        %2006 = vmatprep.subr.bf16.mxu0 0
        %2007 = vmatpush1.bf16.msra.mxu0 %v1965
        %2008 = vmatprep.subr.bf16.mxu0 0
        %2009 = vmatpush1.bf16.msra.mxu0 %v1964
        %2010 = vmatprep.subr.bf16.mxu0 0
        %2011 = vmatpush1.bf16.msra.mxu0 %v1963
        %2012 = vmatprep.subr.bf16.mxu0 0
        %2013 = vmatpush1.bf16.msra.mxu0 %v1962
        %2014 = vmatprep.subr.bf16.mxu0 0
        %2015 = vmatpush1.bf16.msra.mxu0 %v1961
        %2016 = vmatprep.subr.bf16.mxu0 0
        %2017 = vmatpush1.bf16.msra.mxu0 %v1960
        %2018 = vmatprep.subr.bf16.mxu0 0
        %2019 = vmatpush1.bf16.msra.mxu0 %v1959
        %2020 = vmatprep.subr.bf16.mxu0 0
        %2021 = vmatpush1.bf16.msra.mxu0 %v1958
        %2022 = vmatprep.subr.bf16.mxu0 0
        %2023 = vmatpush2.bf16.msra.mxu0 %v1973
        %2024 = vmatprep.subr.bf16.mxu0 0
        %2025 = vmatpush2.bf16.msra.mxu0 %v1972
        %2026 = vmatprep.subr.bf16.mxu0 0
        %2027 = vmatpush2.bf16.msra.mxu0 %v1971
        %2028 = vmatprep.subr.bf16.mxu0 0
        %2029 = vmatpush2.bf16.msra.mxu0 %v1970
        %2030 = vmatprep.subr.bf16.mxu0 0
        %2031 = vmatpush2.bf16.msra.mxu0 %v1969
        %2032 = vmatprep.subr.bf16.mxu0 0
        %2033 = vmatpush2.bf16.msra.mxu0 %v1968
        %2034 = vmatprep.subr.bf16.mxu0 0
        %2035 = vmatpush2.bf16.msra.mxu0 %v1967
        %2036 = vmatprep.subr.bf16.mxu0 0
        %2037 = vmatpush2.bf16.msra.mxu0 %v1966
        %2038 = vmatprep.mubr.bf16.mxu0 %v1803
        %2039 = vmatmul.mubr.bf16.gmra.mxu0 %v1802
        %v2040 = vpop.f32.mrf.mxu0
        %v2041 = vadd.f32 %v1624, %v2040
        %v2042 = vpop.f32.mrf.mxu0
        %v2043 = vpop.f32.mrf.mxu0
        %v2044 = vadd.f32 %v1627, %v2043
        %v2045 = vpop.f32.mrf.mxu0
        %2046 = vmatprep.mubr.bf16.mxu0 %v1806
        %2047 = vmatmul.mubr.bf16.gmra.mxu0 %v1805
        %v2048 = vpop.f32.mrf.mxu0
        %v2049 = vadd.f32 %v1632, %v2048
        %v2050 = vpop.f32.mrf.mxu0
        %v2051 = vpop.f32.mrf.mxu0
        %v2052 = vadd.f32 %v1635, %v2051
        %v2053 = vpop.f32.mrf.mxu0
        %2054 = vmatprep.mubr.bf16.mxu0 %v1809
        %2055 = vmatmul.mubr.bf16.gmra.mxu0 %v1808
        %v2056 = vpop.f32.mrf.mxu0
        %v2057 = vadd.f32 %v1640, %v2056
        %v2058 = vpop.f32.mrf.mxu0
        %v2059 = vpop.f32.mrf.mxu0
        %v2060 = vadd.f32 %v1643, %v2059
        %v2061 = vpop.f32.mrf.mxu0
        %2062 = vmatprep.mubr.bf16.mxu0 %v1812
        %2063 = vmatmul.mubr.bf16.gmra.mxu0 %v1811
        %v2064 = vpop.f32.mrf.mxu0
        %v2065 = vadd.f32 %v1648, %v2064
        %v2066 = vpop.f32.mrf.mxu0
        %v2067 = vpop.f32.mrf.mxu0
        %v2068 = vadd.f32 %v1651, %v2067
        %v2069 = vpop.f32.mrf.mxu0
        %2070 = vmatprep.mubr.bf16.mxu0 %v1815
        %2071 = vmatmul.mubr.bf16.gmra.mxu0 %v1814
        %v2072 = vpop.f32.mrf.mxu0
        %v2073 = vadd.f32 %v1656, %v2072
        %v2074 = vpop.f32.mrf.mxu0
        %v2075 = vpop.f32.mrf.mxu0
        %v2076 = vadd.f32 %v1659, %v2075
        %v2077 = vpop.f32.mrf.mxu0
        %2078 = vmatprep.mubr.bf16.mxu0 %v1818
        %2079 = vmatmul.mubr.bf16.gmra.mxu0 %v1817
        %v2080 = vpop.f32.mrf.mxu0
        %v2081 = vadd.f32 %v1664, %v2080
        %v2082 = vpop.f32.mrf.mxu0
        %v2083 = vpop.f32.mrf.mxu0
        %v2084 = vadd.f32 %v1667, %v2083
        %v2085 = vpop.f32.mrf.mxu0
        %2086 = vmatprep.mubr.bf16.mxu0 %v1821
        %2087 = vmatmul.mubr.bf16.gmra.mxu0 %v1820
        %v2088 = vpop.f32.mrf.mxu0
        %v2089 = vadd.f32 %v1672, %v2088
        %v2090 = vpop.f32.mrf.mxu0
        %v2091 = vpop.f32.mrf.mxu0
        %v2092 = vadd.f32 %v1675, %v2091
        %v2093 = vpop.f32.mrf.mxu0
        %2094 = vmatprep.mubr.bf16.mxu0 %v1824
        %2095 = vmatmul.mubr.bf16.gmra.mxu0 %v1823
        %v2096 = vpop.f32.mrf.mxu0
        %v2097 = vadd.f32 %v1680, %v2096
        %v2098 = vpop.f32.mrf.mxu0
        %v2099 = vpop.f32.mrf.mxu0
        %v2100 = vadd.f32 %v1683, %v2099
        %v2101 = vpop.f32.mrf.mxu0
        %2102 = vmatprep.mubr.bf16.mxu0 %v1827
        %2103 = vmatmul.mubr.bf16.gmra.mxu0 %v1826
        %v2104 = vpop.f32.mrf.mxu0
        %v2105 = vadd.f32 %v1688, %v2104
        %v2106 = vpop.f32.mrf.mxu0
        %v2107 = vpop.f32.mrf.mxu0
        %v2108 = vadd.f32 %v1691, %v2107
        %v2109 = vpop.f32.mrf.mxu0
        %2110 = vmatprep.mubr.bf16.mxu0 %v1830
        %2111 = vmatmul.mubr.bf16.gmra.mxu0 %v1829
        %v2112 = vpop.f32.mrf.mxu0
        %v2113 = vadd.f32 %v1696, %v2112
        %v2114 = vpop.f32.mrf.mxu0
        %v2115 = vpop.f32.mrf.mxu0
        %v2116 = vadd.f32 %v1699, %v2115
        %v2117 = vpop.f32.mrf.mxu0
        %2118 = vdwg.mxu0
        %2119 = vmatprep.subr.bf16.mxu0 0
        %2120 = vmatpush1.bf16.msra.mxu0 %v1981
        %2121 = vmatprep.subr.bf16.mxu0 0
        %2122 = vmatpush1.bf16.msra.mxu0 %v1980
        %2123 = vmatprep.subr.bf16.mxu0 0
        %2124 = vmatpush1.bf16.msra.mxu0 %v1979
        %2125 = vmatprep.subr.bf16.mxu0 0
        %2126 = vmatpush1.bf16.msra.mxu0 %v1978
        %2127 = vmatprep.subr.bf16.mxu0 0
        %2128 = vmatpush1.bf16.msra.mxu0 %v1977
        %2129 = vmatprep.subr.bf16.mxu0 0
        %2130 = vmatpush1.bf16.msra.mxu0 %v1976
        %2131 = vmatprep.subr.bf16.mxu0 0
        %2132 = vmatpush1.bf16.msra.mxu0 %v1975
        %2133 = vmatprep.subr.bf16.mxu0 0
        %2134 = vmatpush1.bf16.msra.mxu0 %v1974
        %2135 = vmatprep.subr.bf16.mxu0 0
        %2136 = vmatpush2.bf16.msra.mxu0 0
        %2137 = vmatprep.subr.bf16.mxu0 0
        %2138 = vmatpush2.bf16.msra.mxu0 0
        %2139 = vmatprep.subr.bf16.mxu0 0
        %2140 = vmatpush2.bf16.msra.mxu0 0
        %2141 = vmatprep.subr.bf16.mxu0 0
        %2142 = vmatpush2.bf16.msra.mxu0 0
        %2143 = vmatprep.subr.bf16.mxu0 0
        %2144 = vmatpush2.bf16.msra.mxu0 0
        %2145 = vmatprep.subr.bf16.mxu0 0
        %2146 = vmatpush2.bf16.msra.mxu0 0
        %2147 = vmatprep.subr.bf16.mxu0 0
        %2148 = vmatpush2.bf16.msra.mxu0 0
        %2149 = vmatprep.subr.bf16.mxu0 0
        %2150 = vmatpush2.bf16.msra.mxu0 0
        %2151 = vmatprep.mubr.bf16.mxu0 0
        %2152 = vmatmul.mubr.bf16.gmra.mxu0 %v1804
        %v2153 = vpop.f32.mrf.mxu0
        %v2154 = vadd.f32 %v2041, %v2153
        %v2155 = vpop.f32.mrf.mxu0
        %v2156 = vpop.f32.mrf.mxu0
        %v2157 = vadd.f32 %v2044, %v2156
        %v2158 = vpop.f32.mrf.mxu0
        %2159 = vmatprep.mubr.bf16.mxu0 0
        %2160 = vmatmul.mubr.bf16.gmra.mxu0 %v1807
        %v2161 = vpop.f32.mrf.mxu0
        %v2162 = vadd.f32 %v2049, %v2161
        %v2163 = vpop.f32.mrf.mxu0
        %v2164 = vpop.f32.mrf.mxu0
        %v2165 = vadd.f32 %v2052, %v2164
        %v2166 = vpop.f32.mrf.mxu0
        %2167 = vmatprep.mubr.bf16.mxu0 0
        %2168 = vmatmul.mubr.bf16.gmra.mxu0 %v1810
        %v2169 = vpop.f32.mrf.mxu0
        %v2170 = vadd.f32 %v2057, %v2169
        %v2171 = vpop.f32.mrf.mxu0
        %v2172 = vpop.f32.mrf.mxu0
        %v2173 = vadd.f32 %v2060, %v2172
        %v2174 = vpop.f32.mrf.mxu0
        %2175 = vmatprep.mubr.bf16.mxu0 0
        %2176 = vmatmul.mubr.bf16.gmra.mxu0 %v1813
        %v2177 = vpop.f32.mrf.mxu0
        %v2178 = vadd.f32 %v2065, %v2177
        %v2179 = vpop.f32.mrf.mxu0
        %v2180 = vpop.f32.mrf.mxu0
        %v2181 = vadd.f32 %v2068, %v2180
        %v2182 = vpop.f32.mrf.mxu0
        %2183 = vmatprep.mubr.bf16.mxu0 0
        %2184 = vmatmul.mubr.bf16.gmra.mxu0 %v1816
        %v2185 = vpop.f32.mrf.mxu0
        %v2186 = vadd.f32 %v2073, %v2185
        %v2187 = vpop.f32.mrf.mxu0
        %v2188 = vpop.f32.mrf.mxu0
        %v2189 = vadd.f32 %v2076, %v2188
        %v2190 = vpop.f32.mrf.mxu0
        %2191 = vmatprep.mubr.bf16.mxu0 0
        %2192 = vmatmul.mubr.bf16.gmra.mxu0 %v1819
        %v2193 = vpop.f32.mrf.mxu0
        %v2194 = vadd.f32 %v2081, %v2193
        %v2195 = vpop.f32.mrf.mxu0
        %v2196 = vpop.f32.mrf.mxu0
        %v2197 = vadd.f32 %v2084, %v2196
        %v2198 = vpop.f32.mrf.mxu0
        %2199 = vmatprep.mubr.bf16.mxu0 0
        %2200 = vmatmul.mubr.bf16.gmra.mxu0 %v1822
        %v2201 = vpop.f32.mrf.mxu0
        %v2202 = vadd.f32 %v2089, %v2201
        %v2203 = vpop.f32.mrf.mxu0
        %v2204 = vpop.f32.mrf.mxu0
        %v2205 = vadd.f32 %v2092, %v2204
        %v2206 = vpop.f32.mrf.mxu0
        %2207 = vmatprep.mubr.bf16.mxu0 0
        %2208 = vmatmul.mubr.bf16.gmra.mxu0 %v1825
        %v2209 = vpop.f32.mrf.mxu0
        %v2210 = vadd.f32 %v2097, %v2209
        %v2211 = vpop.f32.mrf.mxu0
        %v2212 = vpop.f32.mrf.mxu0
        %v2213 = vadd.f32 %v2100, %v2212
        %v2214 = vpop.f32.mrf.mxu0
        %2215 = vmatprep.mubr.bf16.mxu0 0
        %2216 = vmatmul.mubr.bf16.gmra.mxu0 %v1828
        %v2217 = vpop.f32.mrf.mxu0
        %v2218 = vadd.f32 %v2105, %v2217
        %v2219 = vpop.f32.mrf.mxu0
        %v2220 = vpop.f32.mrf.mxu0
        %v2221 = vadd.f32 %v2108, %v2220
        %v2222 = vpop.f32.mrf.mxu0
        %2223 = vmatprep.mubr.bf16.mxu0 0
        %2224 = vmatmul.mubr.bf16.gmra.mxu0 %v1831
        %v2225 = vpop.f32.mrf.mxu0
        %v2226 = vadd.f32 %v2113, %v2225
        %v2227 = vpop.f32.mrf.mxu0
        %v2228 = vpop.f32.mrf.mxu0
        %v2229 = vadd.f32 %v2116, %v2228
        %v2230 = vpop.f32.mrf.mxu0
        %2231 = vdwg.mxu0
        %s2232 = scalar_lea.vmem [#allocation3], 48
        %v2233 = vld [vmem:[%s2232] sm:$0xff]
        %v2234 = vld [vmem:[%s2232 + $0x8] sm:$0xf]
        %v2235 = vld [vmem:[%s2232 + $0xc] sm:$0xff]
        %v2236 = vld [vmem:[%s2232 + $0x14] sm:$0xf]
        %v2237 = vld [vmem:[%s2232 + $0x18] sm:$0xff]
        %v2238 = vld [vmem:[%s2232 + $0x20] sm:$0xf]
        %v2239 = vld [vmem:[%s2232 + $0x24] sm:$0xff]
        %v2240 = vld [vmem:[%s2232 + $0x2c] sm:$0xf]
        %v2241 = vld [vmem:[%s2232 + $0x30] sm:$0xff]
        %v2242 = vld [vmem:[%s2232 + $0x38] sm:$0xf]
        %v2243 = vld [vmem:[%s2232 + $0x3c] sm:$0xff]
        %v2244 = vld [vmem:[%s2232 + $0x44] sm:$0xf]
        %v2245 = vld [vmem:[%s2232 + $0x48] sm:$0xff]
        %v2246 = vld [vmem:[%s2232 + $0x50] sm:$0xf]
        %v2247 = vld [vmem:[%s2232 + $0x54] sm:$0xff]
        %v2248 = vld [vmem:[%s2232 + $0x5c] sm:$0xf]
        %v2249 = vld [vmem:[%s2232 + $0x60] sm:$0xff]
        %v2250 = vld [vmem:[%s2232 + $0x68] sm:$0xf]
        %v2251 = vld [vmem:[%s2232 + $0x6c] sm:$0xff]
        %v2252 = vld [vmem:[%s2232 + $0x74] sm:$0xf]
        %v2253 = vld [vmem:[%s2232 + $0x78] sm:$0xff]
        %v2254 = vld [vmem:[%s2232 + $0x80] sm:$0xf]
        %v2255 = vld [vmem:[%s2232 + $0x84] sm:$0xff]
        %v2256 = vld [vmem:[%s2232 + $0x8c] sm:$0xf]
        %v2257 = vld [vmem:[%s2232 + $0x90] sm:$0xff]
        %v2258 = vld [vmem:[%s2232 + $0x98] sm:$0xf]
        %v2259 = vld [vmem:[%s2232 + $0x9c] sm:$0xff]
        %v2260 = vld [vmem:[%s2232 + $0xa4] sm:$0xf]
        %v2261 = vld [vmem:[%s2232 + $0xa8] sm:$0xff]
        %v2262 = vld [vmem:[%s2232 + $0xb0] sm:$0xf]
        %v2263 = vld [vmem:[%s2232 + $0xb4] sm:$0xff]
        %v2264 = vld [vmem:[%s2232 + $0xbc] sm:$0xf]
        %v2265 = vld [vmem:[%s2232 + $0xc0] sm:$0xff]
        %v2266 = vld [vmem:[%s2232 + $0xc8] sm:$0xf]
        %v2267 = vld [vmem:[%s2232 + $0xcc] sm:$0xff]
        %v2268 = vld [vmem:[%s2232 + $0xd4] sm:$0xf]
        %v2269 = vld [vmem:[%s2232 + $0xd8] sm:$0xff]
        %v2270 = vld [vmem:[%s2232 + $0xe0] sm:$0xf]
        %v2271 = vld [vmem:[%s2232 + $0xe4] sm:$0xff]
        %v2272 = vld [vmem:[%s2232 + $0xec] sm:$0xf]
        %v2273 = vld [vmem:[#allocation9 + $0x180] sm:$0xf]
        %v2274 = vld [vmem:[#allocation9 + $0x184] sm:$0xf]
        %v2275 = vld [vmem:[#allocation9 + $0x188] sm:$0xf]
        %v2276 = vld [vmem:[#allocation9 + $0x18c] sm:$0xf]
        %v2277 = vld [vmem:[#allocation9 + $0x190] sm:$0xf]
        %v2278 = vld [vmem:[#allocation9 + $0x194] sm:$0xf]
        %v2279 = vld [vmem:[#allocation9 + $0x198] sm:$0xf]
        %v2280 = vld [vmem:[#allocation9 + $0x19c] sm:$0xf]
        %v2281 = vld [vmem:[#allocation9 + $0x1a0] sm:$0xf]
        %v2282 = vld [vmem:[#allocation9 + $0x1a4] sm:$0xf]
        %v2283 = vld [vmem:[#allocation9 + $0x1a8] sm:$0xf]
        %v2284 = vld [vmem:[#allocation9 + $0x1ac] sm:$0xf]
        %v2285 = vld [vmem:[#allocation9 + $0x1b0] sm:$0xf]
        %v2286 = vld [vmem:[#allocation9 + $0x1b4] sm:$0xf]
        %v2287 = vld [vmem:[#allocation9 + $0x1b8] sm:$0xf]
        %v2288 = vld [vmem:[#allocation9 + $0x1bc] sm:$0xf]
        %v2289 = vld [vmem:[#allocation9 + $0x1c0] sm:$0xf]
        %v2290 = vld [vmem:[#allocation9 + $0x1c4] sm:$0xf]
        %v2291 = vld [vmem:[#allocation9 + $0x1c8] sm:$0xf]
        %v2292 = vld [vmem:[#allocation9 + $0x1cc] sm:$0xf]
        %v2293 = vld [vmem:[#allocation9 + $0x1d0] sm:$0xf]
        %v2294 = vld [vmem:[#allocation9 + $0x1d4] sm:$0xf]
        %v2295 = vld [vmem:[#allocation9 + $0x1d8] sm:$0xf]
        %v2296 = vld [vmem:[#allocation9 + $0x1dc] sm:$0xf]
        %v2297 = vld [vmem:[#allocation9 + $0x1e0] sm:$0xf]
        %v2298 = vld [vmem:[#allocation9 + $0x1e4] sm:$0xf]
        %v2299 = vld [vmem:[#allocation9 + $0x1e8] sm:$0xf]
        %v2300 = vld [vmem:[#allocation9 + $0x1ec] sm:$0xf]
        %v2301 = vld [vmem:[#allocation9 + $0x1f0] sm:$0xf]
        %v2302 = vld [vmem:[#allocation9 + $0x1f4] sm:$0xf]
        %v2303 = vld [vmem:[#allocation9 + $0x1f8] sm:$0xf]
        %v2304 = vld [vmem:[#allocation9 + $0x1fc] sm:$0xf]
        %v2305 = vld [vmem:[#allocation9 + $0x200] sm:$0xf]
        %v2306 = vld [vmem:[#allocation9 + $0x204] sm:$0xf]
        %v2307 = vld [vmem:[#allocation9 + $0x208] sm:$0xf]
        %v2308 = vld [vmem:[#allocation9 + $0x20c] sm:$0xf]
        %v2309 = vld [vmem:[#allocation9 + $0x210] sm:$0xf]
        %v2310 = vld [vmem:[#allocation9 + $0x214] sm:$0xf]
        %v2311 = vld [vmem:[#allocation9 + $0x218] sm:$0xf]
        %v2312 = vld [vmem:[#allocation9 + $0x21c] sm:$0xf]
        %v2313 = vld [vmem:[#allocation9 + $0x220] sm:$0xf]
        %v2314 = vld [vmem:[#allocation9 + $0x224] sm:$0xf]
        %v2315 = vld [vmem:[#allocation9 + $0x228] sm:$0xf]
        %v2316 = vld [vmem:[#allocation9 + $0x22c] sm:$0xf]
        %v2317 = vld [vmem:[#allocation9 + $0x230] sm:$0xf]
        %v2318 = vld [vmem:[#allocation9 + $0x234] sm:$0xf]
        %v2319 = vld [vmem:[#allocation9 + $0x238] sm:$0xf]
        %v2320 = vld [vmem:[#allocation9 + $0x23c] sm:$0xf]
        %v2361 = vunpack.c.l.b16 %v2233
        %v2362 = vunpack.c.h.b16 %v2233
        %v2363 = vunpack.c.l.b16 %v2234
        %v2364 = vunpack.c.l.b16 %v2235
        %v2365 = vunpack.c.h.b16 %v2235
        %v2366 = vunpack.c.l.b16 %v2236
        %v2367 = vunpack.c.l.b16 %v2237
        %v2368 = vunpack.c.h.b16 %v2237
        %v2369 = vunpack.c.l.b16 %v2238
        %v2370 = vunpack.c.l.b16 %v2239
        %v2371 = vunpack.c.h.b16 %v2239
        %v2372 = vunpack.c.l.b16 %v2240
        %v2373 = vunpack.c.l.b16 %v2241
        %v2374 = vunpack.c.h.b16 %v2241
        %v2375 = vunpack.c.l.b16 %v2242
        %v2376 = vunpack.c.l.b16 %v2243
        %v2377 = vunpack.c.h.b16 %v2243
        %v2378 = vunpack.c.l.b16 %v2244
        %v2379 = vunpack.c.l.b16 %v2245
        %v2380 = vunpack.c.h.b16 %v2245
        %v2381 = vunpack.c.l.b16 %v2246
        %v2382 = vunpack.c.l.b16 %v2247
        %v2383 = vunpack.c.h.b16 %v2247
        %v2384 = vunpack.c.l.b16 %v2248
        %v2385 = vunpack.c.l.b16 %v2249
        %v2386 = vunpack.c.h.b16 %v2249
        %v2387 = vunpack.c.l.b16 %v2250
        %v2388 = vunpack.c.l.b16 %v2251
        %v2389 = vunpack.c.h.b16 %v2251
        %v2390 = vunpack.c.l.b16 %v2252
        %v2391 = vunpack.c.l.b16 %v2253
        %v2392 = vunpack.c.h.b16 %v2253
        %v2393 = vunpack.c.l.b16 %v2254
        %v2394 = vunpack.c.l.b16 %v2255
        %v2395 = vunpack.c.h.b16 %v2255
        %v2396 = vunpack.c.l.b16 %v2256
        %v2397 = vunpack.c.l.b16 %v2257
        %v2398 = vunpack.c.h.b16 %v2257
        %v2399 = vunpack.c.l.b16 %v2258
        %v2400 = vunpack.c.l.b16 %v2259
        %v2401 = vunpack.c.h.b16 %v2259
        %v2402 = vunpack.c.l.b16 %v2260
        %v2403 = vunpack.c.l.b16 %v2261
        %v2404 = vunpack.c.h.b16 %v2261
        %v2405 = vunpack.c.l.b16 %v2262
        %v2406 = vunpack.c.l.b16 %v2263
        %v2407 = vunpack.c.h.b16 %v2263
        %v2408 = vunpack.c.l.b16 %v2264
        %v2409 = vunpack.c.l.b16 %v2265
        %v2410 = vunpack.c.h.b16 %v2265
        %v2411 = vunpack.c.l.b16 %v2266
        %v2412 = vunpack.c.l.b16 %v2267
        %v2413 = vunpack.c.h.b16 %v2267
        %v2414 = vunpack.c.l.b16 %v2268
        %v2415 = vunpack.c.l.b16 %v2269
        %v2416 = vunpack.c.h.b16 %v2269
        %v2417 = vunpack.c.l.b16 %v2270
        %v2418 = vunpack.c.l.b16 %v2271
        %v2419 = vunpack.c.h.b16 %v2271
        %v2420 = vunpack.c.l.b16 %v2272
        %v2421 = vpack.c.b16 %v2364, %v2361
        %v2422 = vpack.c.b16 %v2365, %v2362
        %v2423 = vpack.c.b16 %v2366, %v2363
        %v2424 = vpack.c.b16 %v2370, %v2367
        %v2425 = vpack.c.b16 %v2371, %v2368
        %v2426 = vpack.c.b16 %v2372, %v2369
        %v2427 = vpack.c.b16 %v2376, %v2373
        %v2428 = vpack.c.b16 %v2377, %v2374
        %v2429 = vpack.c.b16 %v2378, %v2375
        %v2430 = vpack.c.b16 %v2382, %v2379
        %v2431 = vpack.c.b16 %v2383, %v2380
        %v2432 = vpack.c.b16 %v2384, %v2381
        %v2433 = vpack.c.b16 %v2388, %v2385
        %v2434 = vpack.c.b16 %v2389, %v2386
        %v2435 = vpack.c.b16 %v2390, %v2387
        %v2436 = vpack.c.b16 %v2394, %v2391
        %v2437 = vpack.c.b16 %v2395, %v2392
        %v2438 = vpack.c.b16 %v2396, %v2393
        %v2439 = vpack.c.b16 %v2400, %v2397
        %v2440 = vpack.c.b16 %v2401, %v2398
        %v2441 = vpack.c.b16 %v2402, %v2399
        %v2442 = vpack.c.b16 %v2406, %v2403
        %v2443 = vpack.c.b16 %v2407, %v2404
        %v2444 = vpack.c.b16 %v2408, %v2405
        %v2445 = vpack.c.b16 %v2412, %v2409
        %v2446 = vpack.c.b16 %v2413, %v2410
        %v2447 = vpack.c.b16 %v2414, %v2411
        %v2448 = vpack.c.b16 %v2418, %v2415
        %v2449 = vpack.c.b16 %v2419, %v2416
        %v2450 = vpack.c.b16 %v2420, %v2417
        %v2529 = vunpack.c.l.b16 %v2273
        %v2530 = vunpack.c.l.b16 %v2274
        %v2531 = vunpack.c.l.b16 %v2275
        %v2532 = vunpack.c.l.b16 %v2276
        %v2533 = vunpack.c.l.b16 %v2277
        %v2534 = vunpack.c.l.b16 %v2278
        %v2535 = vunpack.c.l.b16 %v2279
        %v2536 = vunpack.c.l.b16 %v2280
        %v2537 = vunpack.c.l.b16 %v2281
        %v2538 = vunpack.c.l.b16 %v2282
        %v2539 = vunpack.c.l.b16 %v2283
        %v2540 = vunpack.c.l.b16 %v2284
        %v2541 = vunpack.c.l.b16 %v2285
        %v2542 = vunpack.c.l.b16 %v2286
        %v2543 = vunpack.c.l.b16 %v2287
        %v2544 = vunpack.c.l.b16 %v2288
        %v2545 = vunpack.c.l.b16 %v2289
        %v2546 = vunpack.c.l.b16 %v2290
        %v2547 = vunpack.c.l.b16 %v2291
        %v2548 = vunpack.c.l.b16 %v2292
        %v2549 = vunpack.c.l.b16 %v2293
        %v2550 = vunpack.c.l.b16 %v2294
        %v2551 = vunpack.c.l.b16 %v2295
        %v2552 = vunpack.c.l.b16 %v2296
        %v2553 = vunpack.c.l.b16 %v2297
        %v2554 = vunpack.c.l.b16 %v2298
        %v2555 = vunpack.c.l.b16 %v2299
        %v2556 = vunpack.c.l.b16 %v2300
        %v2557 = vunpack.c.l.b16 %v2301
        %v2558 = vunpack.c.l.b16 %v2302
        %v2559 = vunpack.c.l.b16 %v2303
        %v2560 = vunpack.c.l.b16 %v2304
        %v2561 = vunpack.c.l.b16 %v2305
        %v2562 = vunpack.c.l.b16 %v2306
        %v2563 = vunpack.c.l.b16 %v2307
        %v2564 = vunpack.c.l.b16 %v2308
        %v2565 = vunpack.c.l.b16 %v2309
        %v2566 = vunpack.c.l.b16 %v2310
        %v2567 = vunpack.c.l.b16 %v2311
        %v2568 = vunpack.c.l.b16 %v2312
        %v2569 = vunpack.c.l.b16 %v2313
        %v2570 = vunpack.c.l.b16 %v2314
        %v2571 = vunpack.c.l.b16 %v2315
        %v2572 = vunpack.c.l.b16 %v2316
        %v2573 = vunpack.c.l.b16 %v2317
        %v2574 = vunpack.c.l.b16 %v2318
        %v2575 = vunpack.c.l.b16 %v2319
        %v2576 = vunpack.c.l.b16 %v2320
        %v2577 = vpack.c.b16 %v2530, %v2529
        %v2578 = vpack.c.b16 %v2532, %v2531
        %v2579 = vpack.c.b16 %v2534, %v2533
        %v2580 = vpack.c.b16 %v2536, %v2535
        %v2581 = vpack.c.b16 %v2538, %v2537
        %v2582 = vpack.c.b16 %v2540, %v2539
        %v2583 = vpack.c.b16 %v2542, %v2541
        %v2584 = vpack.c.b16 %v2544, %v2543
        %v2585 = vpack.c.b16 %v2546, %v2545
        %v2586 = vpack.c.b16 %v2548, %v2547
        %v2587 = vpack.c.b16 %v2550, %v2549
        %v2588 = vpack.c.b16 %v2552, %v2551
        %v2589 = vpack.c.b16 %v2554, %v2553
        %v2590 = vpack.c.b16 %v2556, %v2555
        %v2591 = vpack.c.b16 %v2558, %v2557
        %v2592 = vpack.c.b16 %v2560, %v2559
        %v2593 = vpack.c.b16 %v2562, %v2561
        %v2594 = vpack.c.b16 %v2564, %v2563
        %v2595 = vpack.c.b16 %v2566, %v2565
        %v2596 = vpack.c.b16 %v2568, %v2567
        %v2597 = vpack.c.b16 %v2570, %v2569
        %v2598 = vpack.c.b16 %v2572, %v2571
        %v2599 = vpack.c.b16 %v2574, %v2573
        %v2600 = vpack.c.b16 %v2576, %v2575
        %2625 = vmatprep.subr.bf16.mxu0 0
        %2626 = vmatpush1.bf16.msra.mxu0 %v2584
        %2627 = vmatprep.subr.bf16.mxu0 0
        %2628 = vmatpush1.bf16.msra.mxu0 %v2583
        %2629 = vmatprep.subr.bf16.mxu0 0
        %2630 = vmatpush1.bf16.msra.mxu0 %v2582
        %2631 = vmatprep.subr.bf16.mxu0 0
        %2632 = vmatpush1.bf16.msra.mxu0 %v2581
        %2633 = vmatprep.subr.bf16.mxu0 0
        %2634 = vmatpush1.bf16.msra.mxu0 %v2580
        %2635 = vmatprep.subr.bf16.mxu0 0
        %2636 = vmatpush1.bf16.msra.mxu0 %v2579
        %2637 = vmatprep.subr.bf16.mxu0 0
        %2638 = vmatpush1.bf16.msra.mxu0 %v2578
        %2639 = vmatprep.subr.bf16.mxu0 0
        %2640 = vmatpush1.bf16.msra.mxu0 %v2577
        %2641 = vmatprep.subr.bf16.mxu0 0
        %2642 = vmatpush2.bf16.msra.mxu0 %v2592
        %2643 = vmatprep.subr.bf16.mxu0 0
        %2644 = vmatpush2.bf16.msra.mxu0 %v2591
        %2645 = vmatprep.subr.bf16.mxu0 0
        %2646 = vmatpush2.bf16.msra.mxu0 %v2590
        %2647 = vmatprep.subr.bf16.mxu0 0
        %2648 = vmatpush2.bf16.msra.mxu0 %v2589
        %2649 = vmatprep.subr.bf16.mxu0 0
        %2650 = vmatpush2.bf16.msra.mxu0 %v2588
        %2651 = vmatprep.subr.bf16.mxu0 0
        %2652 = vmatpush2.bf16.msra.mxu0 %v2587
        %2653 = vmatprep.subr.bf16.mxu0 0
        %2654 = vmatpush2.bf16.msra.mxu0 %v2586
        %2655 = vmatprep.subr.bf16.mxu0 0
        %2656 = vmatpush2.bf16.msra.mxu0 %v2585
        %2657 = vmatprep.mubr.bf16.mxu0 %v2422
        %2658 = vmatmul.mubr.bf16.gmra.mxu0 %v2421
        %v2659 = vpop.f32.mrf.mxu0
        %v2660 = vadd.f32 0.0, %v2659
        %v2661 = vpop.f32.mrf.mxu0
        %v2662 = vpop.f32.mrf.mxu0
        %v2663 = vadd.f32 0.0, %v2662
        %v2664 = vpop.f32.mrf.mxu0
        %2665 = vmatprep.mubr.bf16.mxu0 %v2425
        %2666 = vmatmul.mubr.bf16.gmra.mxu0 %v2424
        %v2667 = vpop.f32.mrf.mxu0
        %v2668 = vadd.f32 0.0, %v2667
        %v2669 = vpop.f32.mrf.mxu0
        %v2670 = vpop.f32.mrf.mxu0
        %v2671 = vadd.f32 0.0, %v2670
        %v2672 = vpop.f32.mrf.mxu0
        %2673 = vmatprep.mubr.bf16.mxu0 %v2428
        %2674 = vmatmul.mubr.bf16.gmra.mxu0 %v2427
        %v2675 = vpop.f32.mrf.mxu0
        %v2676 = vadd.f32 0.0, %v2675
        %v2677 = vpop.f32.mrf.mxu0
        %v2678 = vpop.f32.mrf.mxu0
        %v2679 = vadd.f32 0.0, %v2678
        %v2680 = vpop.f32.mrf.mxu0
        %2681 = vmatprep.mubr.bf16.mxu0 %v2431
        %2682 = vmatmul.mubr.bf16.gmra.mxu0 %v2430
        %v2683 = vpop.f32.mrf.mxu0
        %v2684 = vadd.f32 0.0, %v2683
        %v2685 = vpop.f32.mrf.mxu0
        %v2686 = vpop.f32.mrf.mxu0
        %v2687 = vadd.f32 0.0, %v2686
        %v2688 = vpop.f32.mrf.mxu0
        %2689 = vmatprep.mubr.bf16.mxu0 %v2434
        %2690 = vmatmul.mubr.bf16.gmra.mxu0 %v2433
        %v2691 = vpop.f32.mrf.mxu0
        %v2692 = vadd.f32 0.0, %v2691
        %v2693 = vpop.f32.mrf.mxu0
        %v2694 = vpop.f32.mrf.mxu0
        %v2695 = vadd.f32 0.0, %v2694
        %v2696 = vpop.f32.mrf.mxu0
        %2697 = vmatprep.mubr.bf16.mxu0 %v2437
        %2698 = vmatmul.mubr.bf16.gmra.mxu0 %v2436
        %v2699 = vpop.f32.mrf.mxu0
        %v2700 = vadd.f32 0.0, %v2699
        %v2701 = vpop.f32.mrf.mxu0
        %v2702 = vpop.f32.mrf.mxu0
        %v2703 = vadd.f32 0.0, %v2702
        %v2704 = vpop.f32.mrf.mxu0
        %2705 = vmatprep.mubr.bf16.mxu0 %v2440
        %2706 = vmatmul.mubr.bf16.gmra.mxu0 %v2439
        %v2707 = vpop.f32.mrf.mxu0
        %v2708 = vadd.f32 0.0, %v2707
        %v2709 = vpop.f32.mrf.mxu0
        %v2710 = vpop.f32.mrf.mxu0
        %v2711 = vadd.f32 0.0, %v2710
        %v2712 = vpop.f32.mrf.mxu0
        %2713 = vmatprep.mubr.bf16.mxu0 %v2443
        %2714 = vmatmul.mubr.bf16.gmra.mxu0 %v2442
        %v2715 = vpop.f32.mrf.mxu0
        %v2716 = vadd.f32 0.0, %v2715
        %v2717 = vpop.f32.mrf.mxu0
        %v2718 = vpop.f32.mrf.mxu0
        %v2719 = vadd.f32 0.0, %v2718
        %v2720 = vpop.f32.mrf.mxu0
        %2721 = vmatprep.mubr.bf16.mxu0 %v2446
        %2722 = vmatmul.mubr.bf16.gmra.mxu0 %v2445
        %v2723 = vpop.f32.mrf.mxu0
        %v2724 = vadd.f32 0.0, %v2723
        %v2725 = vpop.f32.mrf.mxu0
        %v2726 = vpop.f32.mrf.mxu0
        %v2727 = vadd.f32 0.0, %v2726
        %v2728 = vpop.f32.mrf.mxu0
        %2729 = vmatprep.mubr.bf16.mxu0 %v2449
        %2730 = vmatmul.mubr.bf16.gmra.mxu0 %v2448
        %v2731 = vpop.f32.mrf.mxu0
        %v2732 = vadd.f32 0.0, %v2731
        %v2733 = vpop.f32.mrf.mxu0
        %v2734 = vpop.f32.mrf.mxu0
        %v2735 = vadd.f32 0.0, %v2734
        %v2736 = vpop.f32.mrf.mxu0
        %2737 = vdwg.mxu0
        %2738 = vmatprep.subr.bf16.mxu0 0
        %2739 = vmatpush1.bf16.msra.mxu0 %v2600
        %2740 = vmatprep.subr.bf16.mxu0 0
        %2741 = vmatpush1.bf16.msra.mxu0 %v2599
        %2742 = vmatprep.subr.bf16.mxu0 0
        %2743 = vmatpush1.bf16.msra.mxu0 %v2598
        %2744 = vmatprep.subr.bf16.mxu0 0
        %2745 = vmatpush1.bf16.msra.mxu0 %v2597
        %2746 = vmatprep.subr.bf16.mxu0 0
        %2747 = vmatpush1.bf16.msra.mxu0 %v2596
        %2748 = vmatprep.subr.bf16.mxu0 0
        %2749 = vmatpush1.bf16.msra.mxu0 %v2595
        %2750 = vmatprep.subr.bf16.mxu0 0
        %2751 = vmatpush1.bf16.msra.mxu0 %v2594
        %2752 = vmatprep.subr.bf16.mxu0 0
        %2753 = vmatpush1.bf16.msra.mxu0 %v2593
        %2754 = vmatprep.subr.bf16.mxu0 0
        %2755 = vmatpush2.bf16.msra.mxu0 0
        %2756 = vmatprep.subr.bf16.mxu0 0
        %2757 = vmatpush2.bf16.msra.mxu0 0
        %2758 = vmatprep.subr.bf16.mxu0 0
        %2759 = vmatpush2.bf16.msra.mxu0 0
        %2760 = vmatprep.subr.bf16.mxu0 0
        %2761 = vmatpush2.bf16.msra.mxu0 0
        %2762 = vmatprep.subr.bf16.mxu0 0
        %2763 = vmatpush2.bf16.msra.mxu0 0
        %2764 = vmatprep.subr.bf16.mxu0 0
        %2765 = vmatpush2.bf16.msra.mxu0 0
        %2766 = vmatprep.subr.bf16.mxu0 0
        %2767 = vmatpush2.bf16.msra.mxu0 0
        %2768 = vmatprep.subr.bf16.mxu0 0
        %2769 = vmatpush2.bf16.msra.mxu0 0
        %2770 = vmatprep.mubr.bf16.mxu0 0
        %2771 = vmatmul.mubr.bf16.gmra.mxu0 %v2423
        %v2772 = vpop.f32.mrf.mxu0
        %v2773 = vadd.f32 %v2660, %v2772
        %v2774 = vpop.f32.mrf.mxu0
        %v2775 = vpop.f32.mrf.mxu0
        %v2776 = vadd.f32 %v2663, %v2775
        %v2777 = vpop.f32.mrf.mxu0
        %2778 = vmatprep.mubr.bf16.mxu0 0
        %2779 = vmatmul.mubr.bf16.gmra.mxu0 %v2426
        %v2780 = vpop.f32.mrf.mxu0
        %v2781 = vadd.f32 %v2668, %v2780
        %v2782 = vpop.f32.mrf.mxu0
        %v2783 = vpop.f32.mrf.mxu0
        %v2784 = vadd.f32 %v2671, %v2783
        %v2785 = vpop.f32.mrf.mxu0
        %2786 = vmatprep.mubr.bf16.mxu0 0
        %2787 = vmatmul.mubr.bf16.gmra.mxu0 %v2429
        %v2788 = vpop.f32.mrf.mxu0
        %v2789 = vadd.f32 %v2676, %v2788
        %v2790 = vpop.f32.mrf.mxu0
        %v2791 = vpop.f32.mrf.mxu0
        %v2792 = vadd.f32 %v2679, %v2791
        %v2793 = vpop.f32.mrf.mxu0
        %2794 = vmatprep.mubr.bf16.mxu0 0
        %2795 = vmatmul.mubr.bf16.gmra.mxu0 %v2432
        %v2796 = vpop.f32.mrf.mxu0
        %v2797 = vadd.f32 %v2684, %v2796
        %v2798 = vpop.f32.mrf.mxu0
        %v2799 = vpop.f32.mrf.mxu0
        %v2800 = vadd.f32 %v2687, %v2799
        %v2801 = vpop.f32.mrf.mxu0
        %2802 = vmatprep.mubr.bf16.mxu0 0
        %2803 = vmatmul.mubr.bf16.gmra.mxu0 %v2435
        %v2804 = vpop.f32.mrf.mxu0
        %v2805 = vadd.f32 %v2692, %v2804
        %v2806 = vpop.f32.mrf.mxu0
        %v2807 = vpop.f32.mrf.mxu0
        %v2808 = vadd.f32 %v2695, %v2807
        %v2809 = vpop.f32.mrf.mxu0
        %2810 = vmatprep.mubr.bf16.mxu0 0
        %2811 = vmatmul.mubr.bf16.gmra.mxu0 %v2438
        %v2812 = vpop.f32.mrf.mxu0
        %v2813 = vadd.f32 %v2700, %v2812
        %v2814 = vpop.f32.mrf.mxu0
        %v2815 = vpop.f32.mrf.mxu0
        %v2816 = vadd.f32 %v2703, %v2815
        %v2817 = vpop.f32.mrf.mxu0
        %2818 = vmatprep.mubr.bf16.mxu0 0
        %2819 = vmatmul.mubr.bf16.gmra.mxu0 %v2441
        %v2820 = vpop.f32.mrf.mxu0
        %v2821 = vadd.f32 %v2708, %v2820
        %v2822 = vpop.f32.mrf.mxu0
        %v2823 = vpop.f32.mrf.mxu0
        %v2824 = vadd.f32 %v2711, %v2823
        %v2825 = vpop.f32.mrf.mxu0
        %2826 = vmatprep.mubr.bf16.mxu0 0
        %2827 = vmatmul.mubr.bf16.gmra.mxu0 %v2444
        %v2828 = vpop.f32.mrf.mxu0
        %v2829 = vadd.f32 %v2716, %v2828
        %v2830 = vpop.f32.mrf.mxu0
        %v2831 = vpop.f32.mrf.mxu0
        %v2832 = vadd.f32 %v2719, %v2831
        %v2833 = vpop.f32.mrf.mxu0
        %2834 = vmatprep.mubr.bf16.mxu0 0
        %2835 = vmatmul.mubr.bf16.gmra.mxu0 %v2447
        %v2836 = vpop.f32.mrf.mxu0
        %v2837 = vadd.f32 %v2724, %v2836
        %v2838 = vpop.f32.mrf.mxu0
        %v2839 = vpop.f32.mrf.mxu0
        %v2840 = vadd.f32 %v2727, %v2839
        %v2841 = vpop.f32.mrf.mxu0
        %2842 = vmatprep.mubr.bf16.mxu0 0
        %2843 = vmatmul.mubr.bf16.gmra.mxu0 %v2450
        %v2844 = vpop.f32.mrf.mxu0
        %v2845 = vadd.f32 %v2732, %v2844
        %v2846 = vpop.f32.mrf.mxu0
        %v2847 = vpop.f32.mrf.mxu0
        %v2848 = vadd.f32 %v2735, %v2847
        %v2849 = vpop.f32.mrf.mxu0
        %2850 = vdwg.mxu0
        %v2851 = vadd.f32 %v2154, %v2773
        %v2852 = vadd.f32 %v2157, %v2776
        %v2853 = vadd.f32 %v2162, %v2781
        %v2854 = vadd.f32 %v2165, %v2784
        %v2855 = vadd.f32 %v2170, %v2789
        %v2856 = vadd.f32 %v2173, %v2792
        %v2857 = vadd.f32 %v2178, %v2797
        %v2858 = vadd.f32 %v2181, %v2800
        %v2859 = vadd.f32 %v2186, %v2805
        %v2860 = vadd.f32 %v2189, %v2808
        %v2861 = vadd.f32 %v2194, %v2813
        %v2862 = vadd.f32 %v2197, %v2816
        %v2863 = vadd.f32 %v2202, %v2821
        %v2864 = vadd.f32 %v2205, %v2824
        %v2865 = vadd.f32 %v2210, %v2829
        %v2866 = vadd.f32 %v2213, %v2832
        %v2867 = vadd.f32 %v2218, %v2837
        %v2868 = vadd.f32 %v2221, %v2840
        %v2869 = vadd.f32 %v2226, %v2845
        %v2870 = vadd.f32 %v2229, %v2848
        %v2871 = vld [vmem:[%s4] sm:$0x1]
        %v2873 = vlaneseq
        %v2874 = vshrl.u32 %v2873, 7
        %v2875 = vsub.s32 0, %v2874
        %v2876 = vrot.slane %v2871, %v2875
        %v2878 = vadd.f32 %v2851, %v2876
        %v2879 = vadd.f32 %v2852, %v2876
        %v2880 = vadd.f32 %v2853, %v2876
        %v2881 = vadd.f32 %v2854, %v2876
        %v2882 = vadd.f32 %v2855, %v2876
        %v2883 = vadd.f32 %v2856, %v2876
        %v2884 = vadd.f32 %v2857, %v2876
        %v2885 = vadd.f32 %v2858, %v2876
        %v2886 = vadd.f32 %v2859, %v2876
        %v2887 = vadd.f32 %v2860, %v2876
        %v2888 = vadd.f32 %v2861, %v2876
        %v2889 = vadd.f32 %v2862, %v2876
        %v2890 = vadd.f32 %v2863, %v2876
        %v2891 = vadd.f32 %v2864, %v2876
        %v2892 = vadd.f32 %v2865, %v2876
        %v2893 = vadd.f32 %v2866, %v2876
        %v2894 = vadd.f32 %v2867, %v2876
        %v2895 = vadd.f32 %v2868, %v2876
        %v2896 = vadd.f32 %v2869, %v2876
        %v2897 = vadd.f32 %v2870, %v2876
        %v2898 = vmax.f32 %v2878, 0.0
        %v2899 = vmax.f32 %v2879, 0.0
        %v2900 = vmax.f32 %v2880, 0.0
        %v2901 = vmax.f32 %v2881, 0.0
        %v2902 = vmax.f32 %v2882, 0.0
        %v2903 = vmax.f32 %v2883, 0.0
        %v2904 = vmax.f32 %v2884, 0.0
        %v2905 = vmax.f32 %v2885, 0.0
        %v2906 = vmax.f32 %v2886, 0.0
        %v2907 = vmax.f32 %v2887, 0.0
        %v2908 = vmax.f32 %v2888, 0.0
        %v2909 = vmax.f32 %v2889, 0.0
        %v2910 = vmax.f32 %v2890, 0.0
        %v2911 = vmax.f32 %v2891, 0.0
        %v2912 = vmax.f32 %v2892, 0.0
        %v2913 = vmax.f32 %v2893, 0.0
        %v2914 = vmax.f32 %v2894, 0.0
        %v2915 = vmax.f32 %v2895, 0.0
        %v2916 = vmax.f32 %v2896, 0.0
        %v2917 = vmax.f32 %v2897, 0.0
        %v2918 = vpack.c.bf16 %v2899, %v2898
        %v2919 = vpack.c.bf16 %v2901, %v2900
        %v2920 = vpack.c.bf16 %v2903, %v2902
        %v2921 = vpack.c.bf16 %v2905, %v2904
        %v2922 = vpack.c.bf16 %v2907, %v2906
        %v2923 = vpack.c.bf16 %v2909, %v2908
        %v2924 = vpack.c.bf16 %v2911, %v2910
        %v2925 = vpack.c.bf16 %v2913, %v2912
        %v2926 = vpack.c.bf16 %v2915, %v2914
        %v2927 = vpack.c.bf16 %v2917, %v2916
        %v2938 = vunpack.c.l.b16 %v2918
        %v2939 = vunpack.c.h.b16 %v2918
        %v2940 = vunpack.c.l.b16 %v2919
        %v2941 = vunpack.c.h.b16 %v2919
        %v2942 = vunpack.c.l.b16 %v2920
        %v2943 = vunpack.c.h.b16 %v2920
        %v2944 = vunpack.c.l.b16 %v2921
        %v2945 = vunpack.c.h.b16 %v2921
        %v2946 = vunpack.c.l.b16 %v2922
        %v2947 = vunpack.c.h.b16 %v2922
        %v2948 = vunpack.c.l.b16 %v2923
        %v2949 = vunpack.c.h.b16 %v2923
        %v2950 = vunpack.c.l.b16 %v2924
        %v2951 = vunpack.c.h.b16 %v2924
        %v2952 = vunpack.c.l.b16 %v2925
        %v2953 = vunpack.c.h.b16 %v2925
        %v2954 = vunpack.c.l.b16 %v2926
        %v2955 = vunpack.c.h.b16 %v2926
        %v2956 = vunpack.c.l.b16 %v2927
        %v2957 = vunpack.c.h.b16 %v2927
        %v2958 = vpack.c.b16 %v2938, %v2938
        %v2959 = vpack.c.b16 %v2939, %v2939
        %v2960 = vpack.c.b16 %v2940, %v2940
        %v2961 = vpack.c.b16 %v2941, %v2941
        %v2962 = vpack.c.b16 %v2942, %v2942
        %v2963 = vpack.c.b16 %v2943, %v2943
        %v2964 = vpack.c.b16 %v2944, %v2944
        %v2965 = vpack.c.b16 %v2945, %v2945
        %v2966 = vpack.c.b16 %v2946, %v2946
        %v2967 = vpack.c.b16 %v2947, %v2947
        %v2968 = vpack.c.b16 %v2948, %v2948
        %v2969 = vpack.c.b16 %v2949, %v2949
        %v2970 = vpack.c.b16 %v2950, %v2950
        %v2971 = vpack.c.b16 %v2951, %v2951
        %v2972 = vpack.c.b16 %v2952, %v2952
        %v2973 = vpack.c.b16 %v2953, %v2953
        %v2974 = vpack.c.b16 %v2954, %v2954
        %v2975 = vpack.c.b16 %v2955, %v2955
        %v2976 = vpack.c.b16 %v2956, %v2956
        %v2977 = vpack.c.b16 %v2957, %v2957
        %2998 = vst [vmem:[#allocation2 + $0x8] sm:$0xf] %v2958
        %2999 = vst [vmem:[#allocation2 + $0xc] sm:$0xf] %v2959
        %3000 = vst [vmem:[#allocation2 + $0x20] sm:$0xf] %v2960
        %3001 = vst [vmem:[#allocation2 + $0x24] sm:$0xf] %v2961
        %3002 = vst [vmem:[#allocation2 + $0x38] sm:$0xf] %v2962
        %3003 = vst [vmem:[#allocation2 + $0x3c] sm:$0xf] %v2963
        %3004 = vst [vmem:[#allocation2 + $0x50] sm:$0xf] %v2964
        %3005 = vst [vmem:[#allocation2 + $0x54] sm:$0xf] %v2965
        %3006 = vst [vmem:[#allocation2 + $0x68] sm:$0xf] %v2966
        %3007 = vst [vmem:[#allocation2 + $0x6c] sm:$0xf] %v2967
        %3008 = vst [vmem:[#allocation2 + $0x80] sm:$0xf] %v2968
        %3009 = vst [vmem:[#allocation2 + $0x84] sm:$0xf] %v2969
        %3010 = vst [vmem:[#allocation2 + $0x98] sm:$0xf] %v2970
        %3011 = vst [vmem:[#allocation2 + $0x9c] sm:$0xf] %v2971
        %3012 = vst [vmem:[#allocation2 + $0xb0] sm:$0xf] %v2972
        %3013 = vst [vmem:[#allocation2 + $0xb4] sm:$0xf] %v2973
        %3014 = vst [vmem:[#allocation2 + $0xc8] sm:$0xf] %v2974
        %3015 = vst [vmem:[#allocation2 + $0xcc] sm:$0xf] %v2975
        %3016 = vst [vmem:[#allocation2 + $0xe0] sm:$0xf] %v2976
        %3017 = vst [vmem:[#allocation2 + $0xe4] sm:$0xf] %v2977
        %vm3018 = vcmask 1043459
        %vm3019 = vsmask.f32 7950
        %vm3020 = vmand %vm3018, %vm3019
        %v3021 = vld [vmem:[#allocation2 + $0x4] sm:$0x8]
        %v3022 = vsel %vm3020, 0, %v3021
        %3023 = vst [vmem:[#allocation2 + $0x4] sm:$0x8] %v3022
        %v3024 = vld [vmem:[#allocation2 + $0x1c] sm:$0x8]
        %v3025 = vsel %vm3020, 0, %v3024
        %3026 = vst [vmem:[#allocation2 + $0x1c] sm:$0x8] %v3025
        %v3027 = vld [vmem:[#allocation2 + $0x34] sm:$0x8]
        %v3028 = vsel %vm3020, 0, %v3027
        %3029 = vst [vmem:[#allocation2 + $0x34] sm:$0x8] %v3028
        %v3030 = vld [vmem:[#allocation2 + $0x4c] sm:$0x8]
        %v3031 = vsel %vm3020, 0, %v3030
        %3032 = vst [vmem:[#allocation2 + $0x4c] sm:$0x8] %v3031
        %v3033 = vld [vmem:[#allocation2 + $0x64] sm:$0x8]
        %v3034 = vsel %vm3020, 0, %v3033
        %3035 = vst [vmem:[#allocation2 + $0x64] sm:$0x8] %v3034
        %v3036 = vld [vmem:[#allocation2 + $0x7c] sm:$0x8]
        %v3037 = vsel %vm3020, 0, %v3036
        %3038 = vst [vmem:[#allocation2 + $0x7c] sm:$0x8] %v3037
        %v3039 = vld [vmem:[#allocation2 + $0x94] sm:$0x8]
        %v3040 = vsel %vm3020, 0, %v3039
        %3041 = vst [vmem:[#allocation2 + $0x94] sm:$0x8] %v3040
        %v3042 = vld [vmem:[#allocation2 + $0xac] sm:$0x8]
        %v3043 = vsel %vm3020, 0, %v3042
        %3044 = vst [vmem:[#allocation2 + $0xac] sm:$0x8] %v3043
        %v3045 = vld [vmem:[#allocation2 + $0xc4] sm:$0x8]
        %v3046 = vsel %vm3020, 0, %v3045
        %3047 = vst [vmem:[#allocation2 + $0xc4] sm:$0x8] %v3046
        %v3048 = vld [vmem:[#allocation2 + $0xdc] sm:$0x8]
        %v3049 = vsel %vm3020, 0, %v3048
        %3050 = vst [vmem:[#allocation2 + $0xdc] sm:$0x8] %v3049
        %vm3051 = vcmask 1040384
        %vm3052 = vsmask.f32 256
        %vm3053 = vmand %vm3051, %vm3052
        %v3054 = vld [vmem:[#allocation2 + $0x10] sm:$0x1]
        %v3055 = vsel %vm3053, 0, %v3054
        %3056 = vst [vmem:[#allocation2 + $0x10] sm:$0x1] %v3055
        %v3057 = vld [vmem:[#allocation2 + $0x28] sm:$0x1]
        %v3058 = vsel %vm3053, 0, %v3057
        %3059 = vst [vmem:[#allocation2 + $0x28] sm:$0x1] %v3058
        %v3060 = vld [vmem:[#allocation2 + $0x40] sm:$0x1]
        %v3061 = vsel %vm3053, 0, %v3060
        %3062 = vst [vmem:[#allocation2 + $0x40] sm:$0x1] %v3061
        %v3063 = vld [vmem:[#allocation2 + $0x58] sm:$0x1]
        %v3064 = vsel %vm3053, 0, %v3063
        %3065 = vst [vmem:[#allocation2 + $0x58] sm:$0x1] %v3064
        %v3066 = vld [vmem:[#allocation2 + $0x70] sm:$0x1]
        %v3067 = vsel %vm3053, 0, %v3066
        %3068 = vst [vmem:[#allocation2 + $0x70] sm:$0x1] %v3067
        %v3069 = vld [vmem:[#allocation2 + $0x88] sm:$0x1]
        %v3070 = vsel %vm3053, 0, %v3069
        %3071 = vst [vmem:[#allocation2 + $0x88] sm:$0x1] %v3070
        %v3072 = vld [vmem:[#allocation2 + $0xa0] sm:$0x1]
        %v3073 = vsel %vm3053, 0, %v3072
        %3074 = vst [vmem:[#allocation2 + $0xa0] sm:$0x1] %v3073
        %v3075 = vld [vmem:[#allocation2 + $0xb8] sm:$0x1]
        %v3076 = vsel %vm3053, 0, %v3075
        %3077 = vst [vmem:[#allocation2 + $0xb8] sm:$0x1] %v3076
        %v3078 = vld [vmem:[#allocation2 + $0xd0] sm:$0x1]
        %v3079 = vsel %vm3053, 0, %v3078
        %3080 = vst [vmem:[#allocation2 + $0xd0] sm:$0x1] %v3079
        %v3081 = vld [vmem:[#allocation2 + $0xe8] sm:$0x1]
        %v3082 = vsel %vm3053, 0, %v3081
        %3083 = vst [vmem:[#allocation2 + $0xe8] sm:$0x1] %v3082
        %p3084 = scmp.eq.s32.totalorder %s32, 0
        // Predicated region
        $region61: #{tpu_custom_call.1} parent=43 // pred_check
          %p3085 = pneg %p3084
        $region62: #{tpu_custom_call.1} parent=43 // pred_check_branch
          %3087 = sbr.rel (%p3085) target = $region64
        $region63: #{tpu_custom_call.1} parent=43 // pred_region
          %3088 = vst [vmem:[#allocation2] sm:$0xf] 0
          %3089 = vst [vmem:[#allocation2 + $0x4] sm:$0xf] 0
          %3090 = vst [vmem:[#allocation2 + $0x8] sm:$0xf] 0
          %3091 = vst [vmem:[#allocation2 + $0xc] sm:$0xf] 0
          %3092 = vst [vmem:[#allocation2 + $0x10] sm:$0xf] 0
          %3093 = vst [vmem:[#allocation2 + $0x14] sm:$0xf] 0
        $region64: #{tpu_custom_call.1} parent=43 // pred_fallthru
          _
        %p3094 = scmp.eq.s32.totalorder %s32, 1
        // Predicated region
        $region65: #{tpu_custom_call.1} parent=43 // pred_check
          %p3095 = pneg %p3094
        $region66: #{tpu_custom_call.1} parent=43 // pred_check_branch
          %3097 = sbr.rel (%p3095) target = $region68
        $region67: #{tpu_custom_call.1} parent=43 // pred_region
          %s3098 = scalar_lea.vmem [#allocation2], 216
          %3099 = vst [vmem:[%s3098] sm:$0xf] 0
          %3100 = vst [vmem:[%s3098 + $0x4] sm:$0xf] 0
          %3101 = vst [vmem:[%s3098 + $0x8] sm:$0xf] 0
          %3102 = vst [vmem:[%s3098 + $0xc] sm:$0xf] 0
          %3103 = vst [vmem:[%s3098 + $0x10] sm:$0xf] 0
          %3104 = vst [vmem:[%s3098 + $0x14] sm:$0xf] 0
        $region68: #{tpu_custom_call.1} parent=43 // pred_fallthru
          _
        %v3105 = vld [vmem:[#allocation2 + $0x4] sm:$0x8]
        %v3106 = vld [vmem:[#allocation2 + $0x8] sm:$0xf]
        %v3107 = vld [vmem:[#allocation2 + $0xc] sm:$0xf]
        %v3108 = vld [vmem:[#allocation2 + $0x1c] sm:$0x8]
        %v3109 = vld [vmem:[#allocation2 + $0x20] sm:$0xf]
        %v3110 = vld [vmem:[#allocation2 + $0x24] sm:$0xf]
        %v3111 = vld [vmem:[#allocation2 + $0x34] sm:$0x8]
        %v3112 = vld [vmem:[#allocation2 + $0x38] sm:$0xf]
        %v3113 = vld [vmem:[#allocation2 + $0x3c] sm:$0xf]
        %v3114 = vld [vmem:[#allocation2 + $0x4c] sm:$0x8]
        %v3115 = vld [vmem:[#allocation2 + $0x50] sm:$0xf]
        %v3116 = vld [vmem:[#allocation2 + $0x54] sm:$0xf]
        %v3117 = vld [vmem:[#allocation2 + $0x64] sm:$0x8]
        %v3118 = vld [vmem:[#allocation2 + $0x68] sm:$0xf]
        %v3119 = vld [vmem:[#allocation2 + $0x6c] sm:$0xf]
        %v3120 = vld [vmem:[#allocation2 + $0x7c] sm:$0x8]
        %v3121 = vld [vmem:[#allocation2 + $0x80] sm:$0xf]
        %v3122 = vld [vmem:[#allocation2 + $0x84] sm:$0xf]
        %v3123 = vld [vmem:[#allocation2 + $0x94] sm:$0x8]
        %v3124 = vld [vmem:[#allocation2 + $0x98] sm:$0xf]
        %v3125 = vld [vmem:[#allocation2 + $0x9c] sm:$0xf]
        %v3126 = vld [vmem:[#allocation2 + $0xac] sm:$0x8]
        %v3127 = vld [vmem:[#allocation2 + $0xb0] sm:$0xf]
        %v3128 = vld [vmem:[#allocation2 + $0xb4] sm:$0xf]
        %v3129 = vld [vmem:[#allocation2 + $0xc4] sm:$0x8]
        %v3130 = vld [vmem:[#allocation2 + $0xc8] sm:$0xf]
        %v3131 = vld [vmem:[#allocation2 + $0xcc] sm:$0xf]
        %v3132 = vld [vmem:[#allocation2 + $0xdc] sm:$0x8]
        %v3133 = vld [vmem:[#allocation2 + $0xe0] sm:$0xf]
        %v3134 = vld [vmem:[#allocation2 + $0xe4] sm:$0xf]
        %vm3135 = vsmask.f32 4368
        %vm3136 = vmor %vm3052, %vm3135
        %v3138 = vshrl.u32 %v3105, 16
        %v3140 = vrot.slane %v3138, 7
        %v3141 = vrot.slane %v3140, 4
        %v3143 = vshrl.u32 %v3106, 16
        %v3145 = vrot.slane %v3143, 7
        %v3146 = vshll.u32 %v3106, 16
        %v3148 = vor.u32 %v3145, %v3146
        %v3149 = vsel %vm3136, %v3141, %v3148
        %v3150 = vrot.slane %v3145, 4
        %v3152 = vshrl.u32 %v3107, 16
        %v3154 = vrot.slane %v3152, 7
        %v3155 = vshll.u32 %v3107, 16
        %v3157 = vor.u32 %v3154, %v3155
        %v3158 = vsel %vm3136, %v3150, %v3157
        %v3160 = vshrl.u32 %v3108, 16
        %v3162 = vrot.slane %v3160, 7
        %v3163 = vrot.slane %v3162, 4
        %v3165 = vshrl.u32 %v3109, 16
        %v3167 = vrot.slane %v3165, 7
        %v3168 = vshll.u32 %v3109, 16
        %v3170 = vor.u32 %v3167, %v3168
        %v3171 = vsel %vm3136, %v3163, %v3170
        %v3172 = vrot.slane %v3167, 4
        %v3174 = vshrl.u32 %v3110, 16
        %v3176 = vrot.slane %v3174, 7
        %v3177 = vshll.u32 %v3110, 16
        %v3179 = vor.u32 %v3176, %v3177
        %v3180 = vsel %vm3136, %v3172, %v3179
        %v3182 = vshrl.u32 %v3111, 16
        %v3184 = vrot.slane %v3182, 7
        %v3185 = vrot.slane %v3184, 4
        %v3187 = vshrl.u32 %v3112, 16
        %v3189 = vrot.slane %v3187, 7
        %v3190 = vshll.u32 %v3112, 16
        %v3192 = vor.u32 %v3189, %v3190
        %v3193 = vsel %vm3136, %v3185, %v3192
        %v3194 = vrot.slane %v3189, 4
        %v3196 = vshrl.u32 %v3113, 16
        %v3198 = vrot.slane %v3196, 7
        %v3199 = vshll.u32 %v3113, 16
        %v3201 = vor.u32 %v3198, %v3199
        %v3202 = vsel %vm3136, %v3194, %v3201
        %v3204 = vshrl.u32 %v3114, 16
        %v3206 = vrot.slane %v3204, 7
        %v3207 = vrot.slane %v3206, 4
        %v3209 = vshrl.u32 %v3115, 16
        %v3211 = vrot.slane %v3209, 7
        %v3212 = vshll.u32 %v3115, 16
        %v3214 = vor.u32 %v3211, %v3212
        %v3215 = vsel %vm3136, %v3207, %v3214
        %v3216 = vrot.slane %v3211, 4
        %v3218 = vshrl.u32 %v3116, 16
        %v3220 = vrot.slane %v3218, 7
        %v3221 = vshll.u32 %v3116, 16
        %v3223 = vor.u32 %v3220, %v3221
        %v3224 = vsel %vm3136, %v3216, %v3223
        %v3226 = vshrl.u32 %v3117, 16
        %v3228 = vrot.slane %v3226, 7
        %v3229 = vrot.slane %v3228, 4
        %v3231 = vshrl.u32 %v3118, 16
        %v3233 = vrot.slane %v3231, 7
        %v3234 = vshll.u32 %v3118, 16
        %v3236 = vor.u32 %v3233, %v3234
        %v3237 = vsel %vm3136, %v3229, %v3236
        %v3238 = vrot.slane %v3233, 4
        %v3240 = vshrl.u32 %v3119, 16
        %v3242 = vrot.slane %v3240, 7
        %v3243 = vshll.u32 %v3119, 16
        %v3245 = vor.u32 %v3242, %v3243
        %v3246 = vsel %vm3136, %v3238, %v3245
        %v3248 = vshrl.u32 %v3120, 16
        %v3250 = vrot.slane %v3248, 7
        %v3251 = vrot.slane %v3250, 4
        %v3253 = vshrl.u32 %v3121, 16
        %v3255 = vrot.slane %v3253, 7
        %v3256 = vshll.u32 %v3121, 16
        %v3258 = vor.u32 %v3255, %v3256
        %v3259 = vsel %vm3136, %v3251, %v3258
        %v3260 = vrot.slane %v3255, 4
        %v3262 = vshrl.u32 %v3122, 16
        %v3264 = vrot.slane %v3262, 7
        %v3265 = vshll.u32 %v3122, 16
        %v3267 = vor.u32 %v3264, %v3265
        %v3268 = vsel %vm3136, %v3260, %v3267
        %v3270 = vshrl.u32 %v3123, 16
        %v3272 = vrot.slane %v3270, 7
        %v3273 = vrot.slane %v3272, 4
        %v3275 = vshrl.u32 %v3124, 16
        %v3277 = vrot.slane %v3275, 7
        %v3278 = vshll.u32 %v3124, 16
        %v3280 = vor.u32 %v3277, %v3278
        %v3281 = vsel %vm3136, %v3273, %v3280
        %v3282 = vrot.slane %v3277, 4
        %v3284 = vshrl.u32 %v3125, 16
        %v3286 = vrot.slane %v3284, 7
        %v3287 = vshll.u32 %v3125, 16
        %v3289 = vor.u32 %v3286, %v3287
        %v3290 = vsel %vm3136, %v3282, %v3289
        %v3292 = vshrl.u32 %v3126, 16
        %v3294 = vrot.slane %v3292, 7
        %v3295 = vrot.slane %v3294, 4
        %v3297 = vshrl.u32 %v3127, 16
        %v3299 = vrot.slane %v3297, 7
        %v3300 = vshll.u32 %v3127, 16
        %v3302 = vor.u32 %v3299, %v3300
        %v3303 = vsel %vm3136, %v3295, %v3302
        %v3304 = vrot.slane %v3299, 4
        %v3306 = vshrl.u32 %v3128, 16
        %v3308 = vrot.slane %v3306, 7
        %v3309 = vshll.u32 %v3128, 16
        %v3311 = vor.u32 %v3308, %v3309
        %v3312 = vsel %vm3136, %v3304, %v3311
        %v3314 = vshrl.u32 %v3129, 16
        %v3316 = vrot.slane %v3314, 7
        %v3317 = vrot.slane %v3316, 4
        %v3319 = vshrl.u32 %v3130, 16
        %v3321 = vrot.slane %v3319, 7
        %v3322 = vshll.u32 %v3130, 16
        %v3324 = vor.u32 %v3321, %v3322
        %v3325 = vsel %vm3136, %v3317, %v3324
        %v3326 = vrot.slane %v3321, 4
        %v3328 = vshrl.u32 %v3131, 16
        %v3330 = vrot.slane %v3328, 7
        %v3331 = vshll.u32 %v3131, 16
        %v3333 = vor.u32 %v3330, %v3331
        %v3334 = vsel %vm3136, %v3326, %v3333
        %v3336 = vshrl.u32 %v3132, 16
        %v3338 = vrot.slane %v3336, 7
        %v3339 = vrot.slane %v3338, 4
        %v3341 = vshrl.u32 %v3133, 16
        %v3343 = vrot.slane %v3341, 7
        %v3344 = vshll.u32 %v3133, 16
        %v3346 = vor.u32 %v3343, %v3344
        %v3347 = vsel %vm3136, %v3339, %v3346
        %v3348 = vrot.slane %v3343, 4
        %v3350 = vshrl.u32 %v3134, 16
        %v3352 = vrot.slane %v3350, 7
        %v3353 = vshll.u32 %v3134, 16
        %v3355 = vor.u32 %v3352, %v3353
        %v3356 = vsel %vm3136, %v3348, %v3355
        %3377 = vst [vmem:[#allocation3] sm:$0xf] %v3149
        %3378 = vst [vmem:[#allocation3 + $0xc] sm:$0xf] %v3158
        %3379 = vst [vmem:[#allocation3 + $0x18] sm:$0xf] %v3171
        %3380 = vst [vmem:[#allocation3 + $0x24] sm:$0xf] %v3180
        %3381 = vst [vmem:[#allocation3 + $0x30] sm:$0xf] %v3193
        %3382 = vst [vmem:[#allocation3 + $0x3c] sm:$0xf] %v3202
        %3383 = vst [vmem:[#allocation3 + $0x48] sm:$0xf] %v3215
        %3384 = vst [vmem:[#allocation3 + $0x54] sm:$0xf] %v3224
        %3385 = vst [vmem:[#allocation3 + $0x60] sm:$0xf] %v3237
        %3386 = vst [vmem:[#allocation3 + $0x6c] sm:$0xf] %v3246
        %3387 = vst [vmem:[#allocation3 + $0x78] sm:$0xf] %v3259
        %3388 = vst [vmem:[#allocation3 + $0x84] sm:$0xf] %v3268
        %3389 = vst [vmem:[#allocation3 + $0x90] sm:$0xf] %v3281
        %3390 = vst [vmem:[#allocation3 + $0x9c] sm:$0xf] %v3290
        %3391 = vst [vmem:[#allocation3 + $0xa8] sm:$0xf] %v3303
        %3392 = vst [vmem:[#allocation3 + $0xb4] sm:$0xf] %v3312
        %3393 = vst [vmem:[#allocation3 + $0xc0] sm:$0xf] %v3325
        %3394 = vst [vmem:[#allocation3 + $0xcc] sm:$0xf] %v3334
        %3395 = vst [vmem:[#allocation3 + $0xd8] sm:$0xf] %v3347
        %3396 = vst [vmem:[#allocation3 + $0xe4] sm:$0xf] %v3356
        %v3397 = vld [vmem:[#allocation2 + $0x8] sm:$0xf]
        %v3398 = vld [vmem:[#allocation2 + $0xc] sm:$0xf]
        %v3399 = vld [vmem:[#allocation2 + $0x20] sm:$0xf]
        %v3400 = vld [vmem:[#allocation2 + $0x24] sm:$0xf]
        %v3401 = vld [vmem:[#allocation2 + $0x38] sm:$0xf]
        %v3402 = vld [vmem:[#allocation2 + $0x3c] sm:$0xf]
        %v3403 = vld [vmem:[#allocation2 + $0x50] sm:$0xf]
        %v3404 = vld [vmem:[#allocation2 + $0x54] sm:$0xf]
        %v3405 = vld [vmem:[#allocation2 + $0x68] sm:$0xf]
        %v3406 = vld [vmem:[#allocation2 + $0x6c] sm:$0xf]
        %v3407 = vld [vmem:[#allocation2 + $0x80] sm:$0xf]
        %v3408 = vld [vmem:[#allocation2 + $0x84] sm:$0xf]
        %v3409 = vld [vmem:[#allocation2 + $0x98] sm:$0xf]
        %v3410 = vld [vmem:[#allocation2 + $0x9c] sm:$0xf]
        %v3411 = vld [vmem:[#allocation2 + $0xb0] sm:$0xf]
        %v3412 = vld [vmem:[#allocation2 + $0xb4] sm:$0xf]
        %v3413 = vld [vmem:[#allocation2 + $0xc8] sm:$0xf]
        %v3414 = vld [vmem:[#allocation2 + $0xcc] sm:$0xf]
        %v3415 = vld [vmem:[#allocation2 + $0xe0] sm:$0xf]
        %v3416 = vld [vmem:[#allocation2 + $0xe4] sm:$0xf]
        %3417 = vst [vmem:[#allocation3 + $0x4] sm:$0xf] %v3397
        %3418 = vst [vmem:[#allocation3 + $0x10] sm:$0xf] %v3398
        %3419 = vst [vmem:[#allocation3 + $0x1c] sm:$0xf] %v3399
        %3420 = vst [vmem:[#allocation3 + $0x28] sm:$0xf] %v3400
        %3421 = vst [vmem:[#allocation3 + $0x34] sm:$0xf] %v3401
        %3422 = vst [vmem:[#allocation3 + $0x40] sm:$0xf] %v3402
        %3423 = vst [vmem:[#allocation3 + $0x4c] sm:$0xf] %v3403
        %3424 = vst [vmem:[#allocation3 + $0x58] sm:$0xf] %v3404
        %3425 = vst [vmem:[#allocation3 + $0x64] sm:$0xf] %v3405
        %3426 = vst [vmem:[#allocation3 + $0x70] sm:$0xf] %v3406
        %3427 = vst [vmem:[#allocation3 + $0x7c] sm:$0xf] %v3407
        %3428 = vst [vmem:[#allocation3 + $0x88] sm:$0xf] %v3408
        %3429 = vst [vmem:[#allocation3 + $0x94] sm:$0xf] %v3409
        %3430 = vst [vmem:[#allocation3 + $0xa0] sm:$0xf] %v3410
        %3431 = vst [vmem:[#allocation3 + $0xac] sm:$0xf] %v3411
        %3432 = vst [vmem:[#allocation3 + $0xb8] sm:$0xf] %v3412
        %3433 = vst [vmem:[#allocation3 + $0xc4] sm:$0xf] %v3413
        %3434 = vst [vmem:[#allocation3 + $0xd0] sm:$0xf] %v3414
        %3435 = vst [vmem:[#allocation3 + $0xdc] sm:$0xf] %v3415
        %3436 = vst [vmem:[#allocation3 + $0xe8] sm:$0xf] %v3416
        %v3437 = vld [vmem:[#allocation2 + $0x8] sm:$0xf]
        %v3438 = vld [vmem:[#allocation2 + $0xc] sm:$0xf]
        %v3439 = vld [vmem:[#allocation2 + $0x10] sm:$0x1]
        %v3440 = vld [vmem:[#allocation2 + $0x20] sm:$0xf]
        %v3441 = vld [vmem:[#allocation2 + $0x24] sm:$0xf]
        %v3442 = vld [vmem:[#allocation2 + $0x28] sm:$0x1]
        %v3443 = vld [vmem:[#allocation2 + $0x38] sm:$0xf]
        %v3444 = vld [vmem:[#allocation2 + $0x3c] sm:$0xf]
        %v3445 = vld [vmem:[#allocation2 + $0x40] sm:$0x1]
        %v3446 = vld [vmem:[#allocation2 + $0x50] sm:$0xf]
        %v3447 = vld [vmem:[#allocation2 + $0x54] sm:$0xf]
        %v3448 = vld [vmem:[#allocation2 + $0x58] sm:$0x1]
        %v3449 = vld [vmem:[#allocation2 + $0x68] sm:$0xf]
        %v3450 = vld [vmem:[#allocation2 + $0x6c] sm:$0xf]
        %v3451 = vld [vmem:[#allocation2 + $0x70] sm:$0x1]
        %v3452 = vld [vmem:[#allocation2 + $0x80] sm:$0xf]
        %v3453 = vld [vmem:[#allocation2 + $0x84] sm:$0xf]
        %v3454 = vld [vmem:[#allocation2 + $0x88] sm:$0x1]
        %v3455 = vld [vmem:[#allocation2 + $0x98] sm:$0xf]
        %v3456 = vld [vmem:[#allocation2 + $0x9c] sm:$0xf]
        %v3457 = vld [vmem:[#allocation2 + $0xa0] sm:$0x1]
        %v3458 = vld [vmem:[#allocation2 + $0xb0] sm:$0xf]
        %v3459 = vld [vmem:[#allocation2 + $0xb4] sm:$0xf]
        %v3460 = vld [vmem:[#allocation2 + $0xb8] sm:$0x1]
        %v3461 = vld [vmem:[#allocation2 + $0xc8] sm:$0xf]
        %v3462 = vld [vmem:[#allocation2 + $0xcc] sm:$0xf]
        %v3463 = vld [vmem:[#allocation2 + $0xd0] sm:$0x1]
        %v3464 = vld [vmem:[#allocation2 + $0xe0] sm:$0xf]
        %v3465 = vld [vmem:[#allocation2 + $0xe4] sm:$0xf]
        %v3466 = vld [vmem:[#allocation2 + $0xe8] sm:$0x1]
        %v3468 = vshrl.u32 %v3437, 16
        %v3470 = vrot.slane %v3468, 4
        %v3471 = vshll.u32 %v3437, 16
        %v3473 = vrot.slane %v3471, 5
        %v3474 = vor.u32 %v3470, %v3473
        %v3475 = vrot.slane %v3474, 4
        %v3477 = vshll.u32 %v3438, 16
        %v3479 = vrot.slane %v3477, 5
        %v3480 = vsel %vm451, %v3475, %v3479
        %v3481 = vshrl.u32 %v3438, 16
        %v3483 = vrot.slane %v3481, 4
        %v3484 = vor.u32 %v3483, %v3479
        %v3485 = vrot.slane %v3484, 4
        %v3487 = vshll.u32 %v3439, 16
        %v3489 = vrot.slane %v3487, 5
        %v3490 = vsel %vm451, %v3485, %v3489
        %v3492 = vshrl.u32 %v3440, 16
        %v3494 = vrot.slane %v3492, 4
        %v3495 = vshll.u32 %v3440, 16
        %v3497 = vrot.slane %v3495, 5
        %v3498 = vor.u32 %v3494, %v3497
        %v3499 = vrot.slane %v3498, 4
        %v3501 = vshll.u32 %v3441, 16
        %v3503 = vrot.slane %v3501, 5
        %v3504 = vsel %vm451, %v3499, %v3503
        %v3505 = vshrl.u32 %v3441, 16
        %v3507 = vrot.slane %v3505, 4
        %v3508 = vor.u32 %v3507, %v3503
        %v3509 = vrot.slane %v3508, 4
        %v3511 = vshll.u32 %v3442, 16
        %v3513 = vrot.slane %v3511, 5
        %v3514 = vsel %vm451, %v3509, %v3513
        %v3516 = vshrl.u32 %v3443, 16
        %v3518 = vrot.slane %v3516, 4
        %v3519 = vshll.u32 %v3443, 16
        %v3521 = vrot.slane %v3519, 5
        %v3522 = vor.u32 %v3518, %v3521
        %v3523 = vrot.slane %v3522, 4
        %v3525 = vshll.u32 %v3444, 16
        %v3527 = vrot.slane %v3525, 5
        %v3528 = vsel %vm451, %v3523, %v3527
        %v3529 = vshrl.u32 %v3444, 16
        %v3531 = vrot.slane %v3529, 4
        %v3532 = vor.u32 %v3531, %v3527
        %v3533 = vrot.slane %v3532, 4
        %v3535 = vshll.u32 %v3445, 16
        %v3537 = vrot.slane %v3535, 5
        %v3538 = vsel %vm451, %v3533, %v3537
        %v3540 = vshrl.u32 %v3446, 16
        %v3542 = vrot.slane %v3540, 4
        %v3543 = vshll.u32 %v3446, 16
        %v3545 = vrot.slane %v3543, 5
        %v3546 = vor.u32 %v3542, %v3545
        %v3547 = vrot.slane %v3546, 4
        %v3549 = vshll.u32 %v3447, 16
        %v3551 = vrot.slane %v3549, 5
        %v3552 = vsel %vm451, %v3547, %v3551
        %v3553 = vshrl.u32 %v3447, 16
        %v3555 = vrot.slane %v3553, 4
        %v3556 = vor.u32 %v3555, %v3551
        %v3557 = vrot.slane %v3556, 4
        %v3559 = vshll.u32 %v3448, 16
        %v3561 = vrot.slane %v3559, 5
        %v3562 = vsel %vm451, %v3557, %v3561
        %v3564 = vshrl.u32 %v3449, 16
        %v3566 = vrot.slane %v3564, 4
        %v3567 = vshll.u32 %v3449, 16
        %v3569 = vrot.slane %v3567, 5
        %v3570 = vor.u32 %v3566, %v3569
        %v3571 = vrot.slane %v3570, 4
        %v3573 = vshll.u32 %v3450, 16
        %v3575 = vrot.slane %v3573, 5
        %v3576 = vsel %vm451, %v3571, %v3575
        %v3577 = vshrl.u32 %v3450, 16
        %v3579 = vrot.slane %v3577, 4
        %v3580 = vor.u32 %v3579, %v3575
        %v3581 = vrot.slane %v3580, 4
        %v3583 = vshll.u32 %v3451, 16
        %v3585 = vrot.slane %v3583, 5
        %v3586 = vsel %vm451, %v3581, %v3585
        %v3588 = vshrl.u32 %v3452, 16
        %v3590 = vrot.slane %v3588, 4
        %v3591 = vshll.u32 %v3452, 16
        %v3593 = vrot.slane %v3591, 5
        %v3594 = vor.u32 %v3590, %v3593
        %v3595 = vrot.slane %v3594, 4
        %v3597 = vshll.u32 %v3453, 16
        %v3599 = vrot.slane %v3597, 5
        %v3600 = vsel %vm451, %v3595, %v3599
        %v3601 = vshrl.u32 %v3453, 16
        %v3603 = vrot.slane %v3601, 4
        %v3604 = vor.u32 %v3603, %v3599
        %v3605 = vrot.slane %v3604, 4
        %v3607 = vshll.u32 %v3454, 16
        %v3609 = vrot.slane %v3607, 5
        %v3610 = vsel %vm451, %v3605, %v3609
        %v3612 = vshrl.u32 %v3455, 16
        %v3614 = vrot.slane %v3612, 4
        %v3615 = vshll.u32 %v3455, 16
        %v3617 = vrot.slane %v3615, 5
        %v3618 = vor.u32 %v3614, %v3617
        %v3619 = vrot.slane %v3618, 4
        %v3621 = vshll.u32 %v3456, 16
        %v3623 = vrot.slane %v3621, 5
        %v3624 = vsel %vm451, %v3619, %v3623
        %v3625 = vshrl.u32 %v3456, 16
        %v3627 = vrot.slane %v3625, 4
        %v3628 = vor.u32 %v3627, %v3623
        %v3629 = vrot.slane %v3628, 4
        %v3631 = vshll.u32 %v3457, 16
        %v3633 = vrot.slane %v3631, 5
        %v3634 = vsel %vm451, %v3629, %v3633
        %v3636 = vshrl.u32 %v3458, 16
        %v3638 = vrot.slane %v3636, 4
        %v3639 = vshll.u32 %v3458, 16
        %v3641 = vrot.slane %v3639, 5
        %v3642 = vor.u32 %v3638, %v3641
        %v3643 = vrot.slane %v3642, 4
        %v3645 = vshll.u32 %v3459, 16
        %v3647 = vrot.slane %v3645, 5
        %v3648 = vsel %vm451, %v3643, %v3647
        %v3649 = vshrl.u32 %v3459, 16
        %v3651 = vrot.slane %v3649, 4
        %v3652 = vor.u32 %v3651, %v3647
        %v3653 = vrot.slane %v3652, 4
        %v3655 = vshll.u32 %v3460, 16
        %v3657 = vrot.slane %v3655, 5
        %v3658 = vsel %vm451, %v3653, %v3657
        %v3660 = vshrl.u32 %v3461, 16
        %v3662 = vrot.slane %v3660, 4
        %v3663 = vshll.u32 %v3461, 16
        %v3665 = vrot.slane %v3663, 5
        %v3666 = vor.u32 %v3662, %v3665
        %v3667 = vrot.slane %v3666, 4
        %v3669 = vshll.u32 %v3462, 16
        %v3671 = vrot.slane %v3669, 5
        %v3672 = vsel %vm451, %v3667, %v3671
        %v3673 = vshrl.u32 %v3462, 16
        %v3675 = vrot.slane %v3673, 4
        %v3676 = vor.u32 %v3675, %v3671
        %v3677 = vrot.slane %v3676, 4
        %v3679 = vshll.u32 %v3463, 16
        %v3681 = vrot.slane %v3679, 5
        %v3682 = vsel %vm451, %v3677, %v3681
        %v3684 = vshrl.u32 %v3464, 16
        %v3686 = vrot.slane %v3684, 4
        %v3687 = vshll.u32 %v3464, 16
        %v3689 = vrot.slane %v3687, 5
        %v3690 = vor.u32 %v3686, %v3689
        %v3691 = vrot.slane %v3690, 4
        %v3693 = vshll.u32 %v3465, 16
        %v3695 = vrot.slane %v3693, 5
        %v3696 = vsel %vm451, %v3691, %v3695
        %v3697 = vshrl.u32 %v3465, 16
        %v3699 = vrot.slane %v3697, 4
        %v3700 = vor.u32 %v3699, %v3695
        %v3701 = vrot.slane %v3700, 4
        %v3703 = vshll.u32 %v3466, 16
        %v3705 = vrot.slane %v3703, 5
        %v3706 = vsel %vm451, %v3701, %v3705
        %3727 = vst [vmem:[#allocation3 + $0x8] sm:$0xf] %v3480
        %3728 = vst [vmem:[#allocation3 + $0x14] sm:$0xf] %v3490
        %3729 = vst [vmem:[#allocation3 + $0x20] sm:$0xf] %v3504
        %3730 = vst [vmem:[#allocation3 + $0x2c] sm:$0xf] %v3514
        %3731 = vst [vmem:[#allocation3 + $0x38] sm:$0xf] %v3528
        %3732 = vst [vmem:[#allocation3 + $0x44] sm:$0xf] %v3538
        %3733 = vst [vmem:[#allocation3 + $0x50] sm:$0xf] %v3552
        %3734 = vst [vmem:[#allocation3 + $0x5c] sm:$0xf] %v3562
        %3735 = vst [vmem:[#allocation3 + $0x68] sm:$0xf] %v3576
        %3736 = vst [vmem:[#allocation3 + $0x74] sm:$0xf] %v3586
        %3737 = vst [vmem:[#allocation3 + $0x80] sm:$0xf] %v3600
        %3738 = vst [vmem:[#allocation3 + $0x8c] sm:$0xf] %v3610
        %3739 = vst [vmem:[#allocation3 + $0x98] sm:$0xf] %v3624
        %3740 = vst [vmem:[#allocation3 + $0xa4] sm:$0xf] %v3634
        %3741 = vst [vmem:[#allocation3 + $0xb0] sm:$0xf] %v3648
        %3742 = vst [vmem:[#allocation3 + $0xbc] sm:$0xf] %v3658
        %3743 = vst [vmem:[#allocation3 + $0xc8] sm:$0xf] %v3672
        %3744 = vst [vmem:[#allocation3 + $0xd4] sm:$0xf] %v3682
        %3745 = vst [vmem:[#allocation3 + $0xe0] sm:$0xf] %v3696
        %3746 = vst [vmem:[#allocation3 + $0xec] sm:$0xf] %v3706
        %v3747 = vld [vmem:[#allocation3] sm:$0xff]
        %v3748 = vld [vmem:[#allocation3 + $0x8] sm:$0xf]
        %v3749 = vld [vmem:[#allocation3 + $0xc] sm:$0xff]
        %v3750 = vld [vmem:[#allocation3 + $0x14] sm:$0xf]
        %v3751 = vld [vmem:[#allocation3 + $0x18] sm:$0xff]
        %v3752 = vld [vmem:[#allocation3 + $0x20] sm:$0xf]
        %v3753 = vld [vmem:[#allocation3 + $0x24] sm:$0xff]
        %v3754 = vld [vmem:[#allocation3 + $0x2c] sm:$0xf]
        %v3755 = vld [vmem:[#allocation3 + $0x30] sm:$0xff]
        %v3756 = vld [vmem:[#allocation3 + $0x38] sm:$0xf]
        %v3757 = vld [vmem:[#allocation3 + $0x3c] sm:$0xff]
        %v3758 = vld [vmem:[#allocation3 + $0x44] sm:$0xf]
        %v3759 = vld [vmem:[#allocation3 + $0x48] sm:$0xff]
        %v3760 = vld [vmem:[#allocation3 + $0x50] sm:$0xf]
        %v3761 = vld [vmem:[#allocation3 + $0x54] sm:$0xff]
        %v3762 = vld [vmem:[#allocation3 + $0x5c] sm:$0xf]
        %v3763 = vld [vmem:[#allocation3 + $0x60] sm:$0xff]
        %v3764 = vld [vmem:[#allocation3 + $0x68] sm:$0xf]
        %v3765 = vld [vmem:[#allocation3 + $0x6c] sm:$0xff]
        %v3766 = vld [vmem:[#allocation3 + $0x74] sm:$0xf]
        %v3767 = vld [vmem:[#allocation3 + $0x78] sm:$0xff]
        %v3768 = vld [vmem:[#allocation3 + $0x80] sm:$0xf]
        %v3769 = vld [vmem:[#allocation3 + $0x84] sm:$0xff]
        %v3770 = vld [vmem:[#allocation3 + $0x8c] sm:$0xf]
        %v3771 = vld [vmem:[#allocation3 + $0x90] sm:$0xff]
        %v3772 = vld [vmem:[#allocation3 + $0x98] sm:$0xf]
        %v3773 = vld [vmem:[#allocation3 + $0x9c] sm:$0xff]
        %v3774 = vld [vmem:[#allocation3 + $0xa4] sm:$0xf]
        %v3775 = vld [vmem:[#allocation3 + $0xa8] sm:$0xff]
        %v3776 = vld [vmem:[#allocation3 + $0xb0] sm:$0xf]
        %v3777 = vld [vmem:[#allocation3 + $0xb4] sm:$0xff]
        %v3778 = vld [vmem:[#allocation3 + $0xbc] sm:$0xf]
        %v3779 = vld [vmem:[#allocation10] sm:$0xf]
        %v3780 = vld [vmem:[#allocation10 + $0x4] sm:$0xf]
        %v3781 = vld [vmem:[#allocation10 + $0x8] sm:$0xf]
        %v3782 = vld [vmem:[#allocation10 + $0xc] sm:$0xf]
        %v3783 = vld [vmem:[#allocation10 + $0x10] sm:$0xf]
        %v3784 = vld [vmem:[#allocation10 + $0x14] sm:$0xf]
        %v3785 = vld [vmem:[#allocation10 + $0x18] sm:$0xf]
        %v3786 = vld [vmem:[#allocation10 + $0x1c] sm:$0xf]
        %v3787 = vld [vmem:[#allocation10 + $0x20] sm:$0xf]
        %v3788 = vld [vmem:[#allocation10 + $0x24] sm:$0xf]
        %v3789 = vld [vmem:[#allocation10 + $0x28] sm:$0xf]
        %v3790 = vld [vmem:[#allocation10 + $0x2c] sm:$0xf]
        %v3791 = vld [vmem:[#allocation10 + $0x30] sm:$0xf]
        %v3792 = vld [vmem:[#allocation10 + $0x34] sm:$0xf]
        %v3793 = vld [vmem:[#allocation10 + $0x38] sm:$0xf]
        %v3794 = vld [vmem:[#allocation10 + $0x3c] sm:$0xf]
        %v3795 = vld [vmem:[#allocation10 + $0x40] sm:$0xf]
        %v3796 = vld [vmem:[#allocation10 + $0x44] sm:$0xf]
        %v3797 = vld [vmem:[#allocation10 + $0x48] sm:$0xf]
        %v3798 = vld [vmem:[#allocation10 + $0x4c] sm:$0xf]
        %v3799 = vld [vmem:[#allocation10 + $0x50] sm:$0xf]
        %v3800 = vld [vmem:[#allocation10 + $0x54] sm:$0xf]
        %v3801 = vld [vmem:[#allocation10 + $0x58] sm:$0xf]
        %v3802 = vld [vmem:[#allocation10 + $0x5c] sm:$0xf]
        %v3803 = vld [vmem:[#allocation10 + $0x60] sm:$0xf]
        %v3804 = vld [vmem:[#allocation10 + $0x64] sm:$0xf]
        %v3805 = vld [vmem:[#allocation10 + $0x68] sm:$0xf]
        %v3806 = vld [vmem:[#allocation10 + $0x6c] sm:$0xf]
        %v3807 = vld [vmem:[#allocation10 + $0x70] sm:$0xf]
        %v3808 = vld [vmem:[#allocation10 + $0x74] sm:$0xf]
        %v3809 = vld [vmem:[#allocation10 + $0x78] sm:$0xf]
        %v3810 = vld [vmem:[#allocation10 + $0x7c] sm:$0xf]
        %v3811 = vld [vmem:[#allocation10 + $0x80] sm:$0xf]
        %v3812 = vld [vmem:[#allocation10 + $0x84] sm:$0xf]
        %v3813 = vld [vmem:[#allocation10 + $0x88] sm:$0xf]
        %v3814 = vld [vmem:[#allocation10 + $0x8c] sm:$0xf]
        %v3815 = vld [vmem:[#allocation10 + $0x90] sm:$0xf]
        %v3816 = vld [vmem:[#allocation10 + $0x94] sm:$0xf]
        %v3817 = vld [vmem:[#allocation10 + $0x98] sm:$0xf]
        %v3818 = vld [vmem:[#allocation10 + $0x9c] sm:$0xf]
        %v3819 = vld [vmem:[#allocation10 + $0xa0] sm:$0xf]
        %v3820 = vld [vmem:[#allocation10 + $0xa4] sm:$0xf]
        %v3821 = vld [vmem:[#allocation10 + $0xa8] sm:$0xf]
        %v3822 = vld [vmem:[#allocation10 + $0xac] sm:$0xf]
        %v3823 = vld [vmem:[#allocation10 + $0xb0] sm:$0xf]
        %v3824 = vld [vmem:[#allocation10 + $0xb4] sm:$0xf]
        %v3825 = vld [vmem:[#allocation10 + $0xb8] sm:$0xf]
        %v3826 = vld [vmem:[#allocation10 + $0xbc] sm:$0xf]
        %v3827 = vld [vmem:[%s1083] sm:$0xff]
        %v3828 = vld [vmem:[%s1083 + $0x8] sm:$0xf]
        %v3829 = vld [vmem:[%s1083 + $0xc] sm:$0xff]
        %v3830 = vld [vmem:[%s1083 + $0x14] sm:$0xf]
        %v3831 = vld [vmem:[%s1083 + $0x18] sm:$0xff]
        %v3832 = vld [vmem:[%s1083 + $0x20] sm:$0xf]
        %v3833 = vld [vmem:[%s1083 + $0x24] sm:$0xff]
        %v3834 = vld [vmem:[%s1083 + $0x2c] sm:$0xf]
        %v3835 = vld [vmem:[%s1083 + $0x30] sm:$0xff]
        %v3836 = vld [vmem:[%s1083 + $0x38] sm:$0xf]
        %v3837 = vld [vmem:[%s1083 + $0x3c] sm:$0xff]
        %v3838 = vld [vmem:[%s1083 + $0x44] sm:$0xf]
        %v3839 = vld [vmem:[%s1083 + $0x48] sm:$0xff]
        %v3840 = vld [vmem:[%s1083 + $0x50] sm:$0xf]
        %v3841 = vld [vmem:[%s1083 + $0x54] sm:$0xff]
        %v3842 = vld [vmem:[%s1083 + $0x5c] sm:$0xf]
        %v3843 = vld [vmem:[%s1083 + $0x60] sm:$0xff]
        %v3844 = vld [vmem:[%s1083 + $0x68] sm:$0xf]
        %v3845 = vld [vmem:[%s1083 + $0x6c] sm:$0xff]
        %v3846 = vld [vmem:[%s1083 + $0x74] sm:$0xf]
        %v3847 = vld [vmem:[%s1083 + $0x78] sm:$0xff]
        %v3848 = vld [vmem:[%s1083 + $0x80] sm:$0xf]
        %v3849 = vld [vmem:[%s1083 + $0x84] sm:$0xff]
        %v3850 = vld [vmem:[%s1083 + $0x8c] sm:$0xf]
        %v3851 = vld [vmem:[%s1083 + $0x90] sm:$0xff]
        %v3852 = vld [vmem:[%s1083 + $0x98] sm:$0xf]
        %v3853 = vld [vmem:[%s1083 + $0x9c] sm:$0xff]
        %v3854 = vld [vmem:[%s1083 + $0xa4] sm:$0xf]
        %v3855 = vld [vmem:[%s1083 + $0xa8] sm:$0xff]
        %v3856 = vld [vmem:[%s1083 + $0xb0] sm:$0xf]
        %v3857 = vld [vmem:[%s1083 + $0xb4] sm:$0xff]
        %v3858 = vld [vmem:[%s1083 + $0xbc] sm:$0xf]
        %v3859 = vld [vmem:[#allocation10 + $0xc0] sm:$0xf]
        %v3860 = vld [vmem:[#allocation10 + $0xc4] sm:$0xf]
        %v3861 = vld [vmem:[#allocation10 + $0xc8] sm:$0xf]
        %v3862 = vld [vmem:[#allocation10 + $0xcc] sm:$0xf]
        %v3863 = vld [vmem:[#allocation10 + $0xd0] sm:$0xf]
        %v3864 = vld [vmem:[#allocation10 + $0xd4] sm:$0xf]
        %v3865 = vld [vmem:[#allocation10 + $0xd8] sm:$0xf]
        %v3866 = vld [vmem:[#allocation10 + $0xdc] sm:$0xf]
        %v3867 = vld [vmem:[#allocation10 + $0xe0] sm:$0xf]
        %v3868 = vld [vmem:[#allocation10 + $0xe4] sm:$0xf]
        %v3869 = vld [vmem:[#allocation10 + $0xe8] sm:$0xf]
        %v3870 = vld [vmem:[#allocation10 + $0xec] sm:$0xf]
        %v3871 = vld [vmem:[#allocation10 + $0xf0] sm:$0xf]
        %v3872 = vld [vmem:[#allocation10 + $0xf4] sm:$0xf]
        %v3873 = vld [vmem:[#allocation10 + $0xf8] sm:$0xf]
        %v3874 = vld [vmem:[#allocation10 + $0xfc] sm:$0xf]
        %v3875 = vld [vmem:[#allocation10 + $0x100] sm:$0xf]
        %v3876 = vld [vmem:[#allocation10 + $0x104] sm:$0xf]
        %v3877 = vld [vmem:[#allocation10 + $0x108] sm:$0xf]
        %v3878 = vld [vmem:[#allocation10 + $0x10c] sm:$0xf]
        %v3879 = vld [vmem:[#allocation10 + $0x110] sm:$0xf]
        %v3880 = vld [vmem:[#allocation10 + $0x114] sm:$0xf]
        %v3881 = vld [vmem:[#allocation10 + $0x118] sm:$0xf]
        %v3882 = vld [vmem:[#allocation10 + $0x11c] sm:$0xf]
        %v3883 = vld [vmem:[#allocation10 + $0x120] sm:$0xf]
        %v3884 = vld [vmem:[#allocation10 + $0x124] sm:$0xf]
        %v3885 = vld [vmem:[#allocation10 + $0x128] sm:$0xf]
        %v3886 = vld [vmem:[#allocation10 + $0x12c] sm:$0xf]
        %v3887 = vld [vmem:[#allocation10 + $0x130] sm:$0xf]
        %v3888 = vld [vmem:[#allocation10 + $0x134] sm:$0xf]
        %v3889 = vld [vmem:[#allocation10 + $0x138] sm:$0xf]
        %v3890 = vld [vmem:[#allocation10 + $0x13c] sm:$0xf]
        %v3891 = vld [vmem:[#allocation10 + $0x140] sm:$0xf]
        %v3892 = vld [vmem:[#allocation10 + $0x144] sm:$0xf]
        %v3893 = vld [vmem:[#allocation10 + $0x148] sm:$0xf]
        %v3894 = vld [vmem:[#allocation10 + $0x14c] sm:$0xf]
        %v3895 = vld [vmem:[#allocation10 + $0x150] sm:$0xf]
        %v3896 = vld [vmem:[#allocation10 + $0x154] sm:$0xf]
        %v3897 = vld [vmem:[#allocation10 + $0x158] sm:$0xf]
        %v3898 = vld [vmem:[#allocation10 + $0x15c] sm:$0xf]
        %v3899 = vld [vmem:[#allocation10 + $0x160] sm:$0xf]
        %v3900 = vld [vmem:[#allocation10 + $0x164] sm:$0xf]
        %v3901 = vld [vmem:[#allocation10 + $0x168] sm:$0xf]
        %v3902 = vld [vmem:[#allocation10 + $0x16c] sm:$0xf]
        %v3903 = vld [vmem:[#allocation10 + $0x170] sm:$0xf]
        %v3904 = vld [vmem:[#allocation10 + $0x174] sm:$0xf]
        %v3905 = vld [vmem:[#allocation10 + $0x178] sm:$0xf]
        %v3906 = vld [vmem:[#allocation10 + $0x17c] sm:$0xf]
        %v3939 = vunpack.c.l.b16 %v3827
        %v3940 = vunpack.c.h.b16 %v3827
        %v3941 = vunpack.c.l.b16 %v3828
        %v3942 = vunpack.c.l.b16 %v3829
        %v3943 = vunpack.c.h.b16 %v3829
        %v3944 = vunpack.c.l.b16 %v3830
        %v3945 = vunpack.c.l.b16 %v3831
        %v3946 = vunpack.c.h.b16 %v3831
        %v3947 = vunpack.c.l.b16 %v3832
        %v3948 = vunpack.c.l.b16 %v3833
        %v3949 = vunpack.c.h.b16 %v3833
        %v3950 = vunpack.c.l.b16 %v3834
        %v3951 = vunpack.c.l.b16 %v3835
        %v3952 = vunpack.c.h.b16 %v3835
        %v3953 = vunpack.c.l.b16 %v3836
        %v3954 = vunpack.c.l.b16 %v3837
        %v3955 = vunpack.c.h.b16 %v3837
        %v3956 = vunpack.c.l.b16 %v3838
        %v3957 = vunpack.c.l.b16 %v3839
        %v3958 = vunpack.c.h.b16 %v3839
        %v3959 = vunpack.c.l.b16 %v3840
        %v3960 = vunpack.c.l.b16 %v3841
        %v3961 = vunpack.c.h.b16 %v3841
        %v3962 = vunpack.c.l.b16 %v3842
        %v3963 = vunpack.c.l.b16 %v3843
        %v3964 = vunpack.c.h.b16 %v3843
        %v3965 = vunpack.c.l.b16 %v3844
        %v3966 = vunpack.c.l.b16 %v3845
        %v3967 = vunpack.c.h.b16 %v3845
        %v3968 = vunpack.c.l.b16 %v3846
        %v3969 = vunpack.c.l.b16 %v3847
        %v3970 = vunpack.c.h.b16 %v3847
        %v3971 = vunpack.c.l.b16 %v3848
        %v3972 = vunpack.c.l.b16 %v3849
        %v3973 = vunpack.c.h.b16 %v3849
        %v3974 = vunpack.c.l.b16 %v3850
        %v3975 = vunpack.c.l.b16 %v3851
        %v3976 = vunpack.c.h.b16 %v3851
        %v3977 = vunpack.c.l.b16 %v3852
        %v3978 = vunpack.c.l.b16 %v3853
        %v3979 = vunpack.c.h.b16 %v3853
        %v3980 = vunpack.c.l.b16 %v3854
        %v3981 = vunpack.c.l.b16 %v3855
        %v3982 = vunpack.c.h.b16 %v3855
        %v3983 = vunpack.c.l.b16 %v3856
        %v3984 = vunpack.c.l.b16 %v3857
        %v3985 = vunpack.c.h.b16 %v3857
        %v3986 = vunpack.c.l.b16 %v3858
        %v3987 = vpack.c.b16 %v3942, %v3939
        %v3988 = vpack.c.b16 %v3943, %v3940
        %v3989 = vpack.c.b16 %v3944, %v3941
        %v3990 = vpack.c.b16 %v3948, %v3945
        %v3991 = vpack.c.b16 %v3949, %v3946
        %v3992 = vpack.c.b16 %v3950, %v3947
        %v3993 = vpack.c.b16 %v3954, %v3951
        %v3994 = vpack.c.b16 %v3955, %v3952
        %v3995 = vpack.c.b16 %v3956, %v3953
        %v3996 = vpack.c.b16 %v3960, %v3957
        %v3997 = vpack.c.b16 %v3961, %v3958
        %v3998 = vpack.c.b16 %v3962, %v3959
        %v3999 = vpack.c.b16 %v3966, %v3963
        %v4000 = vpack.c.b16 %v3967, %v3964
        %v4001 = vpack.c.b16 %v3968, %v3965
        %v4002 = vpack.c.b16 %v3972, %v3969
        %v4003 = vpack.c.b16 %v3973, %v3970
        %v4004 = vpack.c.b16 %v3974, %v3971
        %v4005 = vpack.c.b16 %v3978, %v3975
        %v4006 = vpack.c.b16 %v3979, %v3976
        %v4007 = vpack.c.b16 %v3980, %v3977
        %v4008 = vpack.c.b16 %v3984, %v3981
        %v4009 = vpack.c.b16 %v3985, %v3982
        %v4010 = vpack.c.b16 %v3986, %v3983
        %v4083 = vunpack.c.l.b16 %v3859
        %v4084 = vunpack.c.l.b16 %v3860
        %v4085 = vunpack.c.l.b16 %v3861
        %v4086 = vunpack.c.l.b16 %v3862
        %v4087 = vunpack.c.l.b16 %v3863
        %v4088 = vunpack.c.l.b16 %v3864
        %v4089 = vunpack.c.l.b16 %v3865
        %v4090 = vunpack.c.l.b16 %v3866
        %v4091 = vunpack.c.l.b16 %v3867
        %v4092 = vunpack.c.l.b16 %v3868
        %v4093 = vunpack.c.l.b16 %v3869
        %v4094 = vunpack.c.l.b16 %v3870
        %v4095 = vunpack.c.l.b16 %v3871
        %v4096 = vunpack.c.l.b16 %v3872
        %v4097 = vunpack.c.l.b16 %v3873
        %v4098 = vunpack.c.l.b16 %v3874
        %v4099 = vunpack.c.l.b16 %v3875
        %v4100 = vunpack.c.l.b16 %v3876
        %v4101 = vunpack.c.l.b16 %v3877
        %v4102 = vunpack.c.l.b16 %v3878
        %v4103 = vunpack.c.l.b16 %v3879
        %v4104 = vunpack.c.l.b16 %v3880
        %v4105 = vunpack.c.l.b16 %v3881
        %v4106 = vunpack.c.l.b16 %v3882
        %v4107 = vunpack.c.l.b16 %v3883
        %v4108 = vunpack.c.l.b16 %v3884
        %v4109 = vunpack.c.l.b16 %v3885
        %v4110 = vunpack.c.l.b16 %v3886
        %v4111 = vunpack.c.l.b16 %v3887
        %v4112 = vunpack.c.l.b16 %v3888
        %v4113 = vunpack.c.l.b16 %v3889
        %v4114 = vunpack.c.l.b16 %v3890
        %v4115 = vunpack.c.l.b16 %v3891
        %v4116 = vunpack.c.l.b16 %v3892
        %v4117 = vunpack.c.l.b16 %v3893
        %v4118 = vunpack.c.l.b16 %v3894
        %v4119 = vunpack.c.l.b16 %v3895
        %v4120 = vunpack.c.l.b16 %v3896
        %v4121 = vunpack.c.l.b16 %v3897
        %v4122 = vunpack.c.l.b16 %v3898
        %v4123 = vunpack.c.l.b16 %v3899
        %v4124 = vunpack.c.l.b16 %v3900
        %v4125 = vunpack.c.l.b16 %v3901
        %v4126 = vunpack.c.l.b16 %v3902
        %v4127 = vunpack.c.l.b16 %v3903
        %v4128 = vunpack.c.l.b16 %v3904
        %v4129 = vunpack.c.l.b16 %v3905
        %v4130 = vunpack.c.l.b16 %v3906
        %v4131 = vpack.c.b16 %v4084, %v4083
        %v4132 = vpack.c.b16 %v4086, %v4085
        %v4133 = vpack.c.b16 %v4088, %v4087
        %v4134 = vpack.c.b16 %v4090, %v4089
        %v4135 = vpack.c.b16 %v4092, %v4091
        %v4136 = vpack.c.b16 %v4094, %v4093
        %v4137 = vpack.c.b16 %v4096, %v4095
        %v4138 = vpack.c.b16 %v4098, %v4097
        %v4139 = vpack.c.b16 %v4100, %v4099
        %v4140 = vpack.c.b16 %v4102, %v4101
        %v4141 = vpack.c.b16 %v4104, %v4103
        %v4142 = vpack.c.b16 %v4106, %v4105
        %v4143 = vpack.c.b16 %v4108, %v4107
        %v4144 = vpack.c.b16 %v4110, %v4109
        %v4145 = vpack.c.b16 %v4112, %v4111
        %v4146 = vpack.c.b16 %v4114, %v4113
        %v4147 = vpack.c.b16 %v4116, %v4115
        %v4148 = vpack.c.b16 %v4118, %v4117
        %v4149 = vpack.c.b16 %v4120, %v4119
        %v4150 = vpack.c.b16 %v4122, %v4121
        %v4151 = vpack.c.b16 %v4124, %v4123
        %v4152 = vpack.c.b16 %v4126, %v4125
        %v4153 = vpack.c.b16 %v4128, %v4127
        %v4154 = vpack.c.b16 %v4130, %v4129
        %4179 = vmatprep.subr.bf16.mxu0 0
        %4180 = vmatpush1.bf16.msra.mxu0 %v4138
        %4181 = vmatprep.subr.bf16.mxu0 0
        %4182 = vmatpush1.bf16.msra.mxu0 %v4137
        %4183 = vmatprep.subr.bf16.mxu0 0
        %4184 = vmatpush1.bf16.msra.mxu0 %v4136
        %4185 = vmatprep.subr.bf16.mxu0 0
        %4186 = vmatpush1.bf16.msra.mxu0 %v4135
        %4187 = vmatprep.subr.bf16.mxu0 0
        %4188 = vmatpush1.bf16.msra.mxu0 %v4134
        %4189 = vmatprep.subr.bf16.mxu0 0
        %4190 = vmatpush1.bf16.msra.mxu0 %v4133
        %4191 = vmatprep.subr.bf16.mxu0 0
        %4192 = vmatpush1.bf16.msra.mxu0 %v4132
        %4193 = vmatprep.subr.bf16.mxu0 0
        %4194 = vmatpush1.bf16.msra.mxu0 %v4131
        %4195 = vmatprep.subr.bf16.mxu0 0
        %4196 = vmatpush2.bf16.msra.mxu0 %v4146
        %4197 = vmatprep.subr.bf16.mxu0 0
        %4198 = vmatpush2.bf16.msra.mxu0 %v4145
        %4199 = vmatprep.subr.bf16.mxu0 0
        %4200 = vmatpush2.bf16.msra.mxu0 %v4144
        %4201 = vmatprep.subr.bf16.mxu0 0
        %4202 = vmatpush2.bf16.msra.mxu0 %v4143
        %4203 = vmatprep.subr.bf16.mxu0 0
        %4204 = vmatpush2.bf16.msra.mxu0 %v4142
        %4205 = vmatprep.subr.bf16.mxu0 0
        %4206 = vmatpush2.bf16.msra.mxu0 %v4141
        %4207 = vmatprep.subr.bf16.mxu0 0
        %4208 = vmatpush2.bf16.msra.mxu0 %v4140
        %4209 = vmatprep.subr.bf16.mxu0 0
        %4210 = vmatpush2.bf16.msra.mxu0 %v4139
        %4211 = vmatprep.mubr.bf16.mxu0 %v3988
        %4212 = vmatmul.mubr.bf16.gmra.mxu0 %v3987
        %v4213 = vpop.f32.mrf.mxu0
        %v4214 = vadd.f32 0.0, %v4213
        %v4215 = vpop.f32.mrf.mxu0
        %v4216 = vpop.f32.mrf.mxu0
        %v4217 = vadd.f32 0.0, %v4216
        %v4218 = vpop.f32.mrf.mxu0
        %4219 = vmatprep.mubr.bf16.mxu0 %v3991
        %4220 = vmatmul.mubr.bf16.gmra.mxu0 %v3990
        %v4221 = vpop.f32.mrf.mxu0
        %v4222 = vadd.f32 0.0, %v4221
        %v4223 = vpop.f32.mrf.mxu0
        %v4224 = vpop.f32.mrf.mxu0
        %v4225 = vadd.f32 0.0, %v4224
        %v4226 = vpop.f32.mrf.mxu0
        %4227 = vmatprep.mubr.bf16.mxu0 %v3994
        %4228 = vmatmul.mubr.bf16.gmra.mxu0 %v3993
        %v4229 = vpop.f32.mrf.mxu0
        %v4230 = vadd.f32 0.0, %v4229
        %v4231 = vpop.f32.mrf.mxu0
        %v4232 = vpop.f32.mrf.mxu0
        %v4233 = vadd.f32 0.0, %v4232
        %v4234 = vpop.f32.mrf.mxu0
        %4235 = vmatprep.mubr.bf16.mxu0 %v3997
        %4236 = vmatmul.mubr.bf16.gmra.mxu0 %v3996
        %v4237 = vpop.f32.mrf.mxu0
        %v4238 = vadd.f32 0.0, %v4237
        %v4239 = vpop.f32.mrf.mxu0
        %v4240 = vpop.f32.mrf.mxu0
        %v4241 = vadd.f32 0.0, %v4240
        %v4242 = vpop.f32.mrf.mxu0
        %4243 = vmatprep.mubr.bf16.mxu0 %v4000
        %4244 = vmatmul.mubr.bf16.gmra.mxu0 %v3999
        %v4245 = vpop.f32.mrf.mxu0
        %v4246 = vadd.f32 0.0, %v4245
        %v4247 = vpop.f32.mrf.mxu0
        %v4248 = vpop.f32.mrf.mxu0
        %v4249 = vadd.f32 0.0, %v4248
        %v4250 = vpop.f32.mrf.mxu0
        %4251 = vmatprep.mubr.bf16.mxu0 %v4003
        %4252 = vmatmul.mubr.bf16.gmra.mxu0 %v4002
        %v4253 = vpop.f32.mrf.mxu0
        %v4254 = vadd.f32 0.0, %v4253
        %v4255 = vpop.f32.mrf.mxu0
        %v4256 = vpop.f32.mrf.mxu0
        %v4257 = vadd.f32 0.0, %v4256
        %v4258 = vpop.f32.mrf.mxu0
        %4259 = vmatprep.mubr.bf16.mxu0 %v4006
        %4260 = vmatmul.mubr.bf16.gmra.mxu0 %v4005
        %v4261 = vpop.f32.mrf.mxu0
        %v4262 = vadd.f32 0.0, %v4261
        %v4263 = vpop.f32.mrf.mxu0
        %v4264 = vpop.f32.mrf.mxu0
        %v4265 = vadd.f32 0.0, %v4264
        %v4266 = vpop.f32.mrf.mxu0
        %4267 = vmatprep.mubr.bf16.mxu0 %v4009
        %4268 = vmatmul.mubr.bf16.gmra.mxu0 %v4008
        %v4269 = vpop.f32.mrf.mxu0
        %v4270 = vadd.f32 0.0, %v4269
        %v4271 = vpop.f32.mrf.mxu0
        %v4272 = vpop.f32.mrf.mxu0
        %v4273 = vadd.f32 0.0, %v4272
        %v4274 = vpop.f32.mrf.mxu0
        %4275 = vdwg.mxu0
        %4276 = vmatprep.subr.bf16.mxu0 0
        %4277 = vmatpush1.bf16.msra.mxu0 %v4154
        %4278 = vmatprep.subr.bf16.mxu0 0
        %4279 = vmatpush1.bf16.msra.mxu0 %v4153
        %4280 = vmatprep.subr.bf16.mxu0 0
        %4281 = vmatpush1.bf16.msra.mxu0 %v4152
        %4282 = vmatprep.subr.bf16.mxu0 0
        %4283 = vmatpush1.bf16.msra.mxu0 %v4151
        %4284 = vmatprep.subr.bf16.mxu0 0
        %4285 = vmatpush1.bf16.msra.mxu0 %v4150
        %4286 = vmatprep.subr.bf16.mxu0 0
        %4287 = vmatpush1.bf16.msra.mxu0 %v4149
        %4288 = vmatprep.subr.bf16.mxu0 0
        %4289 = vmatpush1.bf16.msra.mxu0 %v4148
        %4290 = vmatprep.subr.bf16.mxu0 0
        %4291 = vmatpush1.bf16.msra.mxu0 %v4147
        %4292 = vmatprep.subr.bf16.mxu0 0
        %4293 = vmatpush2.bf16.msra.mxu0 0
        %4294 = vmatprep.subr.bf16.mxu0 0
        %4295 = vmatpush2.bf16.msra.mxu0 0
        %4296 = vmatprep.subr.bf16.mxu0 0
        %4297 = vmatpush2.bf16.msra.mxu0 0
        %4298 = vmatprep.subr.bf16.mxu0 0
        %4299 = vmatpush2.bf16.msra.mxu0 0
        %4300 = vmatprep.subr.bf16.mxu0 0
        %4301 = vmatpush2.bf16.msra.mxu0 0
        %4302 = vmatprep.subr.bf16.mxu0 0
        %4303 = vmatpush2.bf16.msra.mxu0 0
        %4304 = vmatprep.subr.bf16.mxu0 0
        %4305 = vmatpush2.bf16.msra.mxu0 0
        %4306 = vmatprep.subr.bf16.mxu0 0
        %4307 = vmatpush2.bf16.msra.mxu0 0
        %4308 = vmatprep.mubr.bf16.mxu0 0
        %4309 = vmatmul.mubr.bf16.gmra.mxu0 %v3989
        %v4310 = vpop.f32.mrf.mxu0
        %v4311 = vadd.f32 %v4214, %v4310
        %v4312 = vpop.f32.mrf.mxu0
        %v4313 = vpop.f32.mrf.mxu0
        %v4314 = vadd.f32 %v4217, %v4313
        %v4315 = vpop.f32.mrf.mxu0
        %4316 = vmatprep.mubr.bf16.mxu0 0
        %4317 = vmatmul.mubr.bf16.gmra.mxu0 %v3992
        %v4318 = vpop.f32.mrf.mxu0
        %v4319 = vadd.f32 %v4222, %v4318
        %v4320 = vpop.f32.mrf.mxu0
        %v4321 = vpop.f32.mrf.mxu0
        %v4322 = vadd.f32 %v4225, %v4321
        %v4323 = vpop.f32.mrf.mxu0
        %4324 = vmatprep.mubr.bf16.mxu0 0
        %4325 = vmatmul.mubr.bf16.gmra.mxu0 %v3995
        %v4326 = vpop.f32.mrf.mxu0
        %v4327 = vadd.f32 %v4230, %v4326
        %v4328 = vpop.f32.mrf.mxu0
        %v4329 = vpop.f32.mrf.mxu0
        %v4330 = vadd.f32 %v4233, %v4329
        %v4331 = vpop.f32.mrf.mxu0
        %4332 = vmatprep.mubr.bf16.mxu0 0
        %4333 = vmatmul.mubr.bf16.gmra.mxu0 %v3998
        %v4334 = vpop.f32.mrf.mxu0
        %v4335 = vadd.f32 %v4238, %v4334
        %v4336 = vpop.f32.mrf.mxu0
        %v4337 = vpop.f32.mrf.mxu0
        %v4338 = vadd.f32 %v4241, %v4337
        %v4339 = vpop.f32.mrf.mxu0
        %4340 = vmatprep.mubr.bf16.mxu0 0
        %4341 = vmatmul.mubr.bf16.gmra.mxu0 %v4001
        %v4342 = vpop.f32.mrf.mxu0
        %v4343 = vadd.f32 %v4246, %v4342
        %v4344 = vpop.f32.mrf.mxu0
        %v4345 = vpop.f32.mrf.mxu0
        %v4346 = vadd.f32 %v4249, %v4345
        %v4347 = vpop.f32.mrf.mxu0
        %4348 = vmatprep.mubr.bf16.mxu0 0
        %4349 = vmatmul.mubr.bf16.gmra.mxu0 %v4004
        %v4350 = vpop.f32.mrf.mxu0
        %v4351 = vadd.f32 %v4254, %v4350
        %v4352 = vpop.f32.mrf.mxu0
        %v4353 = vpop.f32.mrf.mxu0
        %v4354 = vadd.f32 %v4257, %v4353
        %v4355 = vpop.f32.mrf.mxu0
        %4356 = vmatprep.mubr.bf16.mxu0 0
        %4357 = vmatmul.mubr.bf16.gmra.mxu0 %v4007
        %v4358 = vpop.f32.mrf.mxu0
        %v4359 = vadd.f32 %v4262, %v4358
        %v4360 = vpop.f32.mrf.mxu0
        %v4361 = vpop.f32.mrf.mxu0
        %v4362 = vadd.f32 %v4265, %v4361
        %v4363 = vpop.f32.mrf.mxu0
        %4364 = vmatprep.mubr.bf16.mxu0 0
        %4365 = vmatmul.mubr.bf16.gmra.mxu0 %v4010
        %v4366 = vpop.f32.mrf.mxu0
        %v4367 = vadd.f32 %v4270, %v4366
        %v4368 = vpop.f32.mrf.mxu0
        %v4369 = vpop.f32.mrf.mxu0
        %v4370 = vadd.f32 %v4273, %v4369
        %v4371 = vpop.f32.mrf.mxu0
        %4372 = vdwg.mxu0
        %v4405 = vunpack.c.l.b16 %v3747
        %v4406 = vunpack.c.h.b16 %v3747
        %v4407 = vunpack.c.l.b16 %v3748
        %v4408 = vunpack.c.l.b16 %v3749
        %v4409 = vunpack.c.h.b16 %v3749
        %v4410 = vunpack.c.l.b16 %v3750
        %v4411 = vunpack.c.l.b16 %v3751
        %v4412 = vunpack.c.h.b16 %v3751
        %v4413 = vunpack.c.l.b16 %v3752
        %v4414 = vunpack.c.l.b16 %v3753
        %v4415 = vunpack.c.h.b16 %v3753
        %v4416 = vunpack.c.l.b16 %v3754
        %v4417 = vunpack.c.l.b16 %v3755
        %v4418 = vunpack.c.h.b16 %v3755
        %v4419 = vunpack.c.l.b16 %v3756
        %v4420 = vunpack.c.l.b16 %v3757
        %v4421 = vunpack.c.h.b16 %v3757
        %v4422 = vunpack.c.l.b16 %v3758
        %v4423 = vunpack.c.l.b16 %v3759
        %v4424 = vunpack.c.h.b16 %v3759
        %v4425 = vunpack.c.l.b16 %v3760
        %v4426 = vunpack.c.l.b16 %v3761
        %v4427 = vunpack.c.h.b16 %v3761
        %v4428 = vunpack.c.l.b16 %v3762
        %v4429 = vunpack.c.l.b16 %v3763
        %v4430 = vunpack.c.h.b16 %v3763
        %v4431 = vunpack.c.l.b16 %v3764
        %v4432 = vunpack.c.l.b16 %v3765
        %v4433 = vunpack.c.h.b16 %v3765
        %v4434 = vunpack.c.l.b16 %v3766
        %v4435 = vunpack.c.l.b16 %v3767
        %v4436 = vunpack.c.h.b16 %v3767
        %v4437 = vunpack.c.l.b16 %v3768
        %v4438 = vunpack.c.l.b16 %v3769
        %v4439 = vunpack.c.h.b16 %v3769
        %v4440 = vunpack.c.l.b16 %v3770
        %v4441 = vunpack.c.l.b16 %v3771
        %v4442 = vunpack.c.h.b16 %v3771
        %v4443 = vunpack.c.l.b16 %v3772
        %v4444 = vunpack.c.l.b16 %v3773
        %v4445 = vunpack.c.h.b16 %v3773
        %v4446 = vunpack.c.l.b16 %v3774
        %v4447 = vunpack.c.l.b16 %v3775
        %v4448 = vunpack.c.h.b16 %v3775
        %v4449 = vunpack.c.l.b16 %v3776
        %v4450 = vunpack.c.l.b16 %v3777
        %v4451 = vunpack.c.h.b16 %v3777
        %v4452 = vunpack.c.l.b16 %v3778
        %v4453 = vpack.c.b16 %v4408, %v4405
        %v4454 = vpack.c.b16 %v4409, %v4406
        %v4455 = vpack.c.b16 %v4410, %v4407
        %v4456 = vpack.c.b16 %v4414, %v4411
        %v4457 = vpack.c.b16 %v4415, %v4412
        %v4458 = vpack.c.b16 %v4416, %v4413
        %v4459 = vpack.c.b16 %v4420, %v4417
        %v4460 = vpack.c.b16 %v4421, %v4418
        %v4461 = vpack.c.b16 %v4422, %v4419
        %v4462 = vpack.c.b16 %v4426, %v4423
        %v4463 = vpack.c.b16 %v4427, %v4424
        %v4464 = vpack.c.b16 %v4428, %v4425
        %v4465 = vpack.c.b16 %v4432, %v4429
        %v4466 = vpack.c.b16 %v4433, %v4430
        %v4467 = vpack.c.b16 %v4434, %v4431
        %v4468 = vpack.c.b16 %v4438, %v4435
        %v4469 = vpack.c.b16 %v4439, %v4436
        %v4470 = vpack.c.b16 %v4440, %v4437
        %v4471 = vpack.c.b16 %v4444, %v4441
        %v4472 = vpack.c.b16 %v4445, %v4442
        %v4473 = vpack.c.b16 %v4446, %v4443
        %v4474 = vpack.c.b16 %v4450, %v4447
        %v4475 = vpack.c.b16 %v4451, %v4448
        %v4476 = vpack.c.b16 %v4452, %v4449
        %v4549 = vunpack.c.l.b16 %v3779
        %v4550 = vunpack.c.l.b16 %v3780
        %v4551 = vunpack.c.l.b16 %v3781
        %v4552 = vunpack.c.l.b16 %v3782
        %v4553 = vunpack.c.l.b16 %v3783
        %v4554 = vunpack.c.l.b16 %v3784
        %v4555 = vunpack.c.l.b16 %v3785
        %v4556 = vunpack.c.l.b16 %v3786
        %v4557 = vunpack.c.l.b16 %v3787
        %v4558 = vunpack.c.l.b16 %v3788
        %v4559 = vunpack.c.l.b16 %v3789
        %v4560 = vunpack.c.l.b16 %v3790
        %v4561 = vunpack.c.l.b16 %v3791
        %v4562 = vunpack.c.l.b16 %v3792
        %v4563 = vunpack.c.l.b16 %v3793
        %v4564 = vunpack.c.l.b16 %v3794
        %v4565 = vunpack.c.l.b16 %v3795
        %v4566 = vunpack.c.l.b16 %v3796
        %v4567 = vunpack.c.l.b16 %v3797
        %v4568 = vunpack.c.l.b16 %v3798
        %v4569 = vunpack.c.l.b16 %v3799
        %v4570 = vunpack.c.l.b16 %v3800
        %v4571 = vunpack.c.l.b16 %v3801
        %v4572 = vunpack.c.l.b16 %v3802
        %v4573 = vunpack.c.l.b16 %v3803
        %v4574 = vunpack.c.l.b16 %v3804
        %v4575 = vunpack.c.l.b16 %v3805
        %v4576 = vunpack.c.l.b16 %v3806
        %v4577 = vunpack.c.l.b16 %v3807
        %v4578 = vunpack.c.l.b16 %v3808
        %v4579 = vunpack.c.l.b16 %v3809
        %v4580 = vunpack.c.l.b16 %v3810
        %v4581 = vunpack.c.l.b16 %v3811
        %v4582 = vunpack.c.l.b16 %v3812
        %v4583 = vunpack.c.l.b16 %v3813
        %v4584 = vunpack.c.l.b16 %v3814
        %v4585 = vunpack.c.l.b16 %v3815
        %v4586 = vunpack.c.l.b16 %v3816
        %v4587 = vunpack.c.l.b16 %v3817
        %v4588 = vunpack.c.l.b16 %v3818
        %v4589 = vunpack.c.l.b16 %v3819
        %v4590 = vunpack.c.l.b16 %v3820
        %v4591 = vunpack.c.l.b16 %v3821
        %v4592 = vunpack.c.l.b16 %v3822
        %v4593 = vunpack.c.l.b16 %v3823
        %v4594 = vunpack.c.l.b16 %v3824
        %v4595 = vunpack.c.l.b16 %v3825
        %v4596 = vunpack.c.l.b16 %v3826
        %v4597 = vpack.c.b16 %v4550, %v4549
        %v4598 = vpack.c.b16 %v4552, %v4551
        %v4599 = vpack.c.b16 %v4554, %v4553
        %v4600 = vpack.c.b16 %v4556, %v4555
        %v4601 = vpack.c.b16 %v4558, %v4557
        %v4602 = vpack.c.b16 %v4560, %v4559
        %v4603 = vpack.c.b16 %v4562, %v4561
        %v4604 = vpack.c.b16 %v4564, %v4563
        %v4605 = vpack.c.b16 %v4566, %v4565
        %v4606 = vpack.c.b16 %v4568, %v4567
        %v4607 = vpack.c.b16 %v4570, %v4569
        %v4608 = vpack.c.b16 %v4572, %v4571
        %v4609 = vpack.c.b16 %v4574, %v4573
        %v4610 = vpack.c.b16 %v4576, %v4575
        %v4611 = vpack.c.b16 %v4578, %v4577
        %v4612 = vpack.c.b16 %v4580, %v4579
        %v4613 = vpack.c.b16 %v4582, %v4581
        %v4614 = vpack.c.b16 %v4584, %v4583
        %v4615 = vpack.c.b16 %v4586, %v4585
        %v4616 = vpack.c.b16 %v4588, %v4587
        %v4617 = vpack.c.b16 %v4590, %v4589
        %v4618 = vpack.c.b16 %v4592, %v4591
        %v4619 = vpack.c.b16 %v4594, %v4593
        %v4620 = vpack.c.b16 %v4596, %v4595
        %4645 = vmatprep.subr.bf16.mxu0 0
        %4646 = vmatpush1.bf16.msra.mxu0 %v4604
        %4647 = vmatprep.subr.bf16.mxu0 0
        %4648 = vmatpush1.bf16.msra.mxu0 %v4603
        %4649 = vmatprep.subr.bf16.mxu0 0
        %4650 = vmatpush1.bf16.msra.mxu0 %v4602
        %4651 = vmatprep.subr.bf16.mxu0 0
        %4652 = vmatpush1.bf16.msra.mxu0 %v4601
        %4653 = vmatprep.subr.bf16.mxu0 0
        %4654 = vmatpush1.bf16.msra.mxu0 %v4600
        %4655 = vmatprep.subr.bf16.mxu0 0
        %4656 = vmatpush1.bf16.msra.mxu0 %v4599
        %4657 = vmatprep.subr.bf16.mxu0 0
        %4658 = vmatpush1.bf16.msra.mxu0 %v4598
        %4659 = vmatprep.subr.bf16.mxu0 0
        %4660 = vmatpush1.bf16.msra.mxu0 %v4597
        %4661 = vmatprep.subr.bf16.mxu0 0
        %4662 = vmatpush2.bf16.msra.mxu0 %v4612
        %4663 = vmatprep.subr.bf16.mxu0 0
        %4664 = vmatpush2.bf16.msra.mxu0 %v4611
        %4665 = vmatprep.subr.bf16.mxu0 0
        %4666 = vmatpush2.bf16.msra.mxu0 %v4610
        %4667 = vmatprep.subr.bf16.mxu0 0
        %4668 = vmatpush2.bf16.msra.mxu0 %v4609
        %4669 = vmatprep.subr.bf16.mxu0 0
        %4670 = vmatpush2.bf16.msra.mxu0 %v4608
        %4671 = vmatprep.subr.bf16.mxu0 0
        %4672 = vmatpush2.bf16.msra.mxu0 %v4607
        %4673 = vmatprep.subr.bf16.mxu0 0
        %4674 = vmatpush2.bf16.msra.mxu0 %v4606
        %4675 = vmatprep.subr.bf16.mxu0 0
        %4676 = vmatpush2.bf16.msra.mxu0 %v4605
        %4677 = vmatprep.mubr.bf16.mxu0 %v4454
        %4678 = vmatmul.mubr.bf16.gmra.mxu0 %v4453
        %v4679 = vpop.f32.mrf.mxu0
        %v4680 = vadd.f32 %v4311, %v4679
        %v4681 = vpop.f32.mrf.mxu0
        %v4682 = vpop.f32.mrf.mxu0
        %v4683 = vadd.f32 %v4314, %v4682
        %v4684 = vpop.f32.mrf.mxu0
        %4685 = vmatprep.mubr.bf16.mxu0 %v4457
        %4686 = vmatmul.mubr.bf16.gmra.mxu0 %v4456
        %v4687 = vpop.f32.mrf.mxu0
        %v4688 = vadd.f32 %v4319, %v4687
        %v4689 = vpop.f32.mrf.mxu0
        %v4690 = vpop.f32.mrf.mxu0
        %v4691 = vadd.f32 %v4322, %v4690
        %v4692 = vpop.f32.mrf.mxu0
        %4693 = vmatprep.mubr.bf16.mxu0 %v4460
        %4694 = vmatmul.mubr.bf16.gmra.mxu0 %v4459
        %v4695 = vpop.f32.mrf.mxu0
        %v4696 = vadd.f32 %v4327, %v4695
        %v4697 = vpop.f32.mrf.mxu0
        %v4698 = vpop.f32.mrf.mxu0
        %v4699 = vadd.f32 %v4330, %v4698
        %v4700 = vpop.f32.mrf.mxu0
        %4701 = vmatprep.mubr.bf16.mxu0 %v4463
        %4702 = vmatmul.mubr.bf16.gmra.mxu0 %v4462
        %v4703 = vpop.f32.mrf.mxu0
        %v4704 = vadd.f32 %v4335, %v4703
        %v4705 = vpop.f32.mrf.mxu0
        %v4706 = vpop.f32.mrf.mxu0
        %v4707 = vadd.f32 %v4338, %v4706
        %v4708 = vpop.f32.mrf.mxu0
        %4709 = vmatprep.mubr.bf16.mxu0 %v4466
        %4710 = vmatmul.mubr.bf16.gmra.mxu0 %v4465
        %v4711 = vpop.f32.mrf.mxu0
        %v4712 = vadd.f32 %v4343, %v4711
        %v4713 = vpop.f32.mrf.mxu0
        %v4714 = vpop.f32.mrf.mxu0
        %v4715 = vadd.f32 %v4346, %v4714
        %v4716 = vpop.f32.mrf.mxu0
        %4717 = vmatprep.mubr.bf16.mxu0 %v4469
        %4718 = vmatmul.mubr.bf16.gmra.mxu0 %v4468
        %v4719 = vpop.f32.mrf.mxu0
        %v4720 = vadd.f32 %v4351, %v4719
        %v4721 = vpop.f32.mrf.mxu0
        %v4722 = vpop.f32.mrf.mxu0
        %v4723 = vadd.f32 %v4354, %v4722
        %v4724 = vpop.f32.mrf.mxu0
        %4725 = vmatprep.mubr.bf16.mxu0 %v4472
        %4726 = vmatmul.mubr.bf16.gmra.mxu0 %v4471
        %v4727 = vpop.f32.mrf.mxu0
        %v4728 = vadd.f32 %v4359, %v4727
        %v4729 = vpop.f32.mrf.mxu0
        %v4730 = vpop.f32.mrf.mxu0
        %v4731 = vadd.f32 %v4362, %v4730
        %v4732 = vpop.f32.mrf.mxu0
        %4733 = vmatprep.mubr.bf16.mxu0 %v4475
        %4734 = vmatmul.mubr.bf16.gmra.mxu0 %v4474
        %v4735 = vpop.f32.mrf.mxu0
        %v4736 = vadd.f32 %v4367, %v4735
        %v4737 = vpop.f32.mrf.mxu0
        %v4738 = vpop.f32.mrf.mxu0
        %v4739 = vadd.f32 %v4370, %v4738
        %v4740 = vpop.f32.mrf.mxu0
        %4741 = vdwg.mxu0
        %4742 = vmatprep.subr.bf16.mxu0 0
        %4743 = vmatpush1.bf16.msra.mxu0 %v4620
        %4744 = vmatprep.subr.bf16.mxu0 0
        %4745 = vmatpush1.bf16.msra.mxu0 %v4619
        %4746 = vmatprep.subr.bf16.mxu0 0
        %4747 = vmatpush1.bf16.msra.mxu0 %v4618
        %4748 = vmatprep.subr.bf16.mxu0 0
        %4749 = vmatpush1.bf16.msra.mxu0 %v4617
        %4750 = vmatprep.subr.bf16.mxu0 0
        %4751 = vmatpush1.bf16.msra.mxu0 %v4616
        %4752 = vmatprep.subr.bf16.mxu0 0
        %4753 = vmatpush1.bf16.msra.mxu0 %v4615
        %4754 = vmatprep.subr.bf16.mxu0 0
        %4755 = vmatpush1.bf16.msra.mxu0 %v4614
        %4756 = vmatprep.subr.bf16.mxu0 0
        %4757 = vmatpush1.bf16.msra.mxu0 %v4613
        %4758 = vmatprep.subr.bf16.mxu0 0
        %4759 = vmatpush2.bf16.msra.mxu0 0
        %4760 = vmatprep.subr.bf16.mxu0 0
        %4761 = vmatpush2.bf16.msra.mxu0 0
        %4762 = vmatprep.subr.bf16.mxu0 0
        %4763 = vmatpush2.bf16.msra.mxu0 0
        %4764 = vmatprep.subr.bf16.mxu0 0
        %4765 = vmatpush2.bf16.msra.mxu0 0
        %4766 = vmatprep.subr.bf16.mxu0 0
        %4767 = vmatpush2.bf16.msra.mxu0 0
        %4768 = vmatprep.subr.bf16.mxu0 0
        %4769 = vmatpush2.bf16.msra.mxu0 0
        %4770 = vmatprep.subr.bf16.mxu0 0
        %4771 = vmatpush2.bf16.msra.mxu0 0
        %4772 = vmatprep.subr.bf16.mxu0 0
        %4773 = vmatpush2.bf16.msra.mxu0 0
        %4774 = vmatprep.mubr.bf16.mxu0 0
        %4775 = vmatmul.mubr.bf16.gmra.mxu0 %v4455
        %v4776 = vpop.f32.mrf.mxu0
        %v4777 = vadd.f32 %v4680, %v4776
        %v4778 = vpop.f32.mrf.mxu0
        %v4779 = vpop.f32.mrf.mxu0
        %v4780 = vadd.f32 %v4683, %v4779
        %v4781 = vpop.f32.mrf.mxu0
        %4782 = vmatprep.mubr.bf16.mxu0 0
        %4783 = vmatmul.mubr.bf16.gmra.mxu0 %v4458
        %v4784 = vpop.f32.mrf.mxu0
        %v4785 = vadd.f32 %v4688, %v4784
        %v4786 = vpop.f32.mrf.mxu0
        %v4787 = vpop.f32.mrf.mxu0
        %v4788 = vadd.f32 %v4691, %v4787
        %v4789 = vpop.f32.mrf.mxu0
        %4790 = vmatprep.mubr.bf16.mxu0 0
        %4791 = vmatmul.mubr.bf16.gmra.mxu0 %v4461
        %v4792 = vpop.f32.mrf.mxu0
        %v4793 = vadd.f32 %v4696, %v4792
        %v4794 = vpop.f32.mrf.mxu0
        %v4795 = vpop.f32.mrf.mxu0
        %v4796 = vadd.f32 %v4699, %v4795
        %v4797 = vpop.f32.mrf.mxu0
        %4798 = vmatprep.mubr.bf16.mxu0 0
        %4799 = vmatmul.mubr.bf16.gmra.mxu0 %v4464
        %v4800 = vpop.f32.mrf.mxu0
        %v4801 = vadd.f32 %v4704, %v4800
        %v4802 = vpop.f32.mrf.mxu0
        %v4803 = vpop.f32.mrf.mxu0
        %v4804 = vadd.f32 %v4707, %v4803
        %v4805 = vpop.f32.mrf.mxu0
        %4806 = vmatprep.mubr.bf16.mxu0 0
        %4807 = vmatmul.mubr.bf16.gmra.mxu0 %v4467
        %v4808 = vpop.f32.mrf.mxu0
        %v4809 = vadd.f32 %v4712, %v4808
        %v4810 = vpop.f32.mrf.mxu0
        %v4811 = vpop.f32.mrf.mxu0
        %v4812 = vadd.f32 %v4715, %v4811
        %v4813 = vpop.f32.mrf.mxu0
        %4814 = vmatprep.mubr.bf16.mxu0 0
        %4815 = vmatmul.mubr.bf16.gmra.mxu0 %v4470
        %v4816 = vpop.f32.mrf.mxu0
        %v4817 = vadd.f32 %v4720, %v4816
        %v4818 = vpop.f32.mrf.mxu0
        %v4819 = vpop.f32.mrf.mxu0
        %v4820 = vadd.f32 %v4723, %v4819
        %v4821 = vpop.f32.mrf.mxu0
        %4822 = vmatprep.mubr.bf16.mxu0 0
        %4823 = vmatmul.mubr.bf16.gmra.mxu0 %v4473
        %v4824 = vpop.f32.mrf.mxu0
        %v4825 = vadd.f32 %v4728, %v4824
        %v4826 = vpop.f32.mrf.mxu0
        %v4827 = vpop.f32.mrf.mxu0
        %v4828 = vadd.f32 %v4731, %v4827
        %v4829 = vpop.f32.mrf.mxu0
        %4830 = vmatprep.mubr.bf16.mxu0 0
        %4831 = vmatmul.mubr.bf16.gmra.mxu0 %v4476
        %v4832 = vpop.f32.mrf.mxu0
        %v4833 = vadd.f32 %v4736, %v4832
        %v4834 = vpop.f32.mrf.mxu0
        %v4835 = vpop.f32.mrf.mxu0
        %v4836 = vadd.f32 %v4739, %v4835
        %v4837 = vpop.f32.mrf.mxu0
        %4838 = vdwg.mxu0
        %v4839 = vld [vmem:[%s2232] sm:$0xff]
        %v4840 = vld [vmem:[%s2232 + $0x8] sm:$0xf]
        %v4841 = vld [vmem:[%s2232 + $0xc] sm:$0xff]
        %v4842 = vld [vmem:[%s2232 + $0x14] sm:$0xf]
        %v4843 = vld [vmem:[%s2232 + $0x18] sm:$0xff]
        %v4844 = vld [vmem:[%s2232 + $0x20] sm:$0xf]
        %v4845 = vld [vmem:[%s2232 + $0x24] sm:$0xff]
        %v4846 = vld [vmem:[%s2232 + $0x2c] sm:$0xf]
        %v4847 = vld [vmem:[%s2232 + $0x30] sm:$0xff]
        %v4848 = vld [vmem:[%s2232 + $0x38] sm:$0xf]
        %v4849 = vld [vmem:[%s2232 + $0x3c] sm:$0xff]
        %v4850 = vld [vmem:[%s2232 + $0x44] sm:$0xf]
        %v4851 = vld [vmem:[%s2232 + $0x48] sm:$0xff]
        %v4852 = vld [vmem:[%s2232 + $0x50] sm:$0xf]
        %v4853 = vld [vmem:[%s2232 + $0x54] sm:$0xff]
        %v4854 = vld [vmem:[%s2232 + $0x5c] sm:$0xf]
        %v4855 = vld [vmem:[%s2232 + $0x60] sm:$0xff]
        %v4856 = vld [vmem:[%s2232 + $0x68] sm:$0xf]
        %v4857 = vld [vmem:[%s2232 + $0x6c] sm:$0xff]
        %v4858 = vld [vmem:[%s2232 + $0x74] sm:$0xf]
        %v4859 = vld [vmem:[%s2232 + $0x78] sm:$0xff]
        %v4860 = vld [vmem:[%s2232 + $0x80] sm:$0xf]
        %v4861 = vld [vmem:[%s2232 + $0x84] sm:$0xff]
        %v4862 = vld [vmem:[%s2232 + $0x8c] sm:$0xf]
        %v4863 = vld [vmem:[%s2232 + $0x90] sm:$0xff]
        %v4864 = vld [vmem:[%s2232 + $0x98] sm:$0xf]
        %v4865 = vld [vmem:[%s2232 + $0x9c] sm:$0xff]
        %v4866 = vld [vmem:[%s2232 + $0xa4] sm:$0xf]
        %v4867 = vld [vmem:[%s2232 + $0xa8] sm:$0xff]
        %v4868 = vld [vmem:[%s2232 + $0xb0] sm:$0xf]
        %v4869 = vld [vmem:[%s2232 + $0xb4] sm:$0xff]
        %v4870 = vld [vmem:[%s2232 + $0xbc] sm:$0xf]
        %v4871 = vld [vmem:[#allocation10 + $0x180] sm:$0xf]
        %v4872 = vld [vmem:[#allocation10 + $0x184] sm:$0xf]
        %v4873 = vld [vmem:[#allocation10 + $0x188] sm:$0xf]
        %v4874 = vld [vmem:[#allocation10 + $0x18c] sm:$0xf]
        %v4875 = vld [vmem:[#allocation10 + $0x190] sm:$0xf]
        %v4876 = vld [vmem:[#allocation10 + $0x194] sm:$0xf]
        %v4877 = vld [vmem:[#allocation10 + $0x198] sm:$0xf]
        %v4878 = vld [vmem:[#allocation10 + $0x19c] sm:$0xf]
        %v4879 = vld [vmem:[#allocation10 + $0x1a0] sm:$0xf]
        %v4880 = vld [vmem:[#allocation10 + $0x1a4] sm:$0xf]
        %v4881 = vld [vmem:[#allocation10 + $0x1a8] sm:$0xf]
        %v4882 = vld [vmem:[#allocation10 + $0x1ac] sm:$0xf]
        %v4883 = vld [vmem:[#allocation10 + $0x1b0] sm:$0xf]
        %v4884 = vld [vmem:[#allocation10 + $0x1b4] sm:$0xf]
        %v4885 = vld [vmem:[#allocation10 + $0x1b8] sm:$0xf]
        %v4886 = vld [vmem:[#allocation10 + $0x1bc] sm:$0xf]
        %v4887 = vld [vmem:[#allocation10 + $0x1c0] sm:$0xf]
        %v4888 = vld [vmem:[#allocation10 + $0x1c4] sm:$0xf]
        %v4889 = vld [vmem:[#allocation10 + $0x1c8] sm:$0xf]
        %v4890 = vld [vmem:[#allocation10 + $0x1cc] sm:$0xf]
        %v4891 = vld [vmem:[#allocation10 + $0x1d0] sm:$0xf]
        %v4892 = vld [vmem:[#allocation10 + $0x1d4] sm:$0xf]
        %v4893 = vld [vmem:[#allocation10 + $0x1d8] sm:$0xf]
        %v4894 = vld [vmem:[#allocation10 + $0x1dc] sm:$0xf]
        %v4895 = vld [vmem:[#allocation10 + $0x1e0] sm:$0xf]
        %v4896 = vld [vmem:[#allocation10 + $0x1e4] sm:$0xf]
        %v4897 = vld [vmem:[#allocation10 + $0x1e8] sm:$0xf]
        %v4898 = vld [vmem:[#allocation10 + $0x1ec] sm:$0xf]
        %v4899 = vld [vmem:[#allocation10 + $0x1f0] sm:$0xf]
        %v4900 = vld [vmem:[#allocation10 + $0x1f4] sm:$0xf]
        %v4901 = vld [vmem:[#allocation10 + $0x1f8] sm:$0xf]
        %v4902 = vld [vmem:[#allocation10 + $0x1fc] sm:$0xf]
        %v4903 = vld [vmem:[#allocation10 + $0x200] sm:$0xf]
        %v4904 = vld [vmem:[#allocation10 + $0x204] sm:$0xf]
        %v4905 = vld [vmem:[#allocation10 + $0x208] sm:$0xf]
        %v4906 = vld [vmem:[#allocation10 + $0x20c] sm:$0xf]
        %v4907 = vld [vmem:[#allocation10 + $0x210] sm:$0xf]
        %v4908 = vld [vmem:[#allocation10 + $0x214] sm:$0xf]
        %v4909 = vld [vmem:[#allocation10 + $0x218] sm:$0xf]
        %v4910 = vld [vmem:[#allocation10 + $0x21c] sm:$0xf]
        %v4911 = vld [vmem:[#allocation10 + $0x220] sm:$0xf]
        %v4912 = vld [vmem:[#allocation10 + $0x224] sm:$0xf]
        %v4913 = vld [vmem:[#allocation10 + $0x228] sm:$0xf]
        %v4914 = vld [vmem:[#allocation10 + $0x22c] sm:$0xf]
        %v4915 = vld [vmem:[#allocation10 + $0x230] sm:$0xf]
        %v4916 = vld [vmem:[#allocation10 + $0x234] sm:$0xf]
        %v4917 = vld [vmem:[#allocation10 + $0x238] sm:$0xf]
        %v4918 = vld [vmem:[#allocation10 + $0x23c] sm:$0xf]
        %v4951 = vunpack.c.l.b16 %v4839
        %v4952 = vunpack.c.h.b16 %v4839
        %v4953 = vunpack.c.l.b16 %v4840
        %v4954 = vunpack.c.l.b16 %v4841
        %v4955 = vunpack.c.h.b16 %v4841
        %v4956 = vunpack.c.l.b16 %v4842
        %v4957 = vunpack.c.l.b16 %v4843
        %v4958 = vunpack.c.h.b16 %v4843
        %v4959 = vunpack.c.l.b16 %v4844
        %v4960 = vunpack.c.l.b16 %v4845
        %v4961 = vunpack.c.h.b16 %v4845
        %v4962 = vunpack.c.l.b16 %v4846
        %v4963 = vunpack.c.l.b16 %v4847
        %v4964 = vunpack.c.h.b16 %v4847
        %v4965 = vunpack.c.l.b16 %v4848
        %v4966 = vunpack.c.l.b16 %v4849
        %v4967 = vunpack.c.h.b16 %v4849
        %v4968 = vunpack.c.l.b16 %v4850
        %v4969 = vunpack.c.l.b16 %v4851
        %v4970 = vunpack.c.h.b16 %v4851
        %v4971 = vunpack.c.l.b16 %v4852
        %v4972 = vunpack.c.l.b16 %v4853
        %v4973 = vunpack.c.h.b16 %v4853
        %v4974 = vunpack.c.l.b16 %v4854
        %v4975 = vunpack.c.l.b16 %v4855
        %v4976 = vunpack.c.h.b16 %v4855
        %v4977 = vunpack.c.l.b16 %v4856
        %v4978 = vunpack.c.l.b16 %v4857
        %v4979 = vunpack.c.h.b16 %v4857
        %v4980 = vunpack.c.l.b16 %v4858
        %v4981 = vunpack.c.l.b16 %v4859
        %v4982 = vunpack.c.h.b16 %v4859
        %v4983 = vunpack.c.l.b16 %v4860
        %v4984 = vunpack.c.l.b16 %v4861
        %v4985 = vunpack.c.h.b16 %v4861
        %v4986 = vunpack.c.l.b16 %v4862
        %v4987 = vunpack.c.l.b16 %v4863
        %v4988 = vunpack.c.h.b16 %v4863
        %v4989 = vunpack.c.l.b16 %v4864
        %v4990 = vunpack.c.l.b16 %v4865
        %v4991 = vunpack.c.h.b16 %v4865
        %v4992 = vunpack.c.l.b16 %v4866
        %v4993 = vunpack.c.l.b16 %v4867
        %v4994 = vunpack.c.h.b16 %v4867
        %v4995 = vunpack.c.l.b16 %v4868
        %v4996 = vunpack.c.l.b16 %v4869
        %v4997 = vunpack.c.h.b16 %v4869
        %v4998 = vunpack.c.l.b16 %v4870
        %v4999 = vpack.c.b16 %v4954, %v4951
        %v5000 = vpack.c.b16 %v4955, %v4952
        %v5001 = vpack.c.b16 %v4956, %v4953
        %v5002 = vpack.c.b16 %v4960, %v4957
        %v5003 = vpack.c.b16 %v4961, %v4958
        %v5004 = vpack.c.b16 %v4962, %v4959
        %v5005 = vpack.c.b16 %v4966, %v4963
        %v5006 = vpack.c.b16 %v4967, %v4964
        %v5007 = vpack.c.b16 %v4968, %v4965
        %v5008 = vpack.c.b16 %v4972, %v4969
        %v5009 = vpack.c.b16 %v4973, %v4970
        %v5010 = vpack.c.b16 %v4974, %v4971
        %v5011 = vpack.c.b16 %v4978, %v4975
        %v5012 = vpack.c.b16 %v4979, %v4976
        %v5013 = vpack.c.b16 %v4980, %v4977
        %v5014 = vpack.c.b16 %v4984, %v4981
        %v5015 = vpack.c.b16 %v4985, %v4982
        %v5016 = vpack.c.b16 %v4986, %v4983
        %v5017 = vpack.c.b16 %v4990, %v4987
        %v5018 = vpack.c.b16 %v4991, %v4988
        %v5019 = vpack.c.b16 %v4992, %v4989
        %v5020 = vpack.c.b16 %v4996, %v4993
        %v5021 = vpack.c.b16 %v4997, %v4994
        %v5022 = vpack.c.b16 %v4998, %v4995
        %v5095 = vunpack.c.l.b16 %v4871
        %v5096 = vunpack.c.l.b16 %v4872
        %v5097 = vunpack.c.l.b16 %v4873
        %v5098 = vunpack.c.l.b16 %v4874
        %v5099 = vunpack.c.l.b16 %v4875
        %v5100 = vunpack.c.l.b16 %v4876
        %v5101 = vunpack.c.l.b16 %v4877
        %v5102 = vunpack.c.l.b16 %v4878
        %v5103 = vunpack.c.l.b16 %v4879
        %v5104 = vunpack.c.l.b16 %v4880
        %v5105 = vunpack.c.l.b16 %v4881
        %v5106 = vunpack.c.l.b16 %v4882
        %v5107 = vunpack.c.l.b16 %v4883
        %v5108 = vunpack.c.l.b16 %v4884
        %v5109 = vunpack.c.l.b16 %v4885
        %v5110 = vunpack.c.l.b16 %v4886
        %v5111 = vunpack.c.l.b16 %v4887
        %v5112 = vunpack.c.l.b16 %v4888
        %v5113 = vunpack.c.l.b16 %v4889
        %v5114 = vunpack.c.l.b16 %v4890
        %v5115 = vunpack.c.l.b16 %v4891
        %v5116 = vunpack.c.l.b16 %v4892
        %v5117 = vunpack.c.l.b16 %v4893
        %v5118 = vunpack.c.l.b16 %v4894
        %v5119 = vunpack.c.l.b16 %v4895
        %v5120 = vunpack.c.l.b16 %v4896
        %v5121 = vunpack.c.l.b16 %v4897
        %v5122 = vunpack.c.l.b16 %v4898
        %v5123 = vunpack.c.l.b16 %v4899
        %v5124 = vunpack.c.l.b16 %v4900
        %v5125 = vunpack.c.l.b16 %v4901
        %v5126 = vunpack.c.l.b16 %v4902
        %v5127 = vunpack.c.l.b16 %v4903
        %v5128 = vunpack.c.l.b16 %v4904
        %v5129 = vunpack.c.l.b16 %v4905
        %v5130 = vunpack.c.l.b16 %v4906
        %v5131 = vunpack.c.l.b16 %v4907
        %v5132 = vunpack.c.l.b16 %v4908
        %v5133 = vunpack.c.l.b16 %v4909
        %v5134 = vunpack.c.l.b16 %v4910
        %v5135 = vunpack.c.l.b16 %v4911
        %v5136 = vunpack.c.l.b16 %v4912
        %v5137 = vunpack.c.l.b16 %v4913
        %v5138 = vunpack.c.l.b16 %v4914
        %v5139 = vunpack.c.l.b16 %v4915
        %v5140 = vunpack.c.l.b16 %v4916
        %v5141 = vunpack.c.l.b16 %v4917
        %v5142 = vunpack.c.l.b16 %v4918
        %v5143 = vpack.c.b16 %v5096, %v5095
        %v5144 = vpack.c.b16 %v5098, %v5097
        %v5145 = vpack.c.b16 %v5100, %v5099
        %v5146 = vpack.c.b16 %v5102, %v5101
        %v5147 = vpack.c.b16 %v5104, %v5103
        %v5148 = vpack.c.b16 %v5106, %v5105
        %v5149 = vpack.c.b16 %v5108, %v5107
        %v5150 = vpack.c.b16 %v5110, %v5109
        %v5151 = vpack.c.b16 %v5112, %v5111
        %v5152 = vpack.c.b16 %v5114, %v5113
        %v5153 = vpack.c.b16 %v5116, %v5115
        %v5154 = vpack.c.b16 %v5118, %v5117
        %v5155 = vpack.c.b16 %v5120, %v5119
        %v5156 = vpack.c.b16 %v5122, %v5121
        %v5157 = vpack.c.b16 %v5124, %v5123
        %v5158 = vpack.c.b16 %v5126, %v5125
        %v5159 = vpack.c.b16 %v5128, %v5127
        %v5160 = vpack.c.b16 %v5130, %v5129
        %v5161 = vpack.c.b16 %v5132, %v5131
        %v5162 = vpack.c.b16 %v5134, %v5133
        %v5163 = vpack.c.b16 %v5136, %v5135
        %v5164 = vpack.c.b16 %v5138, %v5137
        %v5165 = vpack.c.b16 %v5140, %v5139
        %v5166 = vpack.c.b16 %v5142, %v5141
        %5191 = vmatprep.subr.bf16.mxu0 0
        %5192 = vmatpush1.bf16.msra.mxu0 %v5150
        %5193 = vmatprep.subr.bf16.mxu0 0
        %5194 = vmatpush1.bf16.msra.mxu0 %v5149
        %5195 = vmatprep.subr.bf16.mxu0 0
        %5196 = vmatpush1.bf16.msra.mxu0 %v5148
        %5197 = vmatprep.subr.bf16.mxu0 0
        %5198 = vmatpush1.bf16.msra.mxu0 %v5147
        %5199 = vmatprep.subr.bf16.mxu0 0
        %5200 = vmatpush1.bf16.msra.mxu0 %v5146
        %5201 = vmatprep.subr.bf16.mxu0 0
        %5202 = vmatpush1.bf16.msra.mxu0 %v5145
        %5203 = vmatprep.subr.bf16.mxu0 0
        %5204 = vmatpush1.bf16.msra.mxu0 %v5144
        %5205 = vmatprep.subr.bf16.mxu0 0
        %5206 = vmatpush1.bf16.msra.mxu0 %v5143
        %5207 = vmatprep.subr.bf16.mxu0 0
        %5208 = vmatpush2.bf16.msra.mxu0 %v5158
        %5209 = vmatprep.subr.bf16.mxu0 0
        %5210 = vmatpush2.bf16.msra.mxu0 %v5157
        %5211 = vmatprep.subr.bf16.mxu0 0
        %5212 = vmatpush2.bf16.msra.mxu0 %v5156
        %5213 = vmatprep.subr.bf16.mxu0 0
        %5214 = vmatpush2.bf16.msra.mxu0 %v5155
        %5215 = vmatprep.subr.bf16.mxu0 0
        %5216 = vmatpush2.bf16.msra.mxu0 %v5154
        %5217 = vmatprep.subr.bf16.mxu0 0
        %5218 = vmatpush2.bf16.msra.mxu0 %v5153
        %5219 = vmatprep.subr.bf16.mxu0 0
        %5220 = vmatpush2.bf16.msra.mxu0 %v5152
        %5221 = vmatprep.subr.bf16.mxu0 0
        %5222 = vmatpush2.bf16.msra.mxu0 %v5151
        %5223 = vmatprep.mubr.bf16.mxu0 %v5000
        %5224 = vmatmul.mubr.bf16.gmra.mxu0 %v4999
        %v5225 = vpop.f32.mrf.mxu0
        %v5226 = vadd.f32 0.0, %v5225
        %v5227 = vpop.f32.mrf.mxu0
        %v5228 = vpop.f32.mrf.mxu0
        %v5229 = vadd.f32 0.0, %v5228
        %v5230 = vpop.f32.mrf.mxu0
        %5231 = vmatprep.mubr.bf16.mxu0 %v5003
        %5232 = vmatmul.mubr.bf16.gmra.mxu0 %v5002
        %v5233 = vpop.f32.mrf.mxu0
        %v5234 = vadd.f32 0.0, %v5233
        %v5235 = vpop.f32.mrf.mxu0
        %v5236 = vpop.f32.mrf.mxu0
        %v5237 = vadd.f32 0.0, %v5236
        %v5238 = vpop.f32.mrf.mxu0
        %5239 = vmatprep.mubr.bf16.mxu0 %v5006
        %5240 = vmatmul.mubr.bf16.gmra.mxu0 %v5005
        %v5241 = vpop.f32.mrf.mxu0
        %v5242 = vadd.f32 0.0, %v5241
        %v5243 = vpop.f32.mrf.mxu0
        %v5244 = vpop.f32.mrf.mxu0
        %v5245 = vadd.f32 0.0, %v5244
        %v5246 = vpop.f32.mrf.mxu0
        %5247 = vmatprep.mubr.bf16.mxu0 %v5009
        %5248 = vmatmul.mubr.bf16.gmra.mxu0 %v5008
        %v5249 = vpop.f32.mrf.mxu0
        %v5250 = vadd.f32 0.0, %v5249
        %v5251 = vpop.f32.mrf.mxu0
        %v5252 = vpop.f32.mrf.mxu0
        %v5253 = vadd.f32 0.0, %v5252
        %v5254 = vpop.f32.mrf.mxu0
        %5255 = vmatprep.mubr.bf16.mxu0 %v5012
        %5256 = vmatmul.mubr.bf16.gmra.mxu0 %v5011
        %v5257 = vpop.f32.mrf.mxu0
        %v5258 = vadd.f32 0.0, %v5257
        %v5259 = vpop.f32.mrf.mxu0
        %v5260 = vpop.f32.mrf.mxu0
        %v5261 = vadd.f32 0.0, %v5260
        %v5262 = vpop.f32.mrf.mxu0
        %5263 = vmatprep.mubr.bf16.mxu0 %v5015
        %5264 = vmatmul.mubr.bf16.gmra.mxu0 %v5014
        %v5265 = vpop.f32.mrf.mxu0
        %v5266 = vadd.f32 0.0, %v5265
        %v5267 = vpop.f32.mrf.mxu0
        %v5268 = vpop.f32.mrf.mxu0
        %v5269 = vadd.f32 0.0, %v5268
        %v5270 = vpop.f32.mrf.mxu0
        %5271 = vmatprep.mubr.bf16.mxu0 %v5018
        %5272 = vmatmul.mubr.bf16.gmra.mxu0 %v5017
        %v5273 = vpop.f32.mrf.mxu0
        %v5274 = vadd.f32 0.0, %v5273
        %v5275 = vpop.f32.mrf.mxu0
        %v5276 = vpop.f32.mrf.mxu0
        %v5277 = vadd.f32 0.0, %v5276
        %v5278 = vpop.f32.mrf.mxu0
        %5279 = vmatprep.mubr.bf16.mxu0 %v5021
        %5280 = vmatmul.mubr.bf16.gmra.mxu0 %v5020
        %v5281 = vpop.f32.mrf.mxu0
        %v5282 = vadd.f32 0.0, %v5281
        %v5283 = vpop.f32.mrf.mxu0
        %v5284 = vpop.f32.mrf.mxu0
        %v5285 = vadd.f32 0.0, %v5284
        %v5286 = vpop.f32.mrf.mxu0
        %5287 = vdwg.mxu0
        %5288 = vmatprep.subr.bf16.mxu0 0
        %5289 = vmatpush1.bf16.msra.mxu0 %v5166
        %5290 = vmatprep.subr.bf16.mxu0 0
        %5291 = vmatpush1.bf16.msra.mxu0 %v5165
        %5292 = vmatprep.subr.bf16.mxu0 0
        %5293 = vmatpush1.bf16.msra.mxu0 %v5164
        %5294 = vmatprep.subr.bf16.mxu0 0
        %5295 = vmatpush1.bf16.msra.mxu0 %v5163
        %5296 = vmatprep.subr.bf16.mxu0 0
        %5297 = vmatpush1.bf16.msra.mxu0 %v5162
        %5298 = vmatprep.subr.bf16.mxu0 0
        %5299 = vmatpush1.bf16.msra.mxu0 %v5161
        %5300 = vmatprep.subr.bf16.mxu0 0
        %5301 = vmatpush1.bf16.msra.mxu0 %v5160
        %5302 = vmatprep.subr.bf16.mxu0 0
        %5303 = vmatpush1.bf16.msra.mxu0 %v5159
        %5304 = vmatprep.subr.bf16.mxu0 0
        %5305 = vmatpush2.bf16.msra.mxu0 0
        %5306 = vmatprep.subr.bf16.mxu0 0
        %5307 = vmatpush2.bf16.msra.mxu0 0
        %5308 = vmatprep.subr.bf16.mxu0 0
        %5309 = vmatpush2.bf16.msra.mxu0 0
        %5310 = vmatprep.subr.bf16.mxu0 0
        %5311 = vmatpush2.bf16.msra.mxu0 0
        %5312 = vmatprep.subr.bf16.mxu0 0
        %5313 = vmatpush2.bf16.msra.mxu0 0
        %5314 = vmatprep.subr.bf16.mxu0 0
        %5315 = vmatpush2.bf16.msra.mxu0 0
        %5316 = vmatprep.subr.bf16.mxu0 0
        %5317 = vmatpush2.bf16.msra.mxu0 0
        %5318 = vmatprep.subr.bf16.mxu0 0
        %5319 = vmatpush2.bf16.msra.mxu0 0
        %5320 = vmatprep.mubr.bf16.mxu0 0
        %5321 = vmatmul.mubr.bf16.gmra.mxu0 %v5001
        %v5322 = vpop.f32.mrf.mxu0
        %v5323 = vadd.f32 %v5226, %v5322
        %v5324 = vpop.f32.mrf.mxu0
        %v5325 = vpop.f32.mrf.mxu0
        %v5326 = vadd.f32 %v5229, %v5325
        %v5327 = vpop.f32.mrf.mxu0
        %5328 = vmatprep.mubr.bf16.mxu0 0
        %5329 = vmatmul.mubr.bf16.gmra.mxu0 %v5004
        %v5330 = vpop.f32.mrf.mxu0
        %v5331 = vadd.f32 %v5234, %v5330
        %v5332 = vpop.f32.mrf.mxu0
        %v5333 = vpop.f32.mrf.mxu0
        %v5334 = vadd.f32 %v5237, %v5333
        %v5335 = vpop.f32.mrf.mxu0
        %5336 = vmatprep.mubr.bf16.mxu0 0
        %5337 = vmatmul.mubr.bf16.gmra.mxu0 %v5007
        %v5338 = vpop.f32.mrf.mxu0
        %v5339 = vadd.f32 %v5242, %v5338
        %v5340 = vpop.f32.mrf.mxu0
        %v5341 = vpop.f32.mrf.mxu0
        %v5342 = vadd.f32 %v5245, %v5341
        %v5343 = vpop.f32.mrf.mxu0
        %5344 = vmatprep.mubr.bf16.mxu0 0
        %5345 = vmatmul.mubr.bf16.gmra.mxu0 %v5010
        %v5346 = vpop.f32.mrf.mxu0
        %v5347 = vadd.f32 %v5250, %v5346
        %v5348 = vpop.f32.mrf.mxu0
        %v5349 = vpop.f32.mrf.mxu0
        %v5350 = vadd.f32 %v5253, %v5349
        %v5351 = vpop.f32.mrf.mxu0
        %5352 = vmatprep.mubr.bf16.mxu0 0
        %5353 = vmatmul.mubr.bf16.gmra.mxu0 %v5013
        %v5354 = vpop.f32.mrf.mxu0
        %v5355 = vadd.f32 %v5258, %v5354
        %v5356 = vpop.f32.mrf.mxu0
        %v5357 = vpop.f32.mrf.mxu0
        %v5358 = vadd.f32 %v5261, %v5357
        %v5359 = vpop.f32.mrf.mxu0
        %5360 = vmatprep.mubr.bf16.mxu0 0
        %5361 = vmatmul.mubr.bf16.gmra.mxu0 %v5016
        %v5362 = vpop.f32.mrf.mxu0
        %v5363 = vadd.f32 %v5266, %v5362
        %v5364 = vpop.f32.mrf.mxu0
        %v5365 = vpop.f32.mrf.mxu0
        %v5366 = vadd.f32 %v5269, %v5365
        %v5367 = vpop.f32.mrf.mxu0
        %5368 = vmatprep.mubr.bf16.mxu0 0
        %5369 = vmatmul.mubr.bf16.gmra.mxu0 %v5019
        %v5370 = vpop.f32.mrf.mxu0
        %v5371 = vadd.f32 %v5274, %v5370
        %v5372 = vpop.f32.mrf.mxu0
        %v5373 = vpop.f32.mrf.mxu0
        %v5374 = vadd.f32 %v5277, %v5373
        %v5375 = vpop.f32.mrf.mxu0
        %5376 = vmatprep.mubr.bf16.mxu0 0
        %5377 = vmatmul.mubr.bf16.gmra.mxu0 %v5022
        %v5378 = vpop.f32.mrf.mxu0
        %v5379 = vadd.f32 %v5282, %v5378
        %v5380 = vpop.f32.mrf.mxu0
        %v5381 = vpop.f32.mrf.mxu0
        %v5382 = vadd.f32 %v5285, %v5381
        %v5383 = vpop.f32.mrf.mxu0
        %5384 = vdwg.mxu0
        %v5385 = vadd.f32 %v4777, %v5323
        %v5386 = vadd.f32 %v4780, %v5326
        %v5387 = vadd.f32 %v4785, %v5331
        %v5388 = vadd.f32 %v4788, %v5334
        %v5389 = vadd.f32 %v4793, %v5339
        %v5390 = vadd.f32 %v4796, %v5342
        %v5391 = vadd.f32 %v4801, %v5347
        %v5392 = vadd.f32 %v4804, %v5350
        %v5393 = vadd.f32 %v4809, %v5355
        %v5394 = vadd.f32 %v4812, %v5358
        %v5395 = vadd.f32 %v4817, %v5363
        %v5396 = vadd.f32 %v4820, %v5366
        %v5397 = vadd.f32 %v4825, %v5371
        %v5398 = vadd.f32 %v4828, %v5374
        %v5399 = vadd.f32 %v4833, %v5379
        %v5400 = vadd.f32 %v4836, %v5382
        %v5401 = vld [vmem:[%s316] sm:$0xff]
        %v5402 = vld [vmem:[%s316 + $0x8] sm:$0xff]
        %v5403 = vld [vmem:[%s316 + $0x10] sm:$0xff]
        %v5404 = vld [vmem:[%s316 + $0x18] sm:$0xff]
        %v5405 = vld [vmem:[%s316 + $0x20] sm:$0xff]
        %v5406 = vld [vmem:[%s316 + $0x28] sm:$0xff]
        %v5407 = vld [vmem:[%s316 + $0x30] sm:$0xff]
        %v5408 = vld [vmem:[%s316 + $0x38] sm:$0xff]
        %v5409 = vld [vmem:[%s316 + $0x40] sm:$0xff]
        %v5410 = vld [vmem:[%s316 + $0x48] sm:$0xff]
        %v5411 = vld [vmem:[%s316 + $0x50] sm:$0xff]
        %v5412 = vld [vmem:[%s316 + $0x58] sm:$0xff]
        %v5413 = vld [vmem:[%s316 + $0x60] sm:$0xff]
        %v5414 = vld [vmem:[%s316 + $0x68] sm:$0xff]
        %v5415 = vld [vmem:[%s316 + $0x70] sm:$0xff]
        %v5416 = vld [vmem:[%s316 + $0x78] sm:$0xff]
        %v5417 = vld [vmem:[%s5] sm:$0x1]
        %v5419 = vlaneseq
        %v5420 = vshrl.u32 %v5419, 7
        %v5421 = vsub.s32 0, %v5420
        %v5422 = vrot.slane %v5417, %v5421
        %v5424 = vadd.f32 %v5385, %v5422
        %v5425 = vadd.f32 %v5386, %v5422
        %v5426 = vadd.f32 %v5387, %v5422
        %v5427 = vadd.f32 %v5388, %v5422
        %v5428 = vadd.f32 %v5389, %v5422
        %v5429 = vadd.f32 %v5390, %v5422
        %v5430 = vadd.f32 %v5391, %v5422
        %v5431 = vadd.f32 %v5392, %v5422
        %v5432 = vadd.f32 %v5393, %v5422
        %v5433 = vadd.f32 %v5394, %v5422
        %v5434 = vadd.f32 %v5395, %v5422
        %v5435 = vadd.f32 %v5396, %v5422
        %v5436 = vadd.f32 %v5397, %v5422
        %v5437 = vadd.f32 %v5398, %v5422
        %v5438 = vadd.f32 %v5399, %v5422
        %v5439 = vadd.f32 %v5400, %v5422
        %v5440 = vadd.f32 %v5424, %v5401
        %v5441 = vadd.f32 %v5425, %v5402
        %v5442 = vadd.f32 %v5426, %v5403
        %v5443 = vadd.f32 %v5427, %v5404
        %v5444 = vadd.f32 %v5428, %v5405
        %v5445 = vadd.f32 %v5429, %v5406
        %v5446 = vadd.f32 %v5430, %v5407
        %v5447 = vadd.f32 %v5431, %v5408
        %v5448 = vadd.f32 %v5432, %v5409
        %v5449 = vadd.f32 %v5433, %v5410
        %v5450 = vadd.f32 %v5434, %v5411
        %v5451 = vadd.f32 %v5435, %v5412
        %v5452 = vadd.f32 %v5436, %v5413
        %v5453 = vadd.f32 %v5437, %v5414
        %v5454 = vadd.f32 %v5438, %v5415
        %v5455 = vadd.f32 %v5439, %v5416
        %v5456 = vmax.f32 %v5440, 0.0
        %v5457 = vmax.f32 %v5441, 0.0
        %v5458 = vmax.f32 %v5442, 0.0
        %v5459 = vmax.f32 %v5443, 0.0
        %v5460 = vmax.f32 %v5444, 0.0
        %v5461 = vmax.f32 %v5445, 0.0
        %v5462 = vmax.f32 %v5446, 0.0
        %v5463 = vmax.f32 %v5447, 0.0
        %v5464 = vmax.f32 %v5448, 0.0
        %v5465 = vmax.f32 %v5449, 0.0
        %v5466 = vmax.f32 %v5450, 0.0
        %v5467 = vmax.f32 %v5451, 0.0
        %v5468 = vmax.f32 %v5452, 0.0
        %v5469 = vmax.f32 %v5453, 0.0
        %v5470 = vmax.f32 %v5454, 0.0
        %v5471 = vmax.f32 %v5455, 0.0
        %5472 = vst [vmem:[%s357] sm:$0xff] %v5456
        %5473 = vst [vmem:[%s357 + $0x8] sm:$0xff] %v5457
        %5474 = vst [vmem:[%s357 + $0x10] sm:$0xff] %v5458
        %5475 = vst [vmem:[%s357 + $0x18] sm:$0xff] %v5459
        %5476 = vst [vmem:[%s357 + $0x20] sm:$0xff] %v5460
        %5477 = vst [vmem:[%s357 + $0x28] sm:$0xff] %v5461
        %5478 = vst [vmem:[%s357 + $0x30] sm:$0xff] %v5462
        %5479 = vst [vmem:[%s357 + $0x38] sm:$0xff] %v5463
        %5480 = vst [vmem:[%s357 + $0x40] sm:$0xff] %v5464
        %5481 = vst [vmem:[%s357 + $0x48] sm:$0xff] %v5465
        %5482 = vst [vmem:[%s357 + $0x50] sm:$0xff] %v5466
        %5483 = vst [vmem:[%s357 + $0x58] sm:$0xff] %v5467
        %5484 = vst [vmem:[%s357 + $0x60] sm:$0xff] %v5468
        %5485 = vst [vmem:[%s357 + $0x68] sm:$0xff] %v5469
        %5486 = vst [vmem:[%s357 + $0x70] sm:$0xff] %v5470
        %5487 = vst [vmem:[%s357 + $0x78] sm:$0xff] %v5471
        %s5488 = sand.u32 %s187, 1
        %s5489 = scalar_lea.sflag [#allocation6], %s5488
        %s5490 = sand.u32 %s187, 1
        %s5491 = smul.addr %s5490, 128
        %s5492 = scalar_lea.vmem [#allocation12], %s5491
        // Predicated region
        $region69: #{tpu_custom_call.1} parent=43 // pred_check
          %p5493 = pneg %p197
        $region70: #{tpu_custom_call.1} parent=43 // pred_check_branch
          %5495 = sbr.rel (%p5493) target = $region72
        $region71: #{tpu_custom_call.1} parent=43 // pred_region
          %s5496 = smul.u32 8, %s32
          %s5498 = ssub.s32 2048, 2048
          %5499 = vsyncadd %s5489, %s5498
          %s5500 = smul.addr %s5496, 2
          %s5501 = smul.addr %s31, 32
          %s5502 = sadd.s32 %s5500, %s5501
          %s5503 = smul.addr %s5502, 128
          %s5504 = scalar_lea.hbm %s6, %s5503
          %s5505 = sshll.u32 %s5492, 4
          %s5506 = int_to_ptr.vmem [resolvable:$true] %s5505
          %5511 = dma.vmem_to_hbm [thread:$0]  %s5506, 2048, %s5504, %s5489, 128, 128, 8
        $region72: #{tpu_custom_call.1} parent=43 // pred_fallthru
          _
      $region44: #{tpu_custom_call.1} parent=5 // pred_fallthru
        _
      %p5512 = scmp.le.s32.totalorder 2, %s22
      // Predicated region
      $region73: #{tpu_custom_call.1} parent=5 // pred_check
        %p5513 = pneg %p5512
      $region74: #{tpu_custom_call.1} parent=5 // pred_check_branch
        %5515 = sbr.rel (%p5513) target = $region76
      $region75: #{tpu_custom_call.1} parent=5 // pred_region
        %s5516 = ssub.s32 %s22, 2
        // Predicated region
        $region77: #{tpu_custom_call.1} parent=75 // pred_check
          %p5517 = pneg %p203
        $region78: #{tpu_custom_call.1} parent=75 // pred_check_branch
          %5519 = sbr.rel (%p5517) target = $region80
        $region79: #{tpu_custom_call.1} parent=75 // pred_region
          %s5520 = sand.u32 %s188, 1
          %s5521 = scalar_lea.sflag [#allocation6], %s5520
          %s5522 = sand.u32 %s188, 1
          %s5523 = smul.addr %s5522, 128
          %s5524 = scalar_lea.vmem [#allocation12], %s5523
          %5525 = dma.done %s5521, 2048
        $region80: #{tpu_custom_call.1} parent=75 // pred_fallthru
          _
      $region76: #{tpu_custom_call.1} parent=5 // pred_fallthru
        _
    $region6: #{tpu_custom_call.1} parent=1 // loop_footer
      %s26 = sadd.s32 1, %s22
    $region7: #{tpu_custom_call.1} parent=1 // loop_footer_branch
      %21 = sbr.rel target = $region3
    $region8: #{tpu_custom_call.1} parent=1 // loop_exit
      _
    %5526 = vsyncpa [#allocation5], 1
    %s5527 = scalar_lea.sflag [#allocation5], 1
    %5528 = vsyncpa %s5527, 1
    %5529 = vsyncpa [#allocation8], 1
    %s5530 = scalar_lea.sflag [#allocation8], 1
    %5531 = vsyncpa %s5530, 1
    %5532 = vsyncpa [#allocation11], 1
    %5533 = vsyncpa [#allocation6], 1
    %s5534 = scalar_lea.sflag [#allocation6], 1
    %5535 = vsyncpa %s5534, 1

</llo_original>
